<compile_context>
chip_gen: v6e
topology: v6e:2x2x1
jax: 0.10.0
libtpu: 0.0.40
codegen_flags: <defaults>
</compile_context>

<pallas_src>
import math

import numpy as np
import jax
import jax.numpy as jnp
from jax import lax
from jax.experimental import pallas as pl
from jax.experimental.pallas import tpu as pltpu


# ----------------------------------------------------------------------------
# Constant 0/1 helper matrices for coord2radial expansion
# ----------------------------------------------------------------------------
def _radial_consts(J, T):
    JT, P = J * T, J * J * T
    expA = np.zeros((JT, P), np.float32)   # A[:, (j*J+k)*T+t] = diff[:, j*T+t]
    expB = np.zeros((JT, P), np.float32)   # B[:, (j*J+k)*T+t] = diff[:, k*T+t]
    red = np.zeros((P, J * J), np.float32)  # sum over t -> pair (j,k)
    for j in range(J):
        for k in range(J):
            for t in range(T):
                p = (j * J + k) * T + t
                expA[j * T + t, p] = 1.0
                expB[k * T + t, p] = 1.0
                red[p, j * J + k] = 1.0
    to = lambda a: jnp.asarray(a, jnp.bfloat16)
    return to(expA), to(expB), to(red)


# ----------------------------------------------------------------------------
# Pallas kernel
# ----------------------------------------------------------------------------
def make_kernel(N, E, F, H, O, De, T, JT, OUT_PAD, coords_weight):
    PAD = OUT_PAD - (O + JT)

    def kernel(h_ref, x_ref,
               ohr_ref, ohc_ref, dohc_ref, scat_ref, invdeg_ref, ea_ref,
               expA_ref, expB_ref, red_ref,
               we1st_ref, we1ra_ref, be1_ref, we2_ref, be2_ref,
               wc1_ref, bc1_ref, wc2e_ref,
               wn1_ref, bn1_ref, wn2_ref, bn2_ref,
               out_ref):
        f32, bf16 = jnp.float32, jnp.bfloat16
        dot = lambda a, b: jnp.dot(a, b, preferred_element_type=f32)

        h = h_ref[0]                        # [N, F]   f32 (kept f32 for residuals)
        x = x_ref[0]                        # [N, JT]  f32
        hb = h.astype(bf16)

        # ---- node-side projection BEFORE the gather (single combined [F, 2H]) ----
        p = dot(hb, we1st_ref[...]).astype(bf16)                 # [N, 2H]

        # ---- f32 coordinate differences: diff = (onehot_row - onehot_col) @ x ----
        diff = dot(dohc_ref[...], x)                             # [E, JT] f32 exact-ish

        # ---- coord2radial via MXU (pairwise products + 0/1 reduction) ----
        diffb = diff.astype(bf16)
        a_exp = dot(diffb, expA_ref[...])                        # [E, 16*T]
        b_exp = dot(diffb, expB_ref[...])                        # [E, 16*T]
        cdp = dot((a_exp * b_exp).astype(bf16), red_ref[...])    # [E, 16]
        ss = jnp.sum(cdp * cdp, axis=-1, keepdims=True)
        radial = cdp * lax.rsqrt(jnp.maximum(ss, 1e-24))         # == x/max(||x||,1e-12)

        # ---- edge_mlp: gathered projections + combined [radial|edge_attr] matmul ----
        rad_ea = jnp.concatenate([radial.astype(bf16), ea_ref[...]], axis=1)
        z1 = (dot(ohr_ref[...], p[:, :H]) + dot(ohc_ref[...], p[:, H:])
              + dot(rad_ea, we1ra_ref[...]) + be1_ref[...])
        z1 = jnp.maximum(z1, 0.0)
        ef = jnp.maximum(dot(z1.astype(bf16), we2_ref[...]) + be2_ref[...], 0.0)
        efb = ef.astype(bf16)                                    # [E, H]

        # ---- coord_mlp with expC folded into wc2e -> trans -> clamp ----
        c1 = jnp.maximum(dot(efb, wc1_ref[...]) + bc1_ref[...], 0.0)
        cexp = dot(c1.astype(bf16), wc2e_ref[...])               # [E, JT]
        trans = jnp.clip(diff * cexp, -100.0, 100.0)

        # ---- fused scatter (coords + node agg share the same 0/1 LHS) ----
        edge_cat = jnp.concatenate([trans.astype(bf16), efb], axis=1)   # [E, JT+H]
        scat_out = dot(scat_ref[...], edge_cat)                  # [N, JT+H] f32
        agg_mean = scat_out[:, :JT] * invdeg_ref[...]            # f32 1/deg on the VPU
        xout = x + agg_mean * coords_weight
        nagg = scat_out[:, JT:]                                  # [N, H]

        # ---- node_mlp (combined [h | agg] weight) + recurrent residual ----
        nin = jnp.concatenate([h, nagg], axis=1).astype(bf16)    # [N, F+H]
        n1 = jnp.maximum(dot(nin, wn1_ref[...]) + bn1_ref[...], 0.0)
        nout = dot(n1.astype(bf16), wn2_ref[...]) + bn2_ref[...]  # [N, O]
        hout = h + nout

        # ---- single lane-dense (padded to 128 lanes) packed store ----
        pieces = [hout, xout]
        if PAD:
            pieces.append(jnp.zeros((N, PAD), f32))
        out_ref[0] = jnp.concatenate(pieces, axis=1)             # [N, OUT_PAD]

    return kernel


# ----------------------------------------------------------------------------
# Wrapper: BlockSpecs / grid over the batch
# ----------------------------------------------------------------------------
def gmn_layer_forward(h, x, row, col, edge_attr, params, coords_weight=1.0):
    B, N, F = h.shape
    _, _, J, T = x.shape
    E = row.shape[0]
    De = edge_attr.shape[1]
    (we1s, we1t, we1r, we1a, be1, we2, be2,
     wc1, bc1, wc2, wn1h, wn1a, bn1, wn2, bn2) = params
    H = we2.shape[0]
    O = wn2.shape[1]
    JT = J * T
    OUT_PAD = int(pl.cdiv(O + JT, 128) * 128)

    f32, bf16 = jnp.float32, jnp.bfloat16

    x_flat = x.reshape(B, N, JT).astype(f32)
    h32 = h.astype(f32)

    # Graph-structure constants (shared across the batch, like the PyTorch forward).
    ohr = jax.nn.one_hot(row, N, dtype=f32)                  # [E, N]
    ohc = jax.nn.one_hot(col, N, dtype=f32)                  # [E, N]
    dohc = ohr - ohc                                         # [E, N] f32 (precise diff)
    scat = ohr.T                                             # [N, E] segment sum
    deg = jnp.sum(scat, axis=1, keepdims=True)
    inv_deg = 1.0 / jnp.maximum(deg, 1.0)                    # [N, 1] f32

    expA, expB, redM = _radial_consts(J, T)

    # Combined / folded weights (biases stay f32 for elementwise adds).
    we1st = jnp.concatenate([we1s, we1t], axis=1)            # [F, 2H]
    we1ra = jnp.concatenate([we1r, we1a], axis=0)            # [16+De, H]
    wn1 = jnp.concatenate([wn1h, wn1a], axis=0)              # [F+H, H]
    wc2e = jnp.repeat(wc2, T, axis=1)                        # [H, JT]  (== wc2 @ expC)

    shared_args = (ohr.astype(bf16), ohc.astype(bf16), dohc,
                   scat.astype(bf16), inv_deg, edge_attr.astype(bf16),
                   expA, expB, redM,
                   we1st.astype(bf16), we1ra.astype(bf16), be1.astype(f32),
                   we2.astype(bf16), be2.astype(f32),
                   wc1.astype(bf16), bc1.astype(f32), wc2e.astype(bf16),
                   wn1.astype(bf16), bn1.astype(f32), wn2.astype(bf16),
                   bn2.astype(f32))

    kernel = make_kernel(N, E, F, H, O, De, T, JT, OUT_PAD, coords_weight)

    def per_batch(d2, d3):
        return pl.BlockSpec((1, d2, d3), lambda b: (b, 0, 0))

    def build_call(single_buffer_shared):
        def shared(arr):
            nd = arr.ndim
            idx = lambda b, _nd=nd: (0,) * _nd
            if single_buffer_shared:
                # grid-invariant: no point double-buffering
                return pl.BlockSpec(arr.shape, idx, pipeline_mode=pl.Buffered(1))
            return pl.BlockSpec(arr.shape, idx)

        in_specs = ([per_batch(N, F), per_batch(N, JT)] +
                    [shared(a) for a in shared_args])
        out_specs = per_batch(N, OUT_PAD)
        out_shape = jax.ShapeDtypeStruct((B, N, OUT_PAD), f32)

        # VMEM budget: shared operands (x buffer count) + double-buffered per-batch
        # blocks + headroom for in-kernel intermediates.
        shared_bytes = sum(int(np.prod(a.shape)) * a.dtype.itemsize
                           for a in shared_args)
        per_batch_bytes = (N * F + N * JT + N * OUT_PAD) * 4 * 2
        bufs = 1 if single_buffer_shared else 2
        budget = shared_bytes * bufs + per_batch_bytes + (8 << 20)
        vmem_limit = int(min(64 << 20, max(32 << 20, budget)))

        return pl.pallas_call(
            kernel,
            out_shape=out_shape,
            grid=(B,),
            in_specs=in_specs,
            out_specs=out_specs,
            compiler_params=pltpu.CompilerParams(
                dimension_semantics=("parallel",),
                vmem_limit_bytes=vmem_limit),
        )

    try:
        packed = build_call(True)(h32, x_flat, *shared_args)
    except Exception:
        # Fallback if pipeline_mode=pl.Buffered(1) is rejected by this JAX build.
        packed = build_call(False)(h32, x_flat, *shared_args)

    hs = packed[:, :, :O]
    coords = packed[:, :, O:O + JT].reshape(B, N, J, T)
    return hs, coords


# ----------------------------------------------------------------------------
# Pure-JAX f32 reference (mirrors the PyTorch forward)
# ----------------------------------------------------------------------------
def reference(h, x, row, col, edge_attr, params, coords_weight=1.0):
    (we1s, we1t, we1r, we1a, be1, we2, be2,
     wc1, bc1, wc2, wn1h, wn1a, bn1, wn2, bn2) = params
    We1 = jnp.concatenate([we1s, we1t, we1r, we1a], axis=0)
    Wn1 = jnp.concatenate([wn1h, wn1a], axis=0)
    N = h.shape[1]

    def per_batch(hb, xb):
        cd = xb[row] - xb[col]                                   # [E, 4, T]
        cdp = jnp.einsum('ijt,ikt->ijk', cd, cd).reshape(cd.shape[0], -1)
        nrm = jnp.sqrt(jnp.sum(cdp * cdp, axis=-1, keepdims=True))
        radial = cdp / jnp.maximum(nrm, 1e-12)
        ein = jnp.concatenate([hb[row], hb[col], radial, edge_attr], axis=1)
        z1 = jax.nn.relu(ein @ We1 + be1)
        ef = jax.nn.relu(z1 @ we2 + be2)
        c1 = jax.nn.relu(ef @ wc1 + bc1)
        cvec = c1 @ wc2
        trans = jnp.clip(cd * cvec[:, :, None], -100.0, 100.0)
        agg_sum = jnp.zeros((N,) + trans.shape[1:]).at[row].add(trans)
        cnt = jnp.zeros((N,) + trans.shape[1:]).at[row].add(jnp.ones_like(trans))
        agg_mean = agg_sum / jnp.maximum(cnt, 1.0)
        x_out = xb + agg_mean * coords_weight
        nagg = jnp.zeros((N, ef.shape[1])).at[row].add(ef)
        nin = jnp.concatenate([hb, nagg], axis=1)
        n1 = jax.nn.relu(nin @ Wn1 + bn1)
        h_out = hb + (n1 @ wn2 + bn2)
        return h_out, x_out

    outs = [per_batch(h[i], x[i]) for i in range(h.shape[0])]
    return jnp.stack([o[0] for o in outs]), jnp.stack([o[1] for o in outs])


# ----------------------------------------------------------------------------
# Parameter init (deterministic, mirrors nn.Linear default / xavier for wc2)
# ----------------------------------------------------------------------------
def make_params(key, F, H, O, De):
    def lin(k, fin, fout, bias=True):
        k1, k2 = jax.random.split(k)
        bound = 1.0 / math.sqrt(fin)
        W = jax.random.uniform(k1, (fin, fout), jnp.float32, -bound, bound)
        b = (jax.random.uniform(k2, (1, fout), jnp.float32, -bound, bound)
             if bias else None)
        return W, b

    ks = jax.random.split(key, 8)
    edge_in = 2 * F + 16 + De
    We1, be1 = lin(ks[0], edge_in, H)
    We2, be2 = lin(ks[1], H, H)
    Wn1, bn1 = lin(ks[2], H + F, H)
    Wn2, bn2 = lin(ks[3], H, O)
    Wc1, bc1 = lin(ks[4], H, H)
    # xavier_uniform with gain=0.001, no bias
    xb = 0.001 * math.sqrt(6.0 / (H + 4))
    Wc2 = jax.random.uniform(ks[5], (H, 4), jnp.float32, -xb, xb)

    we1s, we1t, we1r, we1a = (We1[:F], We1[F:2 * F],
                              We1[2 * F:2 * F + 16], We1[2 * F + 16:])
    wn1h, wn1a = Wn1[:F], Wn1[F:]
    return (we1s, we1t, we1r, we1a, be1, We2, be2,
            Wc1, bc1, Wc2, wn1h, wn1a, bn1, Wn2, bn2)


# ----------------------------------------------------------------------------
if __name__ == "__main__":
    B, N, F, T, De = 2, 8, 32, 3, 8
    H = O = F  # recurrent residual requires output_nf == input_nf

    key = jax.random.PRNGKey(0)
    kh, kx, ke, kp = jax.random.split(key, 4)

    h = jax.random.normal(kh, (B, N, F), jnp.float32)
    x = jax.random.normal(kx, (B, N, 4, T), jnp.float32)

    # fully-connected graph without self loops (shared across the batch,
    # matching the PyTorch forward which reuses edge_index for every h[i])
    rows, cols = [], []
    for i in range(N):
        for j in range(N):
            if i != j:
                rows.append(i)
                cols.append(j)
    row = jnp.asarray(rows, jnp.int32)
    col = jnp.asarray(cols, jnp.int32)
    E = row.shape[0]
    edge_attr = jax.random.normal(ke, (E, De), jnp.float32)

    params = make_params(kp, F, H, O, De)

    hs, coords = gmn_layer_forward(h, x, row, col, edge_attr, params,
                                   coords_weight=1.0)
    hs = jax.block_until_ready(hs)
    coords = jax.block_until_ready(coords)

    hs_ref, coords_ref = reference(h, x, row, col, edge_attr, params,
                                   coords_weight=1.0)

    assert hs.shape == (B, N, O) and coords.shape == (B, N, 4, T)
    # kernel uses bf16 matmul operands (f32 accumulation); tolerance reflects that.
    assert jnp.allclose(hs, hs_ref, atol=5e-2, rtol=5e-2), \
        f"hs max err {jnp.max(jnp.abs(hs - hs_ref))}"
    assert jnp.allclose(coords, coords_ref, atol=1e-2, rtol=1e-2), \
        f"coords max err {jnp.max(jnp.abs(coords - coords_ref))}"
    print("KERNEL_OK")
</pallas_src>

<mosaic_0001>
module attributes {stable_mosaic.version = 11 : i64} {
  func.func @kernel(%arg0: i32, %arg1: memref<1x8x32xf32, #tpu.memory_space<vmem>>, %arg2: memref<1x8x12xf32, #tpu.memory_space<vmem>>, %arg3: memref<56x8xbf16, #tpu.memory_space<vmem>>, %arg4: memref<56x8xbf16, #tpu.memory_space<vmem>>, %arg5: memref<56x8xf32, #tpu.memory_space<vmem>>, %arg6: memref<8x56xbf16, #tpu.memory_space<vmem>>, %arg7: memref<8x1xf32, #tpu.memory_space<vmem>>, %arg8: memref<56x8xbf16, #tpu.memory_space<vmem>>, %arg9: memref<12x48xbf16, #tpu.memory_space<vmem>>, %arg10: memref<12x48xbf16, #tpu.memory_space<vmem>>, %arg11: memref<48x16xbf16, #tpu.memory_space<vmem>>, %arg12: memref<32x64xbf16, #tpu.memory_space<vmem>>, %arg13: memref<24x32xbf16, #tpu.memory_space<vmem>>, %arg14: memref<1x32xf32, #tpu.memory_space<vmem>>, %arg15: memref<32x32xbf16, #tpu.memory_space<vmem>>, %arg16: memref<1x32xf32, #tpu.memory_space<vmem>>, %arg17: memref<32x32xbf16, #tpu.memory_space<vmem>>, %arg18: memref<1x32xf32, #tpu.memory_space<vmem>>, %arg19: memref<32x12xbf16, #tpu.memory_space<vmem>>, %arg20: memref<64x32xbf16, #tpu.memory_space<vmem>>, %arg21: memref<1x32xf32, #tpu.memory_space<vmem>>, %arg22: memref<32x32xbf16, #tpu.memory_space<vmem>>, %arg23: memref<1x32xf32, #tpu.memory_space<vmem>>, %arg24: memref<1x8x128xf32, #tpu.memory_space<vmem>>) attributes {dimension_semantics = [#tpu.dimension_semantics<parallel>], iteration_bounds = array<i64: 2>, scalar_prefetch = 0 : i64, scratch_operands = 0 : i64, tpu.core_type = #tpu.core_type<tc>, window_params = [{transform_indices = @transform_0, window_bounds = array<i64: 1, 8, 32>}, {transform_indices = @transform_1, window_bounds = array<i64: 1, 8, 12>}, {pipeline_mode = #tpu.pipeline_mode<synchronous>, transform_indices = @transform_2, window_bounds = array<i64: 56, 8>}, {pipeline_mode = #tpu.pipeline_mode<synchronous>, transform_indices = @transform_3, window_bounds = array<i64: 56, 8>}, {pipeline_mode = #tpu.pipeline_mode<synchronous>, transform_indices = @transform_4, window_bounds = array<i64: 56, 8>}, {pipeline_mode = #tpu.pipeline_mode<synchronous>, transform_indices = @transform_5, window_bounds = array<i64: 8, 56>}, {pipeline_mode = #tpu.pipeline_mode<synchronous>, transform_indices = @transform_6, window_bounds = array<i64: 8, 1>}, {pipeline_mode = #tpu.pipeline_mode<synchronous>, transform_indices = @transform_7, window_bounds = array<i64: 56, 8>}, {pipeline_mode = #tpu.pipeline_mode<synchronous>, transform_indices = @transform_8, window_bounds = array<i64: 12, 48>}, {pipeline_mode = #tpu.pipeline_mode<synchronous>, transform_indices = @transform_9, window_bounds = array<i64: 12, 48>}, {pipeline_mode = #tpu.pipeline_mode<synchronous>, transform_indices = @transform_10, window_bounds = array<i64: 48, 16>}, {pipeline_mode = #tpu.pipeline_mode<synchronous>, transform_indices = @transform_11, window_bounds = array<i64: 32, 64>}, {pipeline_mode = #tpu.pipeline_mode<synchronous>, transform_indices = @transform_12, window_bounds = array<i64: 24, 32>}, {pipeline_mode = #tpu.pipeline_mode<synchronous>, transform_indices = @transform_13, window_bounds = array<i64: 1, 32>}, {pipeline_mode = #tpu.pipeline_mode<synchronous>, transform_indices = @transform_14, window_bounds = array<i64: 32, 32>}, {pipeline_mode = #tpu.pipeline_mode<synchronous>, transform_indices = @transform_15, window_bounds = array<i64: 1, 32>}, {pipeline_mode = #tpu.pipeline_mode<synchronous>, transform_indices = @transform_16, window_bounds = array<i64: 32, 32>}, {pipeline_mode = #tpu.pipeline_mode<synchronous>, transform_indices = @transform_17, window_bounds = array<i64: 1, 32>}, {pipeline_mode = #tpu.pipeline_mode<synchronous>, transform_indices = @transform_18, window_bounds = array<i64: 32, 12>}, {pipeline_mode = #tpu.pipeline_mode<synchronous>, transform_indices = @transform_19, window_bounds = array<i64: 64, 32>}, {pipeline_mode = #tpu.pipeline_mode<synchronous>, transform_indices = @transform_20, window_bounds = array<i64: 1, 32>}, {pipeline_mode = #tpu.pipeline_mode<synchronous>, transform_indices = @transform_21, window_bounds = array<i64: 32, 32>}, {pipeline_mode = #tpu.pipeline_mode<synchronous>, transform_indices = @transform_22, window_bounds = array<i64: 1, 32>}, {transform_indices = @transform_23, window_bounds = array<i64: 1, 8, 128>}]} {
    %c0 = arith.constant 0 : index
    %c0_0 = arith.constant 0 : index
    %c0_1 = arith.constant 0 : index
    %0 = vector.load %arg1[%c0, %c0_0, %c0_1] : memref<1x8x32xf32, #tpu.memory_space<vmem>>, vector<1x8x32xf32>
    %1 = vector.shape_cast %0 : vector<1x8x32xf32> to vector<8x32xf32>
    %c0_2 = arith.constant 0 : index
    %c0_3 = arith.constant 0 : index
    %c0_4 = arith.constant 0 : index
    %2 = vector.load %arg2[%c0_2, %c0_3, %c0_4] : memref<1x8x12xf32, #tpu.memory_space<vmem>>, vector<1x8x12xf32>
    %3 = vector.shape_cast %2 : vector<1x8x12xf32> to vector<8x12xf32>
    %4 = arith.truncf %1 : vector<8x32xf32> to vector<8x32xbf16>
    %c0_5 = arith.constant 0 : index
    %c0_6 = arith.constant 0 : index
    %5 = vector.load %arg12[%c0_5, %c0_6] : memref<32x64xbf16, #tpu.memory_space<vmem>>, vector<32x64xbf16>
    %cst = arith.constant dense<0.000000e+00> : vector<8x64xf32>
    %6 = tpu.matmul %4, %5, %cst {dimension_numbers = #tpu.dot_dimension_numbers<[1], [0], [0], [1], [0, 0, 1, 1], [], []>} : vector<8x32xbf16>, vector<32x64xbf16>, vector<8x64xf32> -> vector<8x64xf32>
    %7 = arith.truncf %6 : vector<8x64xf32> to vector<8x64xbf16>
    %c0_7 = arith.constant 0 : index
    %c0_8 = arith.constant 0 : index
    %8 = vector.load %arg5[%c0_7, %c0_8] : memref<56x8xf32, #tpu.memory_space<vmem>>, vector<56x8xf32>
    %cst_9 = arith.constant dense<0.000000e+00> : vector<56x12xf32>
    %9 = tpu.matmul %8, %3, %cst_9 {dimension_numbers = #tpu.dot_dimension_numbers<[1], [0], [0], [1], [0, 0, 1, 1], [], []>} : vector<56x8xf32>, vector<8x12xf32>, vector<56x12xf32> -> vector<56x12xf32>
    %10 = arith.truncf %9 : vector<56x12xf32> to vector<56x12xbf16>
    %c0_10 = arith.constant 0 : index
    %c0_11 = arith.constant 0 : index
    %11 = vector.load %arg9[%c0_10, %c0_11] : memref<12x48xbf16, #tpu.memory_space<vmem>>, vector<12x48xbf16>
    %cst_12 = arith.constant dense<0.000000e+00> : vector<56x48xf32>
    %12 = tpu.matmul %10, %11, %cst_12 {dimension_numbers = #tpu.dot_dimension_numbers<[1], [0], [0], [1], [0, 0, 1, 1], [], []>} : vector<56x12xbf16>, vector<12x48xbf16>, vector<56x48xf32> -> vector<56x48xf32>
    %c0_13 = arith.constant 0 : index
    %c0_14 = arith.constant 0 : index
    %13 = vector.load %arg10[%c0_13, %c0_14] : memref<12x48xbf16, #tpu.memory_space<vmem>>, vector<12x48xbf16>
    %cst_15 = arith.constant dense<0.000000e+00> : vector<56x48xf32>
    %14 = tpu.matmul %10, %13, %cst_15 {dimension_numbers = #tpu.dot_dimension_numbers<[1], [0], [0], [1], [0, 0, 1, 1], [], []>} : vector<56x12xbf16>, vector<12x48xbf16>, vector<56x48xf32> -> vector<56x48xf32>
    %15 = arith.mulf %12, %14 : vector<56x48xf32>
    %16 = arith.truncf %15 : vector<56x48xf32> to vector<56x48xbf16>
    %c0_16 = arith.constant 0 : index
    %c0_17 = arith.constant 0 : index
    %17 = vector.load %arg11[%c0_16, %c0_17] : memref<48x16xbf16, #tpu.memory_space<vmem>>, vector<48x16xbf16>
    %cst_18 = arith.constant dense<0.000000e+00> : vector<56x16xf32>
    %18 = tpu.matmul %16, %17, %cst_18 {dimension_numbers = #tpu.dot_dimension_numbers<[1], [0], [0], [1], [0, 0, 1, 1], [], []>} : vector<56x48xbf16>, vector<48x16xbf16>, vector<56x16xf32> -> vector<56x16xf32>
    %19 = arith.mulf %18, %18 : vector<56x16xf32>
    %cst_19 = arith.constant dense<0.000000e+00> : vector<56xf32>
    %20 = vector.multi_reduction <add>, %19, %cst_19 [1] : vector<56x16xf32> to vector<56xf32>
    %21 = vector.shape_cast %20 : vector<56xf32> to vector<56x1xf32>
    %cst_20 = arith.constant 1.000000e-24 : f32
    %22 = vector.broadcast %cst_20 : f32 to vector<56x1xf32>
    %23 = arith.maximumf %21, %22 : vector<56x1xf32>
    %24 = math.rsqrt %23 : vector<56x1xf32>
    %25 = vector.broadcast %24 : vector<56x1xf32> to vector<56x16xf32>
    %26 = arith.mulf %18, %25 : vector<56x16xf32>
    %27 = arith.truncf %26 : vector<56x16xf32> to vector<56x16xbf16>
    %c0_21 = arith.constant 0 : index
    %c0_22 = arith.constant 0 : index
    %28 = vector.load %arg8[%c0_21, %c0_22] : memref<56x8xbf16, #tpu.memory_space<vmem>>, vector<56x8xbf16>
    %29 = tpu.concatenate %27, %28 in 1 : vector<56x16xbf16>, vector<56x8xbf16> -> vector<56x24xbf16>
    %c0_23 = arith.constant 0 : index
    %c0_24 = arith.constant 0 : index
    %30 = vector.load %arg3[%c0_23, %c0_24] : memref<56x8xbf16, #tpu.memory_space<vmem>>, vector<56x8xbf16>
    %31 = vector.extract_strided_slice %7 {offsets = [0, 0], sizes = [8, 32], strides = [1, 1]} : vector<8x64xbf16> to vector<8x32xbf16>
    %cst_25 = arith.constant dense<0.000000e+00> : vector<56x32xf32>
    %32 = tpu.matmul %30, %31, %cst_25 {dimension_numbers = #tpu.dot_dimension_numbers<[1], [0], [0], [1], [0, 0, 1, 1], [], []>} : vector<56x8xbf16>, vector<8x32xbf16>, vector<56x32xf32> -> vector<56x32xf32>
    %c0_26 = arith.constant 0 : index
    %c0_27 = arith.constant 0 : index
    %33 = vector.load %arg4[%c0_26, %c0_27] : memref<56x8xbf16, #tpu.memory_space<vmem>>, vector<56x8xbf16>
    %34 = vector.extract_strided_slice %7 {offsets = [0, 32], sizes = [8, 32], strides = [1, 1]} : vector<8x64xbf16> to vector<8x32xbf16>
    %cst_28 = arith.constant dense<0.000000e+00> : vector<56x32xf32>
    %35 = tpu.matmul %33, %34, %cst_28 {dimension_numbers = #tpu.dot_dimension_numbers<[1], [0], [0], [1], [0, 0, 1, 1], [], []>} : vector<56x8xbf16>, vector<8x32xbf16>, vector<56x32xf32> -> vector<56x32xf32>
    %36 = arith.addf %32, %35 : vector<56x32xf32>
    %c0_29 = arith.constant 0 : index
    %c0_30 = arith.constant 0 : index
    %37 = vector.load %arg13[%c0_29, %c0_30] : memref<24x32xbf16, #tpu.memory_space<vmem>>, vector<24x32xbf16>
    %cst_31 = arith.constant dense<0.000000e+00> : vector<56x32xf32>
    %38 = tpu.matmul %29, %37, %cst_31 {dimension_numbers = #tpu.dot_dimension_numbers<[1], [0], [0], [1], [0, 0, 1, 1], [], []>} : vector<56x24xbf16>, vector<24x32xbf16>, vector<56x32xf32> -> vector<56x32xf32>
    %39 = arith.addf %36, %38 : vector<56x32xf32>
    %c0_32 = arith.constant 0 : index
    %c0_33 = arith.constant 0 : index
    %40 = vector.load %arg14[%c0_32, %c0_33] : memref<1x32xf32, #tpu.memory_space<vmem>>, vector<1x32xf32>
    %41 = vector.broadcast %40 : vector<1x32xf32> to vector<56x32xf32>
    %42 = arith.addf %39, %41 : vector<56x32xf32>
    %cst_34 = arith.constant 0.000000e+00 : f32
    %43 = vector.broadcast %cst_34 : f32 to vector<56x32xf32>
    %44 = arith.maximumf %42, %43 : vector<56x32xf32>
    %45 = arith.truncf %44 : vector<56x32xf32> to vector<56x32xbf16>
    %c0_35 = arith.constant 0 : index
    %c0_36 = arith.constant 0 : index
    %46 = vector.load %arg15[%c0_35, %c0_36] : memref<32x32xbf16, #tpu.memory_space<vmem>>, vector<32x32xbf16>
    %cst_37 = arith.constant dense<0.000000e+00> : vector<56x32xf32>
    %47 = tpu.matmul %45, %46, %cst_37 {dimension_numbers = #tpu.dot_dimension_numbers<[1], [0], [0], [1], [0, 0, 1, 1], [], []>} : vector<56x32xbf16>, vector<32x32xbf16>, vector<56x32xf32> -> vector<56x32xf32>
    %c0_38 = arith.constant 0 : index
    %c0_39 = arith.constant 0 : index
    %48 = vector.load %arg16[%c0_38, %c0_39] : memref<1x32xf32, #tpu.memory_space<vmem>>, vector<1x32xf32>
    %49 = vector.broadcast %48 : vector<1x32xf32> to vector<56x32xf32>
    %50 = arith.addf %47, %49 : vector<56x32xf32>
    %cst_40 = arith.constant 0.000000e+00 : f32
    %51 = vector.broadcast %cst_40 : f32 to vector<56x32xf32>
    %52 = arith.maximumf %50, %51 : vector<56x32xf32>
    %53 = arith.truncf %52 : vector<56x32xf32> to vector<56x32xbf16>
    %c0_41 = arith.constant 0 : index
    %c0_42 = arith.constant 0 : index
    %54 = vector.load %arg17[%c0_41, %c0_42] : memref<32x32xbf16, #tpu.memory_space<vmem>>, vector<32x32xbf16>
    %cst_43 = arith.constant dense<0.000000e+00> : vector<56x32xf32>
    %55 = tpu.matmul %53, %54, %cst_43 {dimension_numbers = #tpu.dot_dimension_numbers<[1], [0], [0], [1], [0, 0, 1, 1], [], []>} : vector<56x32xbf16>, vector<32x32xbf16>, vector<56x32xf32> -> vector<56x32xf32>
    %c0_44 = arith.constant 0 : index
    %c0_45 = arith.constant 0 : index
    %56 = vector.load %arg18[%c0_44, %c0_45] : memref<1x32xf32, #tpu.memory_space<vmem>>, vector<1x32xf32>
    %57 = vector.broadcast %56 : vector<1x32xf32> to vector<56x32xf32>
    %58 = arith.addf %55, %57 : vector<56x32xf32>
    %cst_46 = arith.constant 0.000000e+00 : f32
    %59 = vector.broadcast %cst_46 : f32 to vector<56x32xf32>
    %60 = arith.maximumf %58, %59 : vector<56x32xf32>
    %61 = arith.truncf %60 : vector<56x32xf32> to vector<56x32xbf16>
    %c0_47 = arith.constant 0 : index
    %c0_48 = arith.constant 0 : index
    %62 = vector.load %arg19[%c0_47, %c0_48] : memref<32x12xbf16, #tpu.memory_space<vmem>>, vector<32x12xbf16>
    %cst_49 = arith.constant dense<0.000000e+00> : vector<56x12xf32>
    %63 = tpu.matmul %61, %62, %cst_49 {dimension_numbers = #tpu.dot_dimension_numbers<[1], [0], [0], [1], [0, 0, 1, 1], [], []>} : vector<56x32xbf16>, vector<32x12xbf16>, vector<56x12xf32> -> vector<56x12xf32>
    %64 = arith.mulf %9, %63 : vector<56x12xf32>
    %cst_50 = arith.constant -1.000000e+02 : f32
    %cst_51 = arith.constant 1.000000e+02 : f32
    %65 = vector.broadcast %cst_50 : f32 to vector<56x12xf32>
    %66 = arith.maximumf %65, %64 : vector<56x12xf32>
    %67 = vector.broadcast %cst_51 : f32 to vector<56x12xf32>
    %68 = arith.minimumf %67, %66 : vector<56x12xf32>
    %69 = arith.truncf %68 : vector<56x12xf32> to vector<56x12xbf16>
    %70 = tpu.concatenate %69, %53 in 1 : vector<56x12xbf16>, vector<56x32xbf16> -> vector<56x44xbf16>
    %c0_52 = arith.constant 0 : index
    %c0_53 = arith.constant 0 : index
    %71 = vector.load %arg6[%c0_52, %c0_53] : memref<8x56xbf16, #tpu.memory_space<vmem>>, vector<8x56xbf16>
    %cst_54 = arith.constant dense<0.000000e+00> : vector<8x44xf32>
    %72 = tpu.matmul %71, %70, %cst_54 {dimension_numbers = #tpu.dot_dimension_numbers<[1], [0], [0], [1], [0, 0, 1, 1], [], []>} : vector<8x56xbf16>, vector<56x44xbf16>, vector<8x44xf32> -> vector<8x44xf32>
    %73 = vector.extract_strided_slice %72 {offsets = [0, 0], sizes = [8, 12], strides = [1, 1]} : vector<8x44xf32> to vector<8x12xf32>
    %c0_55 = arith.constant 0 : index
    %c0_56 = arith.constant 0 : index
    %74 = vector.load %arg7[%c0_55, %c0_56] : memref<8x1xf32, #tpu.memory_space<vmem>>, vector<8x1xf32>
    %75 = vector.broadcast %74 : vector<8x1xf32> to vector<8x12xf32>
    %76 = arith.mulf %73, %75 : vector<8x12xf32>
    %cst_57 = arith.constant 1.000000e+00 : f32
    %77 = vector.broadcast %cst_57 : f32 to vector<8x12xf32>
    %78 = arith.mulf %76, %77 : vector<8x12xf32>
    %79 = arith.addf %3, %78 : vector<8x12xf32>
    %80 = vector.extract_strided_slice %72 {offsets = [0, 12], sizes = [8, 32], strides = [1, 1]} : vector<8x44xf32> to vector<8x32xf32>
    %81 = tpu.concatenate %1, %80 in 1 : vector<8x32xf32>, vector<8x32xf32> -> vector<8x64xf32>
    %82 = arith.truncf %81 : vector<8x64xf32> to vector<8x64xbf16>
    %c0_58 = arith.constant 0 : index
    %c0_59 = arith.constant 0 : index
    %83 = vector.load %arg20[%c0_58, %c0_59] : memref<64x32xbf16, #tpu.memory_space<vmem>>, vector<64x32xbf16>
    %cst_60 = arith.constant dense<0.000000e+00> : vector<8x32xf32>
    %84 = tpu.matmul %82, %83, %cst_60 {dimension_numbers = #tpu.dot_dimension_numbers<[1], [0], [0], [1], [0, 0, 1, 1], [], []>} : vector<8x64xbf16>, vector<64x32xbf16>, vector<8x32xf32> -> vector<8x32xf32>
    %c0_61 = arith.constant 0 : index
    %c0_62 = arith.constant 0 : index
    %85 = vector.load %arg21[%c0_61, %c0_62] : memref<1x32xf32, #tpu.memory_space<vmem>>, vector<1x32xf32>
    %86 = vector.broadcast %85 : vector<1x32xf32> to vector<8x32xf32>
    %87 = arith.addf %84, %86 : vector<8x32xf32>
    %cst_63 = arith.constant 0.000000e+00 : f32
    %88 = vector.broadcast %cst_63 : f32 to vector<8x32xf32>
    %89 = arith.maximumf %87, %88 : vector<8x32xf32>
    %90 = arith.truncf %89 : vector<8x32xf32> to vector<8x32xbf16>
    %c0_64 = arith.constant 0 : index
    %c0_65 = arith.constant 0 : index
    %91 = vector.load %arg22[%c0_64, %c0_65] : memref<32x32xbf16, #tpu.memory_space<vmem>>, vector<32x32xbf16>
    %cst_66 = arith.constant dense<0.000000e+00> : vector<8x32xf32>
    %92 = tpu.matmul %90, %91, %cst_66 {dimension_numbers = #tpu.dot_dimension_numbers<[1], [0], [0], [1], [0, 0, 1, 1], [], []>} : vector<8x32xbf16>, vector<32x32xbf16>, vector<8x32xf32> -> vector<8x32xf32>
    %c0_67 = arith.constant 0 : index
    %c0_68 = arith.constant 0 : index
    %93 = vector.load %arg23[%c0_67, %c0_68] : memref<1x32xf32, #tpu.memory_space<vmem>>, vector<1x32xf32>
    %94 = vector.broadcast %93 : vector<1x32xf32> to vector<8x32xf32>
    %95 = arith.addf %92, %94 : vector<8x32xf32>
    %96 = arith.addf %1, %95 : vector<8x32xf32>
    %cst_69 = arith.constant 0.000000e+00 : f32
    %97 = vector.broadcast %cst_69 : f32 to vector<8x84xf32>
    %98 = tpu.concatenate %96, %79, %97 in 1 : vector<8x32xf32>, vector<8x12xf32>, vector<8x84xf32> -> vector<8x128xf32>
    %c0_70 = arith.constant 0 : index
    %c0_71 = arith.constant 0 : index
    %c0_72 = arith.constant 0 : index
    %99 = vector.load %arg24[%c0_70, %c0_71, %c0_72] : memref<1x8x128xf32, #tpu.memory_space<vmem>>, vector<1x8x128xf32>
    %100 = vector.shape_cast %99 : vector<1x8x128xf32> to vector<8x128xf32>
    %101 = vector.shape_cast %98 : vector<8x128xf32> to vector<1x8x128xf32>
    tpu.vector_store %arg24[%c0_70, %c0_71, %c0_72], %101 {strides = array<i32>} : memref<1x8x128xf32, #tpu.memory_space<vmem>>, vector<1x8x128xf32>,
    return
  }
  func.func @transform_0(%arg0: i32) -> (i32, i32, i32) {
    %c0_i32 = arith.constant 0 : i32
    %c0_i32_0 = arith.constant 0 : i32
    %c0_i32_1 = arith.constant 0 : i32
    return %arg0, %c0_i32, %c0_i32_0 : i32, i32, i32
  }
  func.func @transform_1(%arg0: i32) -> (i32, i32, i32) {
    %c0_i32 = arith.constant 0 : i32
    %c0_i32_0 = arith.constant 0 : i32
    %c0_i32_1 = arith.constant 0 : i32
    return %arg0, %c0_i32, %c0_i32_0 : i32, i32, i32
  }
  func.func @transform_2(%arg0: i32) -> (i32, i32) {
    %c0_i32 = arith.constant 0 : i32
    %c0_i32_0 = arith.constant 0 : i32
    %c0_i32_1 = arith.constant 0 : i32
    return %c0_i32, %c0_i32_0 : i32, i32
  }
  func.func @transform_3(%arg0: i32) -> (i32, i32) {
    %c0_i32 = arith.constant 0 : i32
    %c0_i32_0 = arith.constant 0 : i32
    %c0_i32_1 = arith.constant 0 : i32
    return %c0_i32, %c0_i32_0 : i32, i32
  }
  func.func @transform_4(%arg0: i32) -> (i32, i32) {
    %c0_i32 = arith.constant 0 : i32
    %c0_i32_0 = arith.constant 0 : i32
    %c0_i32_1 = arith.constant 0 : i32
    return %c0_i32, %c0_i32_0 : i32, i32
  }
  func.func @transform_5(%arg0: i32) -> (i32, i32) {
    %c0_i32 = arith.constant 0 : i32
    %c0_i32_0 = arith.constant 0 : i32
    %c0_i32_1 = arith.constant 0 : i32
    return %c0_i32, %c0_i32_0 : i32, i32
  }
  func.func @transform_6(%arg0: i32) -> (i32, i32) {
    %c0_i32 = arith.constant 0 : i32
    %c0_i32_0 = arith.constant 0 : i32
    %c0_i32_1 = arith.constant 0 : i32
    return %c0_i32, %c0_i32_0 : i32, i32
  }
  func.func @transform_7(%arg0: i32) -> (i32, i32) {
    %c0_i32 = arith.constant 0 : i32
    %c0_i32_0 = arith.constant 0 : i32
    %c0_i32_1 = arith.constant 0 : i32
    return %c0_i32, %c0_i32_0 : i32, i32
  }
  func.func @transform_8(%arg0: i32) -> (i32, i32) {
    %c0_i32 = arith.constant 0 : i32
    %c0_i32_0 = arith.constant 0 : i32
    %c0_i32_1 = arith.constant 0 : i32
    return %c0_i32, %c0_i32_0 : i32, i32
  }
  func.func @transform_9(%arg0: i32) -> (i32, i32) {
    %c0_i32 = arith.constant 0 : i32
    %c0_i32_0 = arith.constant 0 : i32
    %c0_i32_1 = arith.constant 0 : i32
    return %c0_i32, %c0_i32_0 : i32, i32
  }
  func.func @transform_10(%arg0: i32) -> (i32, i32) {
    %c0_i32 = arith.constant 0 : i32
    %c0_i32_0 = arith.constant 0 : i32
    %c0_i32_1 = arith.constant 0 : i32
    return %c0_i32, %c0_i32_0 : i32, i32
  }
  func.func @transform_11(%arg0: i32) -> (i32, i32) {
    %c0_i32 = arith.constant 0 : i32
    %c0_i32_0 = arith.constant 0 : i32
    %c0_i32_1 = arith.constant 0 : i32
    return %c0_i32, %c0_i32_0 : i32, i32
  }
  func.func @transform_12(%arg0: i32) -> (i32, i32) {
    %c0_i32 = arith.constant 0 : i32
    %c0_i32_0 = arith.constant 0 : i32
    %c0_i32_1 = arith.constant 0 : i32
    return %c0_i32, %c0_i32_0 : i32, i32
  }
  func.func @transform_13(%arg0: i32) -> (i32, i32) {
    %c0_i32 = arith.constant 0 : i32
    %c0_i32_0 = arith.constant 0 : i32
    %c0_i32_1 = arith.constant 0 : i32
    return %c0_i32, %c0_i32_0 : i32, i32
  }
  func.func @transform_14(%arg0: i32) -> (i32, i32) {
    %c0_i32 = arith.constant 0 : i32
    %c0_i32_0 = arith.constant 0 : i32
    %c0_i32_1 = arith.constant 0 : i32
    return %c0_i32, %c0_i32_0 : i32, i32
  }
  func.func @transform_15(%arg0: i32) -> (i32, i32) {
    %c0_i32 = arith.constant 0 : i32
    %c0_i32_0 = arith.constant 0 : i32
    %c0_i32_1 = arith.constant 0 : i32
    return %c0_i32, %c0_i32_0 : i32, i32
  }
  func.func @transform_16(%arg0: i32) -> (i32, i32) {
    %c0_i32 = arith.constant 0 : i32
    %c0_i32_0 = arith.constant 0 : i32
    %c0_i32_1 = arith.constant 0 : i32
    return %c0_i32, %c0_i32_0 : i32, i32
  }
  func.func @transform_17(%arg0: i32) -> (i32, i32) {
    %c0_i32 = arith.constant 0 : i32
    %c0_i32_0 = arith.constant 0 : i32
    %c0_i32_1 = arith.constant 0 : i32
    return %c0_i32, %c0_i32_0 : i32, i32
  }
  func.func @transform_18(%arg0: i32) -> (i32, i32) {
    %c0_i32 = arith.constant 0 : i32
    %c0_i32_0 = arith.constant 0 : i32
    %c0_i32_1 = arith.constant 0 : i32
    return %c0_i32, %c0_i32_0 : i32, i32
  }
  func.func @transform_19(%arg0: i32) -> (i32, i32) {
    %c0_i32 = arith.constant 0 : i32
    %c0_i32_0 = arith.constant 0 : i32
    %c0_i32_1 = arith.constant 0 : i32
    return %c0_i32, %c0_i32_0 : i32, i32
  }
  func.func @transform_20(%arg0: i32) -> (i32, i32) {
    %c0_i32 = arith.constant 0 : i32
    %c0_i32_0 = arith.constant 0 : i32
    %c0_i32_1 = arith.constant 0 : i32
    return %c0_i32, %c0_i32_0 : i32, i32
  }
  func.func @transform_21(%arg0: i32) -> (i32, i32) {
    %c0_i32 = arith.constant 0 : i32
    %c0_i32_0 = arith.constant 0 : i32
    %c0_i32_1 = arith.constant 0 : i32
    return %c0_i32, %c0_i32_0 : i32, i32
  }
  func.func @transform_22(%arg0: i32) -> (i32, i32) {
    %c0_i32 = arith.constant 0 : i32
    %c0_i32_0 = arith.constant 0 : i32
    %c0_i32_1 = arith.constant 0 : i32
    return %c0_i32, %c0_i32_0 : i32, i32
  }
  func.func @transform_23(%arg0: i32) -> (i32, i32, i32) {
    %c0_i32 = arith.constant 0 : i32
    %c0_i32_0 = arith.constant 0 : i32
    %c0_i32_1 = arith.constant 0 : i32
    return %arg0, %c0_i32, %c0_i32_0 : i32, i32, i32
  }
}

module attributes {stable_mosaic.version = 11 : i64} {
  func.func @kernel(%arg0: i32, %arg1: memref<1x8x32xf32, #tpu.memory_space<vmem>>, %arg2: memref<1x8x12xf32, #tpu.memory_space<vmem>>, %arg3: memref<56x8xbf16, #tpu.memory_space<vmem>>, %arg4: memref<56x8xbf16, #tpu.memory_space<vmem>>, %arg5: memref<56x8xf32, #tpu.memory_space<vmem>>, %arg6: memref<8x56xbf16, #tpu.memory_space<vmem>>, %arg7: memref<8x1xf32, #tpu.memory_space<vmem>>, %arg8: memref<56x8xbf16, #tpu.memory_space<vmem>>, %arg9: memref<12x48xbf16, #tpu.memory_space<vmem>>, %arg10: memref<12x48xbf16, #tpu.memory_space<vmem>>, %arg11: memref<48x16xbf16, #tpu.memory_space<vmem>>, %arg12: memref<32x64xbf16, #tpu.memory_space<vmem>>, %arg13: memref<24x32xbf16, #tpu.memory_space<vmem>>, %arg14: memref<1x32xf32, #tpu.memory_space<vmem>>, %arg15: memref<32x32xbf16, #tpu.memory_space<vmem>>, %arg16: memref<1x32xf32, #tpu.memory_space<vmem>>, %arg17: memref<32x32xbf16, #tpu.memory_space<vmem>>, %arg18: memref<1x32xf32, #tpu.memory_space<vmem>>, %arg19: memref<32x12xbf16, #tpu.memory_space<vmem>>, %arg20: memref<64x32xbf16, #tpu.memory_space<vmem>>, %arg21: memref<1x32xf32, #tpu.memory_space<vmem>>, %arg22: memref<32x32xbf16, #tpu.memory_space<vmem>>, %arg23: memref<1x32xf32, #tpu.memory_space<vmem>>, %arg24: memref<1x8x128xf32, #tpu.memory_space<vmem>>) attributes {dimension_semantics = [#tpu.dimension_semantics<parallel>], iteration_bounds = array<i64: 2>, scalar_prefetch = 0 : i64, scratch_operands = 0 : i64, tpu.core_type = #tpu.core_type<tc>, window_params = [{transform_indices = @transform_0, window_bounds = array<i64: 1, 8, 32>}, {transform_indices = @transform_1, window_bounds = array<i64: 1, 8, 12>}, {pipeline_mode = #tpu.pipeline_mode<synchronous>, transform_indices = @transform_2, window_bounds = array<i64: 56, 8>}, {pipeline_mode = #tpu.pipeline_mode<synchronous>, transform_indices = @transform_3, window_bounds = array<i64: 56, 8>}, {pipeline_mode = #tpu.pipeline_mode<synchronous>, transform_indices = @transform_4, window_bounds = array<i64: 56, 8>}, {pipeline_mode = #tpu.pipeline_mode<synchronous>, transform_indices = @transform_5, window_bounds = array<i64: 8, 56>}, {pipeline_mode = #tpu.pipeline_mode<synchronous>, transform_indices = @transform_6, window_bounds = array<i64: 8, 1>}, {pipeline_mode = #tpu.pipeline_mode<synchronous>, transform_indices = @transform_7, window_bounds = array<i64: 56, 8>}, {pipeline_mode = #tpu.pipeline_mode<synchronous>, transform_indices = @transform_8, window_bounds = array<i64: 12, 48>}, {pipeline_mode = #tpu.pipeline_mode<synchronous>, transform_indices = @transform_9, window_bounds = array<i64: 12, 48>}, {pipeline_mode = #tpu.pipeline_mode<synchronous>, transform_indices = @transform_10, window_bounds = array<i64: 48, 16>}, {pipeline_mode = #tpu.pipeline_mode<synchronous>, transform_indices = @transform_11, window_bounds = array<i64: 32, 64>}, {pipeline_mode = #tpu.pipeline_mode<synchronous>, transform_indices = @transform_12, window_bounds = array<i64: 24, 32>}, {pipeline_mode = #tpu.pipeline_mode<synchronous>, transform_indices = @transform_13, window_bounds = array<i64: 1, 32>}, {pipeline_mode = #tpu.pipeline_mode<synchronous>, transform_indices = @transform_14, window_bounds = array<i64: 32, 32>}, {pipeline_mode = #tpu.pipeline_mode<synchronous>, transform_indices = @transform_15, window_bounds = array<i64: 1, 32>}, {pipeline_mode = #tpu.pipeline_mode<synchronous>, transform_indices = @transform_16, window_bounds = array<i64: 32, 32>}, {pipeline_mode = #tpu.pipeline_mode<synchronous>, transform_indices = @transform_17, window_bounds = array<i64: 1, 32>}, {pipeline_mode = #tpu.pipeline_mode<synchronous>, transform_indices = @transform_18, window_bounds = array<i64: 32, 12>}, {pipeline_mode = #tpu.pipeline_mode<synchronous>, transform_indices = @transform_19, window_bounds = array<i64: 64, 32>}, {pipeline_mode = #tpu.pipeline_mode<synchronous>, transform_indices = @transform_20, window_bounds = array<i64: 1, 32>}, {pipeline_mode = #tpu.pipeline_mode<synchronous>, transform_indices = @transform_21, window_bounds = array<i64: 32, 32>}, {pipeline_mode = #tpu.pipeline_mode<synchronous>, transform_indices = @transform_22, window_bounds = array<i64: 1, 32>}, {transform_indices = @transform_23, window_bounds = array<i64: 1, 8, 128>}]} {
    %c0 = arith.constant 0 : index
    %c0_0 = arith.constant 0 : index
    %c0_1 = arith.constant 0 : index
    %0 = vector.load %arg1[%c0, %c0_0, %c0_1] : memref<1x8x32xf32, #tpu.memory_space<vmem>>, vector<1x8x32xf32>
    %1 = vector.shape_cast %0 : vector<1x8x32xf32> to vector<8x32xf32>
    %c0_2 = arith.constant 0 : index
    %c0_3 = arith.constant 0 : index
    %c0_4 = arith.constant 0 : index
    %2 = vector.load %arg2[%c0_2, %c0_3, %c0_4] : memref<1x8x12xf32, #tpu.memory_space<vmem>>, vector<1x8x12xf32>
    %3 = vector.shape_cast %2 : vector<1x8x12xf32> to vector<8x12xf32>
    %4 = arith.truncf %1 : vector<8x32xf32> to vector<8x32xbf16>
    %c0_5 = arith.constant 0 : index
    %c0_6 = arith.constant 0 : index
    %5 = vector.load %arg12[%c0_5, %c0_6] : memref<32x64xbf16, #tpu.memory_space<vmem>>, vector<32x64xbf16>
    %cst = arith.constant dense<0.000000e+00> : vector<8x64xf32>
    %6 = tpu.matmul %4, %5, %cst {dimension_numbers = #tpu.dot_dimension_numbers<[1], [0], [0], [1], [0, 0, 1, 1], [], []>} : vector<8x32xbf16>, vector<32x64xbf16>, vector<8x64xf32> -> vector<8x64xf32>
    %7 = arith.truncf %6 : vector<8x64xf32> to vector<8x64xbf16>
    %c0_7 = arith.constant 0 : index
    %c0_8 = arith.constant 0 : index
    %8 = vector.load %arg5[%c0_7, %c0_8] : memref<56x8xf32, #tpu.memory_space<vmem>>, vector<56x8xf32>
    %cst_9 = arith.constant dense<0.000000e+00> : vector<56x12xf32>
    %9 = tpu.matmul %8, %3, %cst_9 {dimension_numbers = #tpu.dot_dimension_numbers<[1], [0], [0], [1], [0, 0, 1, 1], [], []>} : vector<56x8xf32>, vector<8x12xf32>, vector<56x12xf32> -> vector<56x12xf32>
    %10 = arith.truncf %9 : vector<56x12xf32> to vector<56x12xbf16>
    %c0_10 = arith.constant 0 : index
    %c0_11 = arith.constant 0 : index
    %11 = vector.load %arg9[%c0_10, %c0_11] : memref<12x48xbf16, #tpu.memory_space<vmem>>, vector<12x48xbf16>
    %cst_12 = arith.constant dense<0.000000e+00> : vector<56x48xf32>
    %12 = tpu.matmul %10, %11, %cst_12 {dimension_numbers = #tpu.dot_dimension_numbers<[1], [0], [0], [1], [0, 0, 1, 1], [], []>} : vector<56x12xbf16>, vector<12x48xbf16>, vector<56x48xf32> -> vector<56x48xf32>
    %c0_13 = arith.constant 0 : index
    %c0_14 = arith.constant 0 : index
    %13 = vector.load %arg10[%c0_13, %c0_14] : memref<12x48xbf16, #tpu.memory_space<vmem>>, vector<12x48xbf16>
    %cst_15 = arith.constant dense<0.000000e+00> : vector<56x48xf32>
    %14 = tpu.matmul %10, %13, %cst_15 {dimension_numbers = #tpu.dot_dimension_numbers<[1], [0], [0], [1], [0, 0, 1, 1], [], []>} : vector<56x12xbf16>, vector<12x48xbf16>, vector<56x48xf32> -> vector<56x48xf32>
    %15 = arith.mulf %12, %14 : vector<56x48xf32>
    %16 = arith.truncf %15 : vector<56x48xf32> to vector<56x48xbf16>
    %c0_16 = arith.constant 0 : index
    %c0_17 = arith.constant 0 : index
    %17 = vector.load %arg11[%c0_16, %c0_17] : memref<48x16xbf16, #tpu.memory_space<vmem>>, vector<48x16xbf16>
    %cst_18 = arith.constant dense<0.000000e+00> : vector<56x16xf32>
    %18 = tpu.matmul %16, %17, %cst_18 {dimension_numbers = #tpu.dot_dimension_numbers<[1], [0], [0], [1], [0, 0, 1, 1], [], []>} : vector<56x48xbf16>, vector<48x16xbf16>, vector<56x16xf32> -> vector<56x16xf32>
    %19 = arith.mulf %18, %18 : vector<56x16xf32>
    %cst_19 = arith.constant dense<0.000000e+00> : vector<56xf32>
    %20 = vector.multi_reduction <add>, %19, %cst_19 [1] : vector<56x16xf32> to vector<56xf32>
    %21 = vector.shape_cast %20 : vector<56xf32> to vector<56x1xf32>
    %cst_20 = arith.constant 1.000000e-24 : f32
    %22 = vector.broadcast %cst_20 : f32 to vector<56x1xf32>
    %23 = arith.maximumf %21, %22 : vector<56x1xf32>
    %24 = math.rsqrt %23 : vector<56x1xf32>
    %25 = vector.broadcast %24 : vector<56x1xf32> to vector<56x16xf32>
    %26 = arith.mulf %18, %25 : vector<56x16xf32>
    %27 = arith.truncf %26 : vector<56x16xf32> to vector<56x16xbf16>
    %c0_21 = arith.constant 0 : index
    %c0_22 = arith.constant 0 : index
    %28 = vector.load %arg8[%c0_21, %c0_22] : memref<56x8xbf16, #tpu.memory_space<vmem>>, vector<56x8xbf16>
    %29 = tpu.concatenate %27, %28 in 1 : vector<56x16xbf16>, vector<56x8xbf16> -> vector<56x24xbf16>
    %c0_23 = arith.constant 0 : index
    %c0_24 = arith.constant 0 : index
    %30 = vector.load %arg3[%c0_23, %c0_24] : memref<56x8xbf16, #tpu.memory_space<vmem>>, vector<56x8xbf16>
    %31 = vector.extract_strided_slice %7 {offsets = [0, 0], sizes = [8, 32], strides = [1, 1]} : vector<8x64xbf16> to vector<8x32xbf16>
    %cst_25 = arith.constant dense<0.000000e+00> : vector<56x32xf32>
    %32 = tpu.matmul %30, %31, %cst_25 {dimension_numbers = #tpu.dot_dimension_numbers<[1], [0], [0], [1], [0, 0, 1, 1], [], []>} : vector<56x8xbf16>, vector<8x32xbf16>, vector<56x32xf32> -> vector<56x32xf32>
    %c0_26 = arith.constant 0 : index
    %c0_27 = arith.constant 0 : index
    %33 = vector.load %arg4[%c0_26, %c0_27] : memref<56x8xbf16, #tpu.memory_space<vmem>>, vector<56x8xbf16>
    %34 = vector.extract_strided_slice %7 {offsets = [0, 32], sizes = [8, 32], strides = [1, 1]} : vector<8x64xbf16> to vector<8x32xbf16>
    %cst_28 = arith.constant dense<0.000000e+00> : vector<56x32xf32>
    %35 = tpu.matmul %33, %34, %cst_28 {dimension_numbers = #tpu.dot_dimension_numbers<[1], [0], [0], [1], [0, 0, 1, 1], [], []>} : vector<56x8xbf16>, vector<8x32xbf16>, vector<56x32xf32> -> vector<56x32xf32>
    %36 = arith.addf %32, %35 : vector<56x32xf32>
    %c0_29 = arith.constant 0 : index
    %c0_30 = arith.constant 0 : index
    %37 = vector.load %arg13[%c0_29, %c0_30] : memref<24x32xbf16, #tpu.memory_space<vmem>>, vector<24x32xbf16>
    %cst_31 = arith.constant dense<0.000000e+00> : vector<56x32xf32>
    %38 = tpu.matmul %29, %37, %cst_31 {dimension_numbers = #tpu.dot_dimension_numbers<[1], [0], [0], [1], [0, 0, 1, 1], [], []>} : vector<56x24xbf16>, vector<24x32xbf16>, vector<56x32xf32> -> vector<56x32xf32>
    %39 = arith.addf %36, %38 : vector<56x32xf32>
    %c0_32 = arith.constant 0 : index
    %c0_33 = arith.constant 0 : index
    %40 = vector.load %arg14[%c0_32, %c0_33] : memref<1x32xf32, #tpu.memory_space<vmem>>, vector<1x32xf32>
    %41 = vector.broadcast %40 : vector<1x32xf32> to vector<56x32xf32>
    %42 = arith.addf %39, %41 : vector<56x32xf32>
    %cst_34 = arith.constant 0.000000e+00 : f32
    %43 = vector.broadcast %cst_34 : f32 to vector<56x32xf32>
    %44 = arith.maximumf %42, %43 : vector<56x32xf32>
    %45 = arith.truncf %44 : vector<56x32xf32> to vector<56x32xbf16>
    %c0_35 = arith.constant 0 : index
    %c0_36 = arith.constant 0 : index
    %46 = vector.load %arg15[%c0_35, %c0_36] : memref<32x32xbf16, #tpu.memory_space<vmem>>, vector<32x32xbf16>
    %cst_37 = arith.constant dense<0.000000e+00> : vector<56x32xf32>
    %47 = tpu.matmul %45, %46, %cst_37 {dimension_numbers = #tpu.dot_dimension_numbers<[1], [0], [0], [1], [0, 0, 1, 1], [], []>} : vector<56x32xbf16>, vector<32x32xbf16>, vector<56x32xf32> -> vector<56x32xf32>
    %c0_38 = arith.constant 0 : index
    %c0_39 = arith.constant 0 : index
    %48 = vector.load %arg16[%c0_38, %c0_39] : memref<1x32xf32, #tpu.memory_space<vmem>>, vector<1x32xf32>
    %49 = vector.broadcast %48 : vector<1x32xf32> to vector<56x32xf32>
    %50 = arith.addf %47, %49 : vector<56x32xf32>
    %cst_40 = arith.constant 0.000000e+00 : f32
    %51 = vector.broadcast %cst_40 : f32 to vector<56x32xf32>
    %52 = arith.maximumf %50, %51 : vector<56x32xf32>
    %53 = arith.truncf %52 : vector<56x32xf32> to vector<56x32xbf16>
    %c0_41 = arith.constant 0 : index
    %c0_42 = arith.constant 0 : index
    %54 = vector.load %arg17[%c0_41, %c0_42] : memref<32x32xbf16, #tpu.memory_space<vmem>>, vector<32x32xbf16>
    %cst_43 = arith.constant dense<0.000000e+00> : vector<56x32xf32>
    %55 = tpu.matmul %53, %54, %cst_43 {dimension_numbers = #tpu.dot_dimension_numbers<[1], [0], [0], [1], [0, 0, 1, 1], [], []>} : vector<56x32xbf16>, vector<32x32xbf16>, vector<56x32xf32> -> vector<56x32xf32>
    %c0_44 = arith.constant 0 : index
    %c0_45 = arith.constant 0 : index
    %56 = vector.load %arg18[%c0_44, %c0_45] : memref<1x32xf32, #tpu.memory_space<vmem>>, vector<1x32xf32>
    %57 = vector.broadcast %56 : vector<1x32xf32> to vector<56x32xf32>
    %58 = arith.addf %55, %57 : vector<56x32xf32>
    %cst_46 = arith.constant 0.000000e+00 : f32
    %59 = vector.broadcast %cst_46 : f32 to vector<56x32xf32>
    %60 = arith.maximumf %58, %59 : vector<56x32xf32>
    %61 = arith.truncf %60 : vector<56x32xf32> to vector<56x32xbf16>
    %c0_47 = arith.constant 0 : index
    %c0_48 = arith.constant 0 : index
    %62 = vector.load %arg19[%c0_47, %c0_48] : memref<32x12xbf16, #tpu.memory_space<vmem>>, vector<32x12xbf16>
    %cst_49 = arith.constant dense<0.000000e+00> : vector<56x12xf32>
    %63 = tpu.matmul %61, %62, %cst_49 {dimension_numbers = #tpu.dot_dimension_numbers<[1], [0], [0], [1], [0, 0, 1, 1], [], []>} : vector<56x32xbf16>, vector<32x12xbf16>, vector<56x12xf32> -> vector<56x12xf32>
    %64 = arith.mulf %9, %63 : vector<56x12xf32>
    %cst_50 = arith.constant -1.000000e+02 : f32
    %cst_51 = arith.constant 1.000000e+02 : f32
    %65 = vector.broadcast %cst_50 : f32 to vector<56x12xf32>
    %66 = arith.maximumf %65, %64 : vector<56x12xf32>
    %67 = vector.broadcast %cst_51 : f32 to vector<56x12xf32>
    %68 = arith.minimumf %67, %66 : vector<56x12xf32>
    %69 = arith.truncf %68 : vector<56x12xf32> to vector<56x12xbf16>
    %70 = tpu.concatenate %69, %53 in 1 : vector<56x12xbf16>, vector<56x32xbf16> -> vector<56x44xbf16>
    %c0_52 = arith.constant 0 : index
    %c0_53 = arith.constant 0 : index
    %71 = vector.load %arg6[%c0_52, %c0_53] : memref<8x56xbf16, #tpu.memory_space<vmem>>, vector<8x56xbf16>
    %cst_54 = arith.constant dense<0.000000e+00> : vector<8x44xf32>
    %72 = tpu.matmul %71, %70, %cst_54 {dimension_numbers = #tpu.dot_dimension_numbers<[1], [0], [0], [1], [0, 0, 1, 1], [], []>} : vector<8x56xbf16>, vector<56x44xbf16>, vector<8x44xf32> -> vector<8x44xf32>
    %73 = vector.extract_strided_slice %72 {offsets = [0, 0], sizes = [8, 12], strides = [1, 1]} : vector<8x44xf32> to vector<8x12xf32>
    %c0_55 = arith.constant 0 : index
    %c0_56 = arith.constant 0 : index
    %74 = vector.load %arg7[%c0_55, %c0_56] : memref<8x1xf32, #tpu.memory_space<vmem>>, vector<8x1xf32>
    %75 = vector.broadcast %74 : vector<8x1xf32> to vector<8x12xf32>
    %76 = arith.mulf %73, %75 : vector<8x12xf32>
    %cst_57 = arith.constant 1.000000e+00 : f32
    %77 = vector.broadcast %cst_57 : f32 to vector<8x12xf32>
    %78 = arith.mulf %76, %77 : vector<8x12xf32>
    %79 = arith.addf %3, %78 : vector<8x12xf32>
    %80 = vector.extract_strided_slice %72 {offsets = [0, 12], sizes = [8, 32], strides = [1, 1]} : vector<8x44xf32> to vector<8x32xf32>
    %81 = tpu.concatenate %1, %80 in 1 : vector<8x32xf32>, vector<8x32xf32> -> vector<8x64xf32>
    %82 = arith.truncf %81 : vector<8x64xf32> to vector<8x64xbf16>
    %c0_58 = arith.constant 0 : index
    %c0_59 = arith.constant 0 : index
    %83 = vector.load %arg20[%c0_58, %c0_59] : memref<64x32xbf16, #tpu.memory_space<vmem>>, vector<64x32xbf16>
    %cst_60 = arith.constant dense<0.000000e+00> : vector<8x32xf32>
    %84 = tpu.matmul %82, %83, %cst_60 {dimension_numbers = #tpu.dot_dimension_numbers<[1], [0], [0], [1], [0, 0, 1, 1], [], []>} : vector<8x64xbf16>, vector<64x32xbf16>, vector<8x32xf32> -> vector<8x32xf32>
    %c0_61 = arith.constant 0 : index
    %c0_62 = arith.constant 0 : index
    %85 = vector.load %arg21[%c0_61, %c0_62] : memref<1x32xf32, #tpu.memory_space<vmem>>, vector<1x32xf32>
    %86 = vector.broadcast %85 : vector<1x32xf32> to vector<8x32xf32>
    %87 = arith.addf %84, %86 : vector<8x32xf32>
    %cst_63 = arith.constant 0.000000e+00 : f32
    %88 = vector.broadcast %cst_63 : f32 to vector<8x32xf32>
    %89 = arith.maximumf %87, %88 : vector<8x32xf32>
    %90 = arith.truncf %89 : vector<8x32xf32> to vector<8x32xbf16>
    %c0_64 = arith.constant 0 : index
    %c0_65 = arith.constant 0 : index
    %91 = vector.load %arg22[%c0_64, %c0_65] : memref<32x32xbf16, #tpu.memory_space<vmem>>, vector<32x32xbf16>
    %cst_66 = arith.constant dense<0.000000e+00> : vector<8x32xf32>
    %92 = tpu.matmul %90, %91, %cst_66 {dimension_numbers = #tpu.dot_dimension_numbers<[1], [0], [0], [1], [0, 0, 1, 1], [], []>} : vector<8x32xbf16>, vector<32x32xbf16>, vector<8x32xf32> -> vector<8x32xf32>
    %c0_67 = arith.constant 0 : index
    %c0_68 = arith.constant 0 : index
    %93 = vector.load %arg23[%c0_67, %c0_68] : memref<1x32xf32, #tpu.memory_space<vmem>>, vector<1x32xf32>
    %94 = vector.broadcast %93 : vector<1x32xf32> to vector<8x32xf32>
    %95 = arith.addf %92, %94 : vector<8x32xf32>
    %96 = arith.addf %1, %95 : vector<8x32xf32>
    %cst_69 = arith.constant 0.000000e+00 : f32
    %97 = vector.broadcast %cst_69 : f32 to vector<8x84xf32>
    %98 = tpu.concatenate %96, %79, %97 in 1 : vector<8x32xf32>, vector<8x12xf32>, vector<8x84xf32> -> vector<8x128xf32>
    %c0_70 = arith.constant 0 : index
    %c0_71 = arith.constant 0 : index
    %c0_72 = arith.constant 0 : index
    %99 = vector.load %arg24[%c0_70, %c0_71, %c0_72] : memref<1x8x128xf32, #tpu.memory_space<vmem>>, vector<1x8x128xf32>
    %100 = vector.shape_cast %99 : vector<1x8x128xf32> to vector<8x128xf32>
    %101 = vector.shape_cast %98 : vector<8x128xf32> to vector<1x8x128xf32>
    tpu.vector_store %arg24[%c0_70, %c0_71, %c0_72], %101 {strides = array<i32>} : memref<1x8x128xf32, #tpu.memory_space<vmem>>, vector<1x8x128xf32>,
    return
  }
  func.func @transform_0(%arg0: i32) -> (i32, i32, i32) {
    %c0_i32 = arith.constant 0 : i32
    %c0_i32_0 = arith.constant 0 : i32
    %c0_i32_1 = arith.constant 0 : i32
    return %arg0, %c0_i32, %c0_i32_0 : i32, i32, i32
  }
  func.func @transform_1(%arg0: i32) -> (i32, i32, i32) {
    %c0_i32 = arith.constant 0 : i32
    %c0_i32_0 = arith.constant 0 : i32
    %c0_i32_1 = arith.constant 0 : i32
    return %arg0, %c0_i32, %c0_i32_0 : i32, i32, i32
  }
  func.func @transform_2(%arg0: i32) -> (i32, i32) {
    %c0_i32 = arith.constant 0 : i32
    %c0_i32_0 = arith.constant 0 : i32
    %c0_i32_1 = arith.constant 0 : i32
    return %c0_i32, %c0_i32_0 : i32, i32
  }
  func.func @transform_3(%arg0: i32) -> (i32, i32) {
    %c0_i32 = arith.constant 0 : i32
    %c0_i32_0 = arith.constant 0 : i32
    %c0_i32_1 = arith.constant 0 : i32
    return %c0_i32, %c0_i32_0 : i32, i32
  }
  func.func @transform_4(%arg0: i32) -> (i32, i32) {
    %c0_i32 = arith.constant 0 : i32
    %c0_i32_0 = arith.constant 0 : i32
    %c0_i32_1 = arith.constant 0 : i32
    return %c0_i32, %c0_i32_0 : i32, i32
  }
  func.func @transform_5(%arg0: i32) -> (i32, i32) {
    %c0_i32 = arith.constant 0 : i32
    %c0_i32_0 = arith.constant 0 : i32
    %c0_i32_1 = arith.constant 0 : i32
    return %c0_i32, %c0_i32_0 : i32, i32
  }
  func.func @transform_6(%arg0: i32) -> (i32, i32) {
    %c0_i32 = arith.constant 0 : i32
    %c0_i32_0 = arith.constant 0 : i32
    %c0_i32_1 = arith.constant 0 : i32
    return %c0_i32, %c0_i32_0 : i32, i32
  }
  func.func @transform_7(%arg0: i32) -> (i32, i32) {
    %c0_i32 = arith.constant 0 : i32
    %c0_i32_0 = arith.constant 0 : i32
    %c0_i32_1 = arith.constant 0 : i32
    return %c0_i32, %c0_i32_0 : i32, i32
  }
  func.func @transform_8(%arg0: i32) -> (i32, i32) {
    %c0_i32 = arith.constant 0 : i32
    %c0_i32_0 = arith.constant 0 : i32
    %c0_i32_1 = arith.constant 0 : i32
    return %c0_i32, %c0_i32_0 : i32, i32
  }
  func.func @transform_9(%arg0: i32) -> (i32, i32) {
    %c0_i32 = arith.constant 0 : i32
    %c0_i32_0 = arith.constant 0 : i32
    %c0_i32_1 = arith.constant 0 : i32
    return %c0_i32, %c0_i32_0 : i32, i32
  }
  func.func @transform_10(%arg0: i32) -> (i32, i32) {
    %c0_i32 = arith.constant 0 : i32
    %c0_i32_0 = arith.constant 0 : i32
    %c0_i32_1 = arith.constant 0 : i32
    return %c0_i32, %c0_i32_0 : i32, i32
  }
  func.func @transform_11(%arg0: i32) -> (i32, i32) {
    %c0_i32 = arith.constant 0 : i32
    %c0_i32_0 = arith.constant 0 : i32
    %c0_i32_1 = arith.constant 0 : i32
    return %c0_i32, %c0_i32_0 : i32, i32
  }
  func.func @transform_12(%arg0: i32) -> (i32, i32) {
    %c0_i32 = arith.constant 0 : i32
    %c0_i32_0 = arith.constant 0 : i32
    %c0_i32_1 = arith.constant 0 : i32
    return %c0_i32, %c0_i32_0 : i32, i32
  }
  func.func @transform_13(%arg0: i32) -> (i32, i32) {
    %c0_i32 = arith.constant 0 : i32
    %c0_i32_0 = arith.constant 0 : i32
    %c0_i32_1 = arith.constant 0 : i32
    return %c0_i32, %c0_i32_0 : i32, i32
  }
  func.func @transform_14(%arg0: i32) -> (i32, i32) {
    %c0_i32 = arith.constant 0 : i32
    %c0_i32_0 = arith.constant 0 : i32
    %c0_i32_1 = arith.constant 0 : i32
    return %c0_i32, %c0_i32_0 : i32, i32
  }
  func.func @transform_15(%arg0: i32) -> (i32, i32) {
    %c0_i32 = arith.constant 0 : i32
    %c0_i32_0 = arith.constant 0 : i32
    %c0_i32_1 = arith.constant 0 : i32
    return %c0_i32, %c0_i32_0 : i32, i32
  }
  func.func @transform_16(%arg0: i32) -> (i32, i32) {
    %c0_i32 = arith.constant 0 : i32
    %c0_i32_0 = arith.constant 0 : i32
    %c0_i32_1 = arith.constant 0 : i32
    return %c0_i32, %c0_i32_0 : i32, i32
  }
  func.func @transform_17(%arg0: i32) -> (i32, i32) {
    %c0_i32 = arith.constant 0 : i32
    %c0_i32_0 = arith.constant 0 : i32
    %c0_i32_1 = arith.constant 0 : i32
    return %c0_i32, %c0_i32_0 : i32, i32
  }
  func.func @transform_18(%arg0: i32) -> (i32, i32) {
    %c0_i32 = arith.constant 0 : i32
    %c0_i32_0 = arith.constant 0 : i32
    %c0_i32_1 = arith.constant 0 : i32
    return %c0_i32, %c0_i32_0 : i32, i32
  }
  func.func @transform_19(%arg0: i32) -> (i32, i32) {
    %c0_i32 = arith.constant 0 : i32
    %c0_i32_0 = arith.constant 0 : i32
    %c0_i32_1 = arith.constant 0 : i32
    return %c0_i32, %c0_i32_0 : i32, i32
  }
  func.func @transform_20(%arg0: i32) -> (i32, i32) {
    %c0_i32 = arith.constant 0 : i32
    %c0_i32_0 = arith.constant 0 : i32
    %c0_i32_1 = arith.constant 0 : i32
    return %c0_i32, %c0_i32_0 : i32, i32
  }
  func.func @transform_21(%arg0: i32) -> (i32, i32) {
    %c0_i32 = arith.constant 0 : i32
    %c0_i32_0 = arith.constant 0 : i32
    %c0_i32_1 = arith.constant 0 : i32
    return %c0_i32, %c0_i32_0 : i32, i32
  }
  func.func @transform_22(%arg0: i32) -> (i32, i32) {
    %c0_i32 = arith.constant 0 : i32
    %c0_i32_0 = arith.constant 0 : i32
    %c0_i32_1 = arith.constant 0 : i32
    return %c0_i32, %c0_i32_0 : i32, i32
  }
  func.func @transform_23(%arg0: i32) -> (i32, i32, i32) {
    %c0_i32 = arith.constant 0 : i32
    %c0_i32_0 = arith.constant 0 : i32
    %c0_i32_1 = arith.constant 0 : i32
    return %arg0, %c0_i32, %c0_i32_0 : i32, i32, i32
  }
}

</mosaic_0001>

<llo_original>
// kernel: tpu_custom_call.1
$region0: #{tpu_custom_call.1}
  #allocation0 [shape = 'u32[]', space=smem, size = 0x4, offset = 0x4, fixed_abs, tag = 'smem constant byte address 0x4 - core index']
  #allocation1 [shape = 'u32[144,128]{1,0:T(1,128)}', space=vmem, size = 0x12000, scoped, tag = 'internal scratch']
  %s0 = inlined_call_operand.vmem [shape: f32[2,8,32], index: 0, kind: input, shape index: {}]
  %s1 = inlined_call_operand.vmem [shape: f32[2,8,12], index: 1, kind: input, shape index: {}]
  %s2 = inlined_call_operand.vmem [shape: bf16[56,8], index: 2, kind: input, shape index: {}]
  %s3 = inlined_call_operand.vmem [shape: bf16[56,8], index: 3, kind: input, shape index: {}]
  %s4 = inlined_call_operand.vmem [shape: f32[56,8], index: 4, kind: input, shape index: {}]
  %s5 = inlined_call_operand.vmem [shape: bf16[8,56], index: 5, kind: input, shape index: {}]
  %s6 = inlined_call_operand.vmem [shape: f32[8,1], index: 6, kind: input, shape index: {}]
  %s7 = inlined_call_operand.vmem [shape: bf16[56,8], index: 7, kind: input, shape index: {}]
  %s8 = inlined_call_operand.vmem [shape: bf16[12,48], index: 8, kind: input, shape index: {}]
  %s9 = inlined_call_operand.vmem [shape: bf16[12,48], index: 9, kind: input, shape index: {}]
  %s10 = inlined_call_operand.vmem [shape: bf16[48,16], index: 10, kind: input, shape index: {}]
  %s11 = inlined_call_operand.vmem [shape: bf16[32,64], index: 11, kind: input, shape index: {}]
  %s12 = inlined_call_operand.vmem [shape: bf16[24,32], index: 12, kind: input, shape index: {}]
  %s13 = inlined_call_operand.vmem [shape: f32[1,32], index: 13, kind: input, shape index: {}]
  %s14 = inlined_call_operand.vmem [shape: bf16[32,32], index: 14, kind: input, shape index: {}]
  %s15 = inlined_call_operand.vmem [shape: f32[1,32], index: 15, kind: input, shape index: {}]
  %s16 = inlined_call_operand.vmem [shape: bf16[32,32], index: 16, kind: input, shape index: {}]
  %s17 = inlined_call_operand.vmem [shape: f32[1,32], index: 17, kind: input, shape index: {}]
  %s18 = inlined_call_operand.vmem [shape: bf16[32,12], index: 18, kind: input, shape index: {}]
  %s19 = inlined_call_operand.vmem [shape: bf16[64,32], index: 19, kind: input, shape index: {}]
  %s20 = inlined_call_operand.vmem [shape: f32[1,32], index: 20, kind: input, shape index: {}]
  %s21 = inlined_call_operand.vmem [shape: bf16[32,32], index: 21, kind: input, shape index: {}]
  %s22 = inlined_call_operand.vmem [shape: f32[1,32], index: 22, kind: input, shape index: {}]
  %s23 = inlined_call_operand.hbm [shape: f32[2,8,128], index: 23, kind: output, shape index: {}]
  %s24 = sld [smem:[#allocation0]]
  $region125: #{tpu_custom_call.1} parent=0
    _
  %s26 = ssub.s32 1, %s24
  %s27 = scalar_select 0, %s26, %s24
  $region1: #{tpu_custom_call.1} parent=0
    #allocation2 [shape = 'u8[8192]{0}', space=vmem, size = 0x2000, scoped, tag = 'output window, operand 0']
    #allocation3 [shape = 's32[2]{0}', space=sflag, size = 0x8, scoped, tag = 'scoped memory for tpu_custom_call.1']
    %28 = vsyncpa [#allocation3], 0
    %s29 = scalar_lea.sflag [#allocation3], 1
    %30 = vsyncpa %s29, 0
    loop: start=0, step=1, limit=4
    $region2: #{tpu_custom_call.1} parent=1 // loop_pre_header
      _
    $region3: #{tpu_custom_call.1} parent=1 // loop_header
      %s32 = sphi 0, %s36
      %p33 = scmp.ge.s32.totalorder %s32, 4
      %s42 = sphi 0, %s44
      %s45 = sphi 0, %s42
      %s46 = sphi 0, %s45
      %s62 = sphi 0, %s46
      %s68 = sphi 0, %s70
      %s71 = sphi 0, %s68
      %s72 = sphi 0, %s71
      %s88 = sphi 0, %s72
      %s92 = sphi 0, %s92
      %s94 = sphi 0, %s92
      %s95 = sphi 0, %s94
      %s109 = sphi 0, %s95
      %s113 = sphi 0, %s113
      %s115 = sphi 0, %s113
      %s116 = sphi 0, %s115
      %s130 = sphi 0, %s116
      %s134 = sphi 0, %s134
      %s136 = sphi 0, %s134
      %s137 = sphi 0, %s136
      %s151 = sphi 0, %s137
      %s155 = sphi 0, %s155
      %s157 = sphi 0, %s155
      %s158 = sphi 0, %s157
      %s172 = sphi 0, %s158
      %s176 = sphi 0, %s176
      %s178 = sphi 0, %s176
      %s179 = sphi 0, %s178
      %s193 = sphi 0, %s179
      %s197 = sphi 0, %s197
      %s199 = sphi 0, %s197
      %s200 = sphi 0, %s199
      %s214 = sphi 0, %s200
      %s218 = sphi 0, %s218
      %s220 = sphi 0, %s218
      %s221 = sphi 0, %s220
      %s235 = sphi 0, %s221
      %s239 = sphi 0, %s239
      %s241 = sphi 0, %s239
      %s242 = sphi 0, %s241
      %s256 = sphi 0, %s242
      %s260 = sphi 0, %s260
      %s262 = sphi 0, %s260
      %s263 = sphi 0, %s262
      %s277 = sphi 0, %s263
      %s281 = sphi 0, %s281
      %s283 = sphi 0, %s281
      %s284 = sphi 0, %s283
      %s298 = sphi 0, %s284
      %s302 = sphi 0, %s302
      %s304 = sphi 0, %s302
      %s305 = sphi 0, %s304
      %s319 = sphi 0, %s305
      %s323 = sphi 0, %s323
      %s325 = sphi 0, %s323
      %s326 = sphi 0, %s325
      %s340 = sphi 0, %s326
      %s344 = sphi 0, %s344
      %s346 = sphi 0, %s344
      %s347 = sphi 0, %s346
      %s361 = sphi 0, %s347
      %s365 = sphi 0, %s365
      %s367 = sphi 0, %s365
      %s368 = sphi 0, %s367
      %s382 = sphi 0, %s368
      %s386 = sphi 0, %s386
      %s388 = sphi 0, %s386
      %s389 = sphi 0, %s388
      %s403 = sphi 0, %s389
      %s407 = sphi 0, %s407
      %s409 = sphi 0, %s407
      %s410 = sphi 0, %s409
      %s424 = sphi 0, %s410
      %s428 = sphi 0, %s428
      %s430 = sphi 0, %s428
      %s431 = sphi 0, %s430
      %s445 = sphi 0, %s431
      %s449 = sphi 0, %s449
      %s451 = sphi 0, %s449
      %s452 = sphi 0, %s451
      %s466 = sphi 0, %s452
      %s470 = sphi 0, %s470
      %s472 = sphi 0, %s470
      %s473 = sphi 0, %s472
      %s487 = sphi 0, %s473
      %s491 = sphi 0, %s491
      %s493 = sphi 0, %s491
      %s494 = sphi 0, %s493
      %s508 = sphi 0, %s494
      %s512 = sphi 0, %s512
      %s514 = sphi 0, %s512
      %s515 = sphi 0, %s514
      %s529 = sphi 0, %s515
      %s535 = sphi 0, %s537
      %s538 = sphi 0, %s535
      %s539 = sphi 0, %s538
      %s555 = sphi 0, %s539
    $region4: #{tpu_custom_call.1} parent=1 // loop_header_branch
      %35 = sbr.rel (%p33) target = $region8
    $region5: #{tpu_custom_call.1} parent=1 // loop_body
      %s37 = ssub.s32 %s32, 1
      %s38 = ssub.s32 %s32, 2
      %s39 = sadd.s32 %s32, 1
      %s40 = ssub.s32 %s32, %s39
      %p41 = scmp.eq.s32.totalorder %s40, 0
      %s43 = sadd.s32 %s42, 1
      %s44 = scalar_select %p41, %s42, %s43
      %p47 = pneg %p41
      %p48 = scmp.eq.s32.totalorder %s32, 1
      %p49 = por %p47, %p48
      %p50 = scmp.ne.s32.totalorder %s42, %s45
      %p51 = scmp.eq.s32.totalorder %s32, 0
      %p52 = por %p50, %p51
      %p53 = scmp.ne.s32.totalorder %s42, %s45
      %p54 = scmp.eq.s32.totalorder %s37, 1
      %p55 = por %p53, %p54
      %p56 = scmp.ne.s32.totalorder %s45, %s46
      %p57 = scmp.eq.s32.totalorder %s37, 0
      %p58 = por %p56, %p57
      %p59 = scmp.ne.s32.totalorder %s45, %s46
      %p60 = scmp.eq.s32.totalorder %s38, 1
      %p61 = por %p59, %p60
      %p63 = scmp.ne.s32.totalorder %s46, %s62
      %p64 = scmp.eq.s32.totalorder %s38, 0
      %p65 = por %p63, %p64
      %s66 = ssub.s32 %s32, %s39
      %p67 = scmp.eq.s32.totalorder %s66, 0
      %s69 = sadd.s32 %s68, 1
      %s70 = scalar_select %p67, %s68, %s69
      %p73 = pneg %p67
      %p74 = scmp.eq.s32.totalorder %s32, 1
      %p75 = por %p73, %p74
      %p76 = scmp.ne.s32.totalorder %s68, %s71
      %p77 = scmp.eq.s32.totalorder %s32, 0
      %p78 = por %p76, %p77
      %p79 = scmp.ne.s32.totalorder %s68, %s71
      %p80 = scmp.eq.s32.totalorder %s37, 1
      %p81 = por %p79, %p80
      %p82 = scmp.ne.s32.totalorder %s71, %s72
      %p83 = scmp.eq.s32.totalorder %s37, 0
      %p84 = por %p82, %p83
      %p85 = scmp.ne.s32.totalorder %s71, %s72
      %p86 = scmp.eq.s32.totalorder %s38, 1
      %p87 = por %p85, %p86
      %p89 = scmp.ne.s32.totalorder %s72, %s88
      %p90 = scmp.eq.s32.totalorder %s38, 0
      %p91 = por %p89, %p90
      %s93 = sadd.s32 %s92, 1
      %p96 = scmp.eq.s32.totalorder %s32, 1
      %p97 = scmp.ne.s32.totalorder %s92, %s94
      %p98 = scmp.eq.s32.totalorder %s32, 0
      %p99 = por %p97, %p98
      %p100 = scmp.ne.s32.totalorder %s92, %s94
      %p101 = scmp.eq.s32.totalorder %s37, 1
      %p102 = por %p100, %p101
      %p103 = scmp.ne.s32.totalorder %s94, %s95
      %p104 = scmp.eq.s32.totalorder %s37, 0
      %p105 = por %p103, %p104
      %p106 = scmp.ne.s32.totalorder %s94, %s95
      %p107 = scmp.eq.s32.totalorder %s38, 1
      %p108 = por %p106, %p107
      %p110 = scmp.ne.s32.totalorder %s95, %s109
      %p111 = scmp.eq.s32.totalorder %s38, 0
      %p112 = por %p110, %p111
      %s114 = sadd.s32 %s113, 1
      %p117 = scmp.eq.s32.totalorder %s32, 1
      %p118 = scmp.ne.s32.totalorder %s113, %s115
      %p119 = scmp.eq.s32.totalorder %s32, 0
      %p120 = por %p118, %p119
      %p121 = scmp.ne.s32.totalorder %s113, %s115
      %p122 = scmp.eq.s32.totalorder %s37, 1
      %p123 = por %p121, %p122
      %p124 = scmp.ne.s32.totalorder %s115, %s116
      %p125 = scmp.eq.s32.totalorder %s37, 0
      %p126 = por %p124, %p125
      %p127 = scmp.ne.s32.totalorder %s115, %s116
      %p128 = scmp.eq.s32.totalorder %s38, 1
      %p129 = por %p127, %p128
      %p131 = scmp.ne.s32.totalorder %s116, %s130
      %p132 = scmp.eq.s32.totalorder %s38, 0
      %p133 = por %p131, %p132
      %s135 = sadd.s32 %s134, 1
      %p138 = scmp.eq.s32.totalorder %s32, 1
      %p139 = scmp.ne.s32.totalorder %s134, %s136
      %p140 = scmp.eq.s32.totalorder %s32, 0
      %p141 = por %p139, %p140
      %p142 = scmp.ne.s32.totalorder %s134, %s136
      %p143 = scmp.eq.s32.totalorder %s37, 1
      %p144 = por %p142, %p143
      %p145 = scmp.ne.s32.totalorder %s136, %s137
      %p146 = scmp.eq.s32.totalorder %s37, 0
      %p147 = por %p145, %p146
      %p148 = scmp.ne.s32.totalorder %s136, %s137
      %p149 = scmp.eq.s32.totalorder %s38, 1
      %p150 = por %p148, %p149
      %p152 = scmp.ne.s32.totalorder %s137, %s151
      %p153 = scmp.eq.s32.totalorder %s38, 0
      %p154 = por %p152, %p153
      %s156 = sadd.s32 %s155, 1
      %p159 = scmp.eq.s32.totalorder %s32, 1
      %p160 = scmp.ne.s32.totalorder %s155, %s157
      %p161 = scmp.eq.s32.totalorder %s32, 0
      %p162 = por %p160, %p161
      %p163 = scmp.ne.s32.totalorder %s155, %s157
      %p164 = scmp.eq.s32.totalorder %s37, 1
      %p165 = por %p163, %p164
      %p166 = scmp.ne.s32.totalorder %s157, %s158
      %p167 = scmp.eq.s32.totalorder %s37, 0
      %p168 = por %p166, %p167
      %p169 = scmp.ne.s32.totalorder %s157, %s158
      %p170 = scmp.eq.s32.totalorder %s38, 1
      %p171 = por %p169, %p170
      %p173 = scmp.ne.s32.totalorder %s158, %s172
      %p174 = scmp.eq.s32.totalorder %s38, 0
      %p175 = por %p173, %p174
      %s177 = sadd.s32 %s176, 1
      %p180 = scmp.eq.s32.totalorder %s32, 1
      %p181 = scmp.ne.s32.totalorder %s176, %s178
      %p182 = scmp.eq.s32.totalorder %s32, 0
      %p183 = por %p181, %p182
      %p184 = scmp.ne.s32.totalorder %s176, %s178
      %p185 = scmp.eq.s32.totalorder %s37, 1
      %p186 = por %p184, %p185
      %p187 = scmp.ne.s32.totalorder %s178, %s179
      %p188 = scmp.eq.s32.totalorder %s37, 0
      %p189 = por %p187, %p188
      %p190 = scmp.ne.s32.totalorder %s178, %s179
      %p191 = scmp.eq.s32.totalorder %s38, 1
      %p192 = por %p190, %p191
      %p194 = scmp.ne.s32.totalorder %s179, %s193
      %p195 = scmp.eq.s32.totalorder %s38, 0
      %p196 = por %p194, %p195
      %s198 = sadd.s32 %s197, 1
      %p201 = scmp.eq.s32.totalorder %s32, 1
      %p202 = scmp.ne.s32.totalorder %s197, %s199
      %p203 = scmp.eq.s32.totalorder %s32, 0
      %p204 = por %p202, %p203
      %p205 = scmp.ne.s32.totalorder %s197, %s199
      %p206 = scmp.eq.s32.totalorder %s37, 1
      %p207 = por %p205, %p206
      %p208 = scmp.ne.s32.totalorder %s199, %s200
      %p209 = scmp.eq.s32.totalorder %s37, 0
      %p210 = por %p208, %p209
      %p211 = scmp.ne.s32.totalorder %s199, %s200
      %p212 = scmp.eq.s32.totalorder %s38, 1
      %p213 = por %p211, %p212
      %p215 = scmp.ne.s32.totalorder %s200, %s214
      %p216 = scmp.eq.s32.totalorder %s38, 0
      %p217 = por %p215, %p216
      %s219 = sadd.s32 %s218, 1
      %p222 = scmp.eq.s32.totalorder %s32, 1
      %p223 = scmp.ne.s32.totalorder %s218, %s220
      %p224 = scmp.eq.s32.totalorder %s32, 0
      %p225 = por %p223, %p224
      %p226 = scmp.ne.s32.totalorder %s218, %s220
      %p227 = scmp.eq.s32.totalorder %s37, 1
      %p228 = por %p226, %p227
      %p229 = scmp.ne.s32.totalorder %s220, %s221
      %p230 = scmp.eq.s32.totalorder %s37, 0
      %p231 = por %p229, %p230
      %p232 = scmp.ne.s32.totalorder %s220, %s221
      %p233 = scmp.eq.s32.totalorder %s38, 1
      %p234 = por %p232, %p233
      %p236 = scmp.ne.s32.totalorder %s221, %s235
      %p237 = scmp.eq.s32.totalorder %s38, 0
      %p238 = por %p236, %p237
      %s240 = sadd.s32 %s239, 1
      %p243 = scmp.eq.s32.totalorder %s32, 1
      %p244 = scmp.ne.s32.totalorder %s239, %s241
      %p245 = scmp.eq.s32.totalorder %s32, 0
      %p246 = por %p244, %p245
      %p247 = scmp.ne.s32.totalorder %s239, %s241
      %p248 = scmp.eq.s32.totalorder %s37, 1
      %p249 = por %p247, %p248
      %p250 = scmp.ne.s32.totalorder %s241, %s242
      %p251 = scmp.eq.s32.totalorder %s37, 0
      %p252 = por %p250, %p251
      %p253 = scmp.ne.s32.totalorder %s241, %s242
      %p254 = scmp.eq.s32.totalorder %s38, 1
      %p255 = por %p253, %p254
      %p257 = scmp.ne.s32.totalorder %s242, %s256
      %p258 = scmp.eq.s32.totalorder %s38, 0
      %p259 = por %p257, %p258
      %s261 = sadd.s32 %s260, 1
      %p264 = scmp.eq.s32.totalorder %s32, 1
      %p265 = scmp.ne.s32.totalorder %s260, %s262
      %p266 = scmp.eq.s32.totalorder %s32, 0
      %p267 = por %p265, %p266
      %p268 = scmp.ne.s32.totalorder %s260, %s262
      %p269 = scmp.eq.s32.totalorder %s37, 1
      %p270 = por %p268, %p269
      %p271 = scmp.ne.s32.totalorder %s262, %s263
      %p272 = scmp.eq.s32.totalorder %s37, 0
      %p273 = por %p271, %p272
      %p274 = scmp.ne.s32.totalorder %s262, %s263
      %p275 = scmp.eq.s32.totalorder %s38, 1
      %p276 = por %p274, %p275
      %p278 = scmp.ne.s32.totalorder %s263, %s277
      %p279 = scmp.eq.s32.totalorder %s38, 0
      %p280 = por %p278, %p279
      %s282 = sadd.s32 %s281, 1
      %p285 = scmp.eq.s32.totalorder %s32, 1
      %p286 = scmp.ne.s32.totalorder %s281, %s283
      %p287 = scmp.eq.s32.totalorder %s32, 0
      %p288 = por %p286, %p287
      %p289 = scmp.ne.s32.totalorder %s281, %s283
      %p290 = scmp.eq.s32.totalorder %s37, 1
      %p291 = por %p289, %p290
      %p292 = scmp.ne.s32.totalorder %s283, %s284
      %p293 = scmp.eq.s32.totalorder %s37, 0
      %p294 = por %p292, %p293
      %p295 = scmp.ne.s32.totalorder %s283, %s284
      %p296 = scmp.eq.s32.totalorder %s38, 1
      %p297 = por %p295, %p296
      %p299 = scmp.ne.s32.totalorder %s284, %s298
      %p300 = scmp.eq.s32.totalorder %s38, 0
      %p301 = por %p299, %p300
      %s303 = sadd.s32 %s302, 1
      %p306 = scmp.eq.s32.totalorder %s32, 1
      %p307 = scmp.ne.s32.totalorder %s302, %s304
      %p308 = scmp.eq.s32.totalorder %s32, 0
      %p309 = por %p307, %p308
      %p310 = scmp.ne.s32.totalorder %s302, %s304
      %p311 = scmp.eq.s32.totalorder %s37, 1
      %p312 = por %p310, %p311
      %p313 = scmp.ne.s32.totalorder %s304, %s305
      %p314 = scmp.eq.s32.totalorder %s37, 0
      %p315 = por %p313, %p314
      %p316 = scmp.ne.s32.totalorder %s304, %s305
      %p317 = scmp.eq.s32.totalorder %s38, 1
      %p318 = por %p316, %p317
      %p320 = scmp.ne.s32.totalorder %s305, %s319
      %p321 = scmp.eq.s32.totalorder %s38, 0
      %p322 = por %p320, %p321
      %s324 = sadd.s32 %s323, 1
      %p327 = scmp.eq.s32.totalorder %s32, 1
      %p328 = scmp.ne.s32.totalorder %s323, %s325
      %p329 = scmp.eq.s32.totalorder %s32, 0
      %p330 = por %p328, %p329
      %p331 = scmp.ne.s32.totalorder %s323, %s325
      %p332 = scmp.eq.s32.totalorder %s37, 1
      %p333 = por %p331, %p332
      %p334 = scmp.ne.s32.totalorder %s325, %s326
      %p335 = scmp.eq.s32.totalorder %s37, 0
      %p336 = por %p334, %p335
      %p337 = scmp.ne.s32.totalorder %s325, %s326
      %p338 = scmp.eq.s32.totalorder %s38, 1
      %p339 = por %p337, %p338
      %p341 = scmp.ne.s32.totalorder %s326, %s340
      %p342 = scmp.eq.s32.totalorder %s38, 0
      %p343 = por %p341, %p342
      %s345 = sadd.s32 %s344, 1
      %p348 = scmp.eq.s32.totalorder %s32, 1
      %p349 = scmp.ne.s32.totalorder %s344, %s346
      %p350 = scmp.eq.s32.totalorder %s32, 0
      %p351 = por %p349, %p350
      %p352 = scmp.ne.s32.totalorder %s344, %s346
      %p353 = scmp.eq.s32.totalorder %s37, 1
      %p354 = por %p352, %p353
      %p355 = scmp.ne.s32.totalorder %s346, %s347
      %p356 = scmp.eq.s32.totalorder %s37, 0
      %p357 = por %p355, %p356
      %p358 = scmp.ne.s32.totalorder %s346, %s347
      %p359 = scmp.eq.s32.totalorder %s38, 1
      %p360 = por %p358, %p359
      %p362 = scmp.ne.s32.totalorder %s347, %s361
      %p363 = scmp.eq.s32.totalorder %s38, 0
      %p364 = por %p362, %p363
      %s366 = sadd.s32 %s365, 1
      %p369 = scmp.eq.s32.totalorder %s32, 1
      %p370 = scmp.ne.s32.totalorder %s365, %s367
      %p371 = scmp.eq.s32.totalorder %s32, 0
      %p372 = por %p370, %p371
      %p373 = scmp.ne.s32.totalorder %s365, %s367
      %p374 = scmp.eq.s32.totalorder %s37, 1
      %p375 = por %p373, %p374
      %p376 = scmp.ne.s32.totalorder %s367, %s368
      %p377 = scmp.eq.s32.totalorder %s37, 0
      %p378 = por %p376, %p377
      %p379 = scmp.ne.s32.totalorder %s367, %s368
      %p380 = scmp.eq.s32.totalorder %s38, 1
      %p381 = por %p379, %p380
      %p383 = scmp.ne.s32.totalorder %s368, %s382
      %p384 = scmp.eq.s32.totalorder %s38, 0
      %p385 = por %p383, %p384
      %s387 = sadd.s32 %s386, 1
      %p390 = scmp.eq.s32.totalorder %s32, 1
      %p391 = scmp.ne.s32.totalorder %s386, %s388
      %p392 = scmp.eq.s32.totalorder %s32, 0
      %p393 = por %p391, %p392
      %p394 = scmp.ne.s32.totalorder %s386, %s388
      %p395 = scmp.eq.s32.totalorder %s37, 1
      %p396 = por %p394, %p395
      %p397 = scmp.ne.s32.totalorder %s388, %s389
      %p398 = scmp.eq.s32.totalorder %s37, 0
      %p399 = por %p397, %p398
      %p400 = scmp.ne.s32.totalorder %s388, %s389
      %p401 = scmp.eq.s32.totalorder %s38, 1
      %p402 = por %p400, %p401
      %p404 = scmp.ne.s32.totalorder %s389, %s403
      %p405 = scmp.eq.s32.totalorder %s38, 0
      %p406 = por %p404, %p405
      %s408 = sadd.s32 %s407, 1
      %p411 = scmp.eq.s32.totalorder %s32, 1
      %p412 = scmp.ne.s32.totalorder %s407, %s409
      %p413 = scmp.eq.s32.totalorder %s32, 0
      %p414 = por %p412, %p413
      %p415 = scmp.ne.s32.totalorder %s407, %s409
      %p416 = scmp.eq.s32.totalorder %s37, 1
      %p417 = por %p415, %p416
      %p418 = scmp.ne.s32.totalorder %s409, %s410
      %p419 = scmp.eq.s32.totalorder %s37, 0
      %p420 = por %p418, %p419
      %p421 = scmp.ne.s32.totalorder %s409, %s410
      %p422 = scmp.eq.s32.totalorder %s38, 1
      %p423 = por %p421, %p422
      %p425 = scmp.ne.s32.totalorder %s410, %s424
      %p426 = scmp.eq.s32.totalorder %s38, 0
      %p427 = por %p425, %p426
      %s429 = sadd.s32 %s428, 1
      %p432 = scmp.eq.s32.totalorder %s32, 1
      %p433 = scmp.ne.s32.totalorder %s428, %s430
      %p434 = scmp.eq.s32.totalorder %s32, 0
      %p435 = por %p433, %p434
      %p436 = scmp.ne.s32.totalorder %s428, %s430
      %p437 = scmp.eq.s32.totalorder %s37, 1
      %p438 = por %p436, %p437
      %p439 = scmp.ne.s32.totalorder %s430, %s431
      %p440 = scmp.eq.s32.totalorder %s37, 0
      %p441 = por %p439, %p440
      %p442 = scmp.ne.s32.totalorder %s430, %s431
      %p443 = scmp.eq.s32.totalorder %s38, 1
      %p444 = por %p442, %p443
      %p446 = scmp.ne.s32.totalorder %s431, %s445
      %p447 = scmp.eq.s32.totalorder %s38, 0
      %p448 = por %p446, %p447
      %s450 = sadd.s32 %s449, 1
      %p453 = scmp.eq.s32.totalorder %s32, 1
      %p454 = scmp.ne.s32.totalorder %s449, %s451
      %p455 = scmp.eq.s32.totalorder %s32, 0
      %p456 = por %p454, %p455
      %p457 = scmp.ne.s32.totalorder %s449, %s451
      %p458 = scmp.eq.s32.totalorder %s37, 1
      %p459 = por %p457, %p458
      %p460 = scmp.ne.s32.totalorder %s451, %s452
      %p461 = scmp.eq.s32.totalorder %s37, 0
      %p462 = por %p460, %p461
      %p463 = scmp.ne.s32.totalorder %s451, %s452
      %p464 = scmp.eq.s32.totalorder %s38, 1
      %p465 = por %p463, %p464
      %p467 = scmp.ne.s32.totalorder %s452, %s466
      %p468 = scmp.eq.s32.totalorder %s38, 0
      %p469 = por %p467, %p468
      %s471 = sadd.s32 %s470, 1
      %p474 = scmp.eq.s32.totalorder %s32, 1
      %p475 = scmp.ne.s32.totalorder %s470, %s472
      %p476 = scmp.eq.s32.totalorder %s32, 0
      %p477 = por %p475, %p476
      %p478 = scmp.ne.s32.totalorder %s470, %s472
      %p479 = scmp.eq.s32.totalorder %s37, 1
      %p480 = por %p478, %p479
      %p481 = scmp.ne.s32.totalorder %s472, %s473
      %p482 = scmp.eq.s32.totalorder %s37, 0
      %p483 = por %p481, %p482
      %p484 = scmp.ne.s32.totalorder %s472, %s473
      %p485 = scmp.eq.s32.totalorder %s38, 1
      %p486 = por %p484, %p485
      %p488 = scmp.ne.s32.totalorder %s473, %s487
      %p489 = scmp.eq.s32.totalorder %s38, 0
      %p490 = por %p488, %p489
      %s492 = sadd.s32 %s491, 1
      %p495 = scmp.eq.s32.totalorder %s32, 1
      %p496 = scmp.ne.s32.totalorder %s491, %s493
      %p497 = scmp.eq.s32.totalorder %s32, 0
      %p498 = por %p496, %p497
      %p499 = scmp.ne.s32.totalorder %s491, %s493
      %p500 = scmp.eq.s32.totalorder %s37, 1
      %p501 = por %p499, %p500
      %p502 = scmp.ne.s32.totalorder %s493, %s494
      %p503 = scmp.eq.s32.totalorder %s37, 0
      %p504 = por %p502, %p503
      %p505 = scmp.ne.s32.totalorder %s493, %s494
      %p506 = scmp.eq.s32.totalorder %s38, 1
      %p507 = por %p505, %p506
      %p509 = scmp.ne.s32.totalorder %s494, %s508
      %p510 = scmp.eq.s32.totalorder %s38, 0
      %p511 = por %p509, %p510
      %s513 = sadd.s32 %s512, 1
      %p516 = scmp.eq.s32.totalorder %s32, 1
      %p517 = scmp.ne.s32.totalorder %s512, %s514
      %p518 = scmp.eq.s32.totalorder %s32, 0
      %p519 = por %p517, %p518
      %p520 = scmp.ne.s32.totalorder %s512, %s514
      %p521 = scmp.eq.s32.totalorder %s37, 1
      %p522 = por %p520, %p521
      %p523 = scmp.ne.s32.totalorder %s514, %s515
      %p524 = scmp.eq.s32.totalorder %s37, 0
      %p525 = por %p523, %p524
      %p526 = scmp.ne.s32.totalorder %s514, %s515
      %p527 = scmp.eq.s32.totalorder %s38, 1
      %p528 = por %p526, %p527
      %p530 = scmp.ne.s32.totalorder %s515, %s529
      %p531 = scmp.eq.s32.totalorder %s38, 0
      %p532 = por %p530, %p531
      %s533 = ssub.s32 %s32, %s39
      %p534 = scmp.eq.s32.totalorder %s533, 0
      %s536 = sadd.s32 %s535, 1
      %s537 = scalar_select %p534, %s535, %s536
      %p540 = pneg %p534
      %p541 = scmp.eq.s32.totalorder %s32, 1
      %p542 = por %p540, %p541
      %p543 = scmp.ne.s32.totalorder %s535, %s538
      %p544 = scmp.eq.s32.totalorder %s32, 0
      %p545 = por %p543, %p544
      %p546 = scmp.ne.s32.totalorder %s535, %s538
      %p547 = scmp.eq.s32.totalorder %s37, 1
      %p548 = por %p546, %p547
      %p549 = scmp.ne.s32.totalorder %s538, %s539
      %p550 = scmp.eq.s32.totalorder %s37, 0
      %p551 = por %p549, %p550
      %p552 = scmp.ne.s32.totalorder %s538, %s539
      %p553 = scmp.eq.s32.totalorder %s38, 1
      %p554 = por %p552, %p553
      %p556 = scmp.ne.s32.totalorder %s539, %s555
      %p557 = scmp.eq.s32.totalorder %s38, 0
      %p558 = por %p556, %p557
      %p559 = scmp.le.s32.totalorder 1, %s32
      %p560 = scmp.lt.s32.totalorder %s32, 3
      %p561 = pnand %p559, %p560
      %p562 = pneg %p561
      // Predicated region
      $region9: #{tpu_custom_call.1} parent=5 // pred_check
        _
      $region10: #{tpu_custom_call.1} parent=5 // pred_check_branch
        %564 = sbr.rel (%p561) target = $region12
      $region11: #{tpu_custom_call.1} parent=5 // pred_region
        %s565 = ssub.s32 %s32, 1
        // Predicated region
        $region13: #{tpu_custom_call.1} parent=11 // pred_check
          %p566 = pneg %p105
        $region14: #{tpu_custom_call.1} parent=11 // pred_check_branch
          %568 = sbr.rel (%p566) target = $region16
        $region15: #{tpu_custom_call.1} parent=11 // pred_region
          _
        $region16: #{tpu_custom_call.1} parent=11 // pred_fallthru
          _
        // Predicated region
        $region17: #{tpu_custom_call.1} parent=11 // pred_check
          %p569 = pneg %p126
        $region18: #{tpu_custom_call.1} parent=11 // pred_check_branch
          %571 = sbr.rel (%p569) target = $region20
        $region19: #{tpu_custom_call.1} parent=11 // pred_region
          _
        $region20: #{tpu_custom_call.1} parent=11 // pred_fallthru
          _
        // Predicated region
        $region21: #{tpu_custom_call.1} parent=11 // pred_check
          %p572 = pneg %p147
        $region22: #{tpu_custom_call.1} parent=11 // pred_check_branch
          %574 = sbr.rel (%p572) target = $region24
        $region23: #{tpu_custom_call.1} parent=11 // pred_region
          _
        $region24: #{tpu_custom_call.1} parent=11 // pred_fallthru
          _
        // Predicated region
        $region25: #{tpu_custom_call.1} parent=11 // pred_check
          %p575 = pneg %p168
        $region26: #{tpu_custom_call.1} parent=11 // pred_check_branch
          %577 = sbr.rel (%p575) target = $region28
        $region27: #{tpu_custom_call.1} parent=11 // pred_region
          _
        $region28: #{tpu_custom_call.1} parent=11 // pred_fallthru
          _
        // Predicated region
        $region29: #{tpu_custom_call.1} parent=11 // pred_check
          %p578 = pneg %p189
        $region30: #{tpu_custom_call.1} parent=11 // pred_check_branch
          %580 = sbr.rel (%p578) target = $region32
        $region31: #{tpu_custom_call.1} parent=11 // pred_region
          _
        $region32: #{tpu_custom_call.1} parent=11 // pred_fallthru
          _
        // Predicated region
        $region33: #{tpu_custom_call.1} parent=11 // pred_check
          %p581 = pneg %p210
        $region34: #{tpu_custom_call.1} parent=11 // pred_check_branch
          %583 = sbr.rel (%p581) target = $region36
        $region35: #{tpu_custom_call.1} parent=11 // pred_region
          _
        $region36: #{tpu_custom_call.1} parent=11 // pred_fallthru
          _
        // Predicated region
        $region37: #{tpu_custom_call.1} parent=11 // pred_check
          %p584 = pneg %p231
        $region38: #{tpu_custom_call.1} parent=11 // pred_check_branch
          %586 = sbr.rel (%p584) target = $region40
        $region39: #{tpu_custom_call.1} parent=11 // pred_region
          _
        $region40: #{tpu_custom_call.1} parent=11 // pred_fallthru
          _
        // Predicated region
        $region41: #{tpu_custom_call.1} parent=11 // pred_check
          %p587 = pneg %p252
        $region42: #{tpu_custom_call.1} parent=11 // pred_check_branch
          %589 = sbr.rel (%p587) target = $region44
        $region43: #{tpu_custom_call.1} parent=11 // pred_region
          _
        $region44: #{tpu_custom_call.1} parent=11 // pred_fallthru
          _
        // Predicated region
        $region45: #{tpu_custom_call.1} parent=11 // pred_check
          %p590 = pneg %p273
        $region46: #{tpu_custom_call.1} parent=11 // pred_check_branch
          %592 = sbr.rel (%p590) target = $region48
        $region47: #{tpu_custom_call.1} parent=11 // pred_region
          _
        $region48: #{tpu_custom_call.1} parent=11 // pred_fallthru
          _
        // Predicated region
        $region49: #{tpu_custom_call.1} parent=11 // pred_check
          %p593 = pneg %p294
        $region50: #{tpu_custom_call.1} parent=11 // pred_check_branch
          %595 = sbr.rel (%p593) target = $region52
        $region51: #{tpu_custom_call.1} parent=11 // pred_region
          _
        $region52: #{tpu_custom_call.1} parent=11 // pred_fallthru
          _
        // Predicated region
        $region53: #{tpu_custom_call.1} parent=11 // pred_check
          %p596 = pneg %p315
        $region54: #{tpu_custom_call.1} parent=11 // pred_check_branch
          %598 = sbr.rel (%p596) target = $region56
        $region55: #{tpu_custom_call.1} parent=11 // pred_region
          _
        $region56: #{tpu_custom_call.1} parent=11 // pred_fallthru
          _
        // Predicated region
        $region57: #{tpu_custom_call.1} parent=11 // pred_check
          %p599 = pneg %p336
        $region58: #{tpu_custom_call.1} parent=11 // pred_check_branch
          %601 = sbr.rel (%p599) target = $region60
        $region59: #{tpu_custom_call.1} parent=11 // pred_region
          _
        $region60: #{tpu_custom_call.1} parent=11 // pred_fallthru
          _
        // Predicated region
        $region61: #{tpu_custom_call.1} parent=11 // pred_check
          %p602 = pneg %p357
        $region62: #{tpu_custom_call.1} parent=11 // pred_check_branch
          %604 = sbr.rel (%p602) target = $region64
        $region63: #{tpu_custom_call.1} parent=11 // pred_region
          _
        $region64: #{tpu_custom_call.1} parent=11 // pred_fallthru
          _
        // Predicated region
        $region65: #{tpu_custom_call.1} parent=11 // pred_check
          %p605 = pneg %p378
        $region66: #{tpu_custom_call.1} parent=11 // pred_check_branch
          %607 = sbr.rel (%p605) target = $region68
        $region67: #{tpu_custom_call.1} parent=11 // pred_region
          _
        $region68: #{tpu_custom_call.1} parent=11 // pred_fallthru
          _
        // Predicated region
        $region69: #{tpu_custom_call.1} parent=11 // pred_check
          %p608 = pneg %p399
        $region70: #{tpu_custom_call.1} parent=11 // pred_check_branch
          %610 = sbr.rel (%p608) target = $region72
        $region71: #{tpu_custom_call.1} parent=11 // pred_region
          _
        $region72: #{tpu_custom_call.1} parent=11 // pred_fallthru
          _
        // Predicated region
        $region73: #{tpu_custom_call.1} parent=11 // pred_check
          %p611 = pneg %p420
        $region74: #{tpu_custom_call.1} parent=11 // pred_check_branch
          %613 = sbr.rel (%p611) target = $region76
        $region75: #{tpu_custom_call.1} parent=11 // pred_region
          _
        $region76: #{tpu_custom_call.1} parent=11 // pred_fallthru
          _
        // Predicated region
        $region77: #{tpu_custom_call.1} parent=11 // pred_check
          %p614 = pneg %p441
        $region78: #{tpu_custom_call.1} parent=11 // pred_check_branch
          %616 = sbr.rel (%p614) target = $region80
        $region79: #{tpu_custom_call.1} parent=11 // pred_region
          _
        $region80: #{tpu_custom_call.1} parent=11 // pred_fallthru
          _
        // Predicated region
        $region81: #{tpu_custom_call.1} parent=11 // pred_check
          %p617 = pneg %p462
        $region82: #{tpu_custom_call.1} parent=11 // pred_check_branch
          %619 = sbr.rel (%p617) target = $region84
        $region83: #{tpu_custom_call.1} parent=11 // pred_region
          _
        $region84: #{tpu_custom_call.1} parent=11 // pred_fallthru
          _
        // Predicated region
        $region85: #{tpu_custom_call.1} parent=11 // pred_check
          %p620 = pneg %p483
        $region86: #{tpu_custom_call.1} parent=11 // pred_check_branch
          %622 = sbr.rel (%p620) target = $region88
        $region87: #{tpu_custom_call.1} parent=11 // pred_region
          _
        $region88: #{tpu_custom_call.1} parent=11 // pred_fallthru
          _
        // Predicated region
        $region89: #{tpu_custom_call.1} parent=11 // pred_check
          %p623 = pneg %p504
        $region90: #{tpu_custom_call.1} parent=11 // pred_check_branch
          %625 = sbr.rel (%p623) target = $region92
        $region91: #{tpu_custom_call.1} parent=11 // pred_region
          _
        $region92: #{tpu_custom_call.1} parent=11 // pred_fallthru
          _
        // Predicated region
        $region93: #{tpu_custom_call.1} parent=11 // pred_check
          %p626 = pneg %p525
        $region94: #{tpu_custom_call.1} parent=11 // pred_check_branch
          %628 = sbr.rel (%p626) target = $region96
        $region95: #{tpu_custom_call.1} parent=11 // pred_region
          _
        $region96: #{tpu_custom_call.1} parent=11 // pred_fallthru
          _
      $region12: #{tpu_custom_call.1} parent=5 // pred_fallthru
        _
      %p629 = scmp.lt.s32.totalorder %s32, 2
      // Predicated region
      $region97: #{tpu_custom_call.1} parent=5 // pred_check
        %p630 = pneg %p629
      $region98: #{tpu_custom_call.1} parent=5 // pred_check_branch
        %632 = sbr.rel (%p630) target = $region100
      $region99: #{tpu_custom_call.1} parent=5 // pred_region
        // Predicated region
        $region101: #{tpu_custom_call.1} parent=99 // pred_check
          %p633 = pneg %p52
        $region102: #{tpu_custom_call.1} parent=99 // pred_check_branch
          %635 = sbr.rel (%p633) target = $region104
        $region103: #{tpu_custom_call.1} parent=99 // pred_region
          %p636 = scmp.lt.s32.totalorder %s32, 1
          %s637 = scalar_select %p636, %s32, 1
          %s638 = smul.addr %s637, 8
          %s639 = scalar_lea.vmem %s0, %s638
        $region104: #{tpu_custom_call.1} parent=99 // pred_fallthru
          _
        // Predicated region
        $region105: #{tpu_custom_call.1} parent=99 // pred_check
          %p640 = pneg %p78
        $region106: #{tpu_custom_call.1} parent=99 // pred_check_branch
          %642 = sbr.rel (%p640) target = $region108
        $region107: #{tpu_custom_call.1} parent=99 // pred_region
          %p643 = scmp.lt.s32.totalorder %s32, 1
          %s644 = scalar_select %p643, %s32, 1
          %s645 = smul.addr %s644, 8
          %s646 = scalar_lea.vmem %s1, %s645
        $region108: #{tpu_custom_call.1} parent=99 // pred_fallthru
          _
      $region100: #{tpu_custom_call.1} parent=5 // pred_fallthru
        _
      %p647 = scmp.le.s32.totalorder 1, %s32
      %p648 = scmp.lt.s32.totalorder %s32, 3
      %p649 = pnand %p647, %p648
      %p650 = pneg %p649
      // Predicated region
      $region109: #{tpu_custom_call.1} parent=5 // pred_check
        _
      $region110: #{tpu_custom_call.1} parent=5 // pred_check_branch
        %652 = sbr.rel (%p649) target = $region112
      $region111: #{tpu_custom_call.1} parent=5 // pred_region
        %s653 = ssub.s32 %s32, 1
        %p654 = scmp.lt.s32.totalorder %s37, 1
        %s655 = scalar_select %p654, %s37, 1
        %s656 = smul.addr %s655, 8
        %s657 = scalar_lea.vmem %s0, %s656
        %p658 = pneg %p58
        %p659 = pneg %p55
        %p660 = scmp.lt.s32.totalorder %s37, 1
        %s661 = scalar_select %p660, %s37, 1
        %s662 = smul.addr %s661, 8
        %s663 = scalar_lea.vmem %s1, %s662
        %p664 = pneg %p84
        %p665 = pneg %p81
        %p666 = pneg %p105
        %p667 = pneg %p102
        %p668 = pneg %p126
        %p669 = pneg %p123
        %p670 = pneg %p147
        %p671 = pneg %p144
        %p672 = pneg %p168
        %p673 = pneg %p165
        %p674 = pneg %p189
        %p675 = pneg %p186
        %p676 = pneg %p210
        %p677 = pneg %p207
        %p678 = pneg %p231
        %p679 = pneg %p228
        %p680 = pneg %p252
        %p681 = pneg %p249
        %p682 = pneg %p273
        %p683 = pneg %p270
        %p684 = pneg %p294
        %p685 = pneg %p291
        %p686 = pneg %p315
        %p687 = pneg %p312
        %p688 = pneg %p336
        %p689 = pneg %p333
        %p690 = pneg %p357
        %p691 = pneg %p354
        %p692 = pneg %p378
        %p693 = pneg %p375
        %p694 = pneg %p399
        %p695 = pneg %p396
        %p696 = pneg %p420
        %p697 = pneg %p417
        %p698 = pneg %p441
        %p699 = pneg %p438
        %p700 = pneg %p462
        %p701 = pneg %p459
        %p702 = pneg %p483
        %p703 = pneg %p480
        %p704 = pneg %p504
        %p705 = pneg %p501
        %p706 = pneg %p525
        %p707 = pneg %p522
        %p708 = pneg %p551
        %p709 = pneg %p548
        %s710 = sand.u32 %s538, 1
        %s711 = scalar_lea.sflag [#allocation3], %s710
        %s712 = sand.u32 %s538, 1
        %s713 = smul.addr %s712, 8
        %s714 = scalar_lea.vmem [#allocation2], %s713
        %p715 = scmp.lt.s32.totalorder %s37, 1
        %s716 = scalar_select %p715, %s37, 1
        %s717 = smul.addr %s716, 8
        %s718 = scalar_lea.vmem %s0, %s717
        %p719 = scmp.lt.s32.totalorder %s37, 1
        %s720 = scalar_select %p719, %s37, 1
        %s721 = smul.addr %s720, 8
        %s722 = scalar_lea.vmem %s1, %s721
        %v724 = vld [vmem:[%s718] sm:$0xff]
        %v725 = vld [vmem:[%s722] sm:$0xff]
        %v726 = vpack.c.bf16 %v724, %v724
        %v727 = vld [vmem:[%s11] sm:$0xf]
        %v728 = vld [vmem:[%s11 + $0x4] sm:$0xf]
        %v729 = vld [vmem:[%s11 + $0x8] sm:$0xf]
        %v730 = vld [vmem:[%s11 + $0xc] sm:$0xf]
        %v735 = vunpack.c.l.b16 %v727
        %v736 = vunpack.c.l.b16 %v728
        %v737 = vunpack.c.l.b16 %v729
        %v738 = vunpack.c.l.b16 %v730
        %v739 = vpack.c.b16 %v736, %v735
        %v740 = vpack.c.b16 %v738, %v737
        %vm743 = vcmask 261120
        %v745 = vsel %vm743, %v726, 0
        %747 = vmatprep.subr.bf16.mxu0 0
        %748 = vmatpush1.bf16.msra.mxu0 0
        %749 = vmatprep.subr.bf16.mxu0 0
        %750 = vmatpush1.bf16.msra.mxu0 0
        %751 = vmatprep.subr.bf16.mxu0 0
        %752 = vmatpush1.bf16.msra.mxu0 0
        %753 = vmatprep.subr.bf16.mxu0 0
        %754 = vmatpush1.bf16.msra.mxu0 0
        %755 = vmatprep.subr.bf16.mxu0 0
        %756 = vmatpush1.bf16.msra.mxu0 0
        %757 = vmatprep.subr.bf16.mxu0 0
        %758 = vmatpush1.bf16.msra.mxu0 0
        %759 = vmatprep.subr.bf16.mxu0 0
        %760 = vmatpush1.bf16.msra.mxu0 %v740
        %761 = vmatprep.subr.bf16.mxu0 0
        %762 = vmatpush1.bf16.msra.mxu0 %v739
        %763 = vmatprep.subr.bf16.mxu0 0
        %764 = vmatpush2.bf16.msra.mxu0 0
        %765 = vmatprep.subr.bf16.mxu0 0
        %766 = vmatpush2.bf16.msra.mxu0 0
        %767 = vmatprep.subr.bf16.mxu0 0
        %768 = vmatpush2.bf16.msra.mxu0 0
        %769 = vmatprep.subr.bf16.mxu0 0
        %770 = vmatpush2.bf16.msra.mxu0 0
        %771 = vmatprep.subr.bf16.mxu0 0
        %772 = vmatpush2.bf16.msra.mxu0 0
        %773 = vmatprep.subr.bf16.mxu0 0
        %774 = vmatpush2.bf16.msra.mxu0 0
        %775 = vmatprep.subr.bf16.mxu0 0
        %776 = vmatpush2.bf16.msra.mxu0 0
        %777 = vmatprep.subr.bf16.mxu0 0
        %778 = vmatpush2.bf16.msra.mxu0 0
        %779 = vmatprep.mubr.bf16.mxu0 0
        %780 = vmatmul.mubr.bf16.gmra.mxu0 %v745
        %v781 = vpop.f32.mrf.mxu0
        %v782 = vadd.f32 0.0, %v781
        %v783 = vpop.f32.mrf.mxu0
        %v784 = vpop.f32.mrf.mxu0
        %v785 = vpop.f32.mrf.mxu0
        %786 = vdwg.mxu0
        %v787 = vpack.c.bf16 %v782, %v782
        %v788 = vld [vmem:[%s4] sm:$0xff]
        %v789 = vld [vmem:[%s4 + $0x8] sm:$0xff]
        %v790 = vld [vmem:[%s4 + $0x10] sm:$0xff]
        %v791 = vld [vmem:[%s4 + $0x18] sm:$0xff]
        %v792 = vld [vmem:[%s4 + $0x20] sm:$0xff]
        %v793 = vld [vmem:[%s4 + $0x28] sm:$0xff]
        %v794 = vld [vmem:[%s4 + $0x30] sm:$0xff]
        %vm795 = vcmask 64512
        %v797 = vsel %vm795, %v788, 0
        %v800 = vsel %vm795, %v789, 0
        %v803 = vsel %vm795, %v790, 0
        %v806 = vsel %vm795, %v791, 0
        %v809 = vsel %vm795, %v792, 0
        %v812 = vsel %vm795, %v793, 0
        %v815 = vsel %vm795, %v794, 0
        %817 = vmatprep.subr.mxu0 0.0
        %818 = vmatpush1.msra.mxu0 0.0
        %819 = vmatprep.subr.mxu0 0.0
        %820 = vmatpush1.msra.mxu0 0.0
        %821 = vmatprep.subr.mxu0 0.0
        %822 = vmatpush1.msra.mxu0 0.0
        %823 = vmatprep.subr.mxu0 0.0
        %824 = vmatpush1.msra.mxu0 0.0
        %825 = vmatprep.subr.mxu0 0.0
        %826 = vmatpush1.msra.mxu0 0.0
        %827 = vmatprep.subr.mxu0 0.0
        %828 = vmatpush1.msra.mxu0 0.0
        %829 = vmatprep.subr.mxu0 0.0
        %830 = vmatpush1.msra.mxu0 0.0
        %831 = vmatprep.subr.mxu0 0.0
        %832 = vmatpush1.msra.mxu0 0.0
        %833 = vmatprep.subr.mxu0 0.0
        %834 = vmatpush1.msra.mxu0 0.0
        %835 = vmatprep.subr.mxu0 0.0
        %836 = vmatpush1.msra.mxu0 0.0
        %837 = vmatprep.subr.mxu0 0.0
        %838 = vmatpush1.msra.mxu0 0.0
        %839 = vmatprep.subr.mxu0 0.0
        %840 = vmatpush1.msra.mxu0 0.0
        %841 = vmatprep.subr.mxu0 0.0
        %842 = vmatpush1.msra.mxu0 0.0
        %843 = vmatprep.subr.mxu0 0.0
        %844 = vmatpush1.msra.mxu0 0.0
        %845 = vmatprep.subr.mxu0 0.0
        %846 = vmatpush1.msra.mxu0 0.0
        %847 = vmatprep.subr.mxu0 0.0
        %848 = vmatpush1.msra.mxu0 %v725
        %849 = vmatprep.subr.mxu0 0.0
        %850 = vmatpush2.msra.mxu0 0.0
        %851 = vmatprep.subr.mxu0 0.0
        %852 = vmatpush2.msra.mxu0 0.0
        %853 = vmatprep.subr.mxu0 0.0
        %854 = vmatpush2.msra.mxu0 0.0
        %855 = vmatprep.subr.mxu0 0.0
        %856 = vmatpush2.msra.mxu0 0.0
        %857 = vmatprep.subr.mxu0 0.0
        %858 = vmatpush2.msra.mxu0 0.0
        %859 = vmatprep.subr.mxu0 0.0
        %860 = vmatpush2.msra.mxu0 0.0
        %861 = vmatprep.subr.mxu0 0.0
        %862 = vmatpush2.msra.mxu0 0.0
        %863 = vmatprep.subr.mxu0 0.0
        %864 = vmatpush2.msra.mxu0 0.0
        %865 = vmatprep.subr.mxu0 0.0
        %866 = vmatpush2.msra.mxu0 0.0
        %867 = vmatprep.subr.mxu0 0.0
        %868 = vmatpush2.msra.mxu0 0.0
        %869 = vmatprep.subr.mxu0 0.0
        %870 = vmatpush2.msra.mxu0 0.0
        %871 = vmatprep.subr.mxu0 0.0
        %872 = vmatpush2.msra.mxu0 0.0
        %873 = vmatprep.subr.mxu0 0.0
        %874 = vmatpush2.msra.mxu0 0.0
        %875 = vmatprep.subr.mxu0 0.0
        %876 = vmatpush2.msra.mxu0 0.0
        %877 = vmatprep.subr.mxu0 0.0
        %878 = vmatpush2.msra.mxu0 0.0
        %879 = vmatprep.subr.mxu0 0.0
        %880 = vmatpush2.msra.mxu0 0.0
        %881 = vmatprep.mubr.f32.mxu0 0.0
        %882 = vmatmul.mubr.f32.gmra.mxu0 %v797
        %v883 = vpop.f32.mrf.mxu0
        %v884 = vadd.f32 0.0, %v883
        %v885 = vpop.f32.mrf.mxu0
        %886 = vmatprep.mubr.f32.mxu0 0.0
        %887 = vmatmul.mubr.f32.gmra.mxu0 %v800
        %v888 = vpop.f32.mrf.mxu0
        %v889 = vadd.f32 0.0, %v888
        %v890 = vpop.f32.mrf.mxu0
        %891 = vmatprep.mubr.f32.mxu0 0.0
        %892 = vmatmul.mubr.f32.gmra.mxu0 %v803
        %v893 = vpop.f32.mrf.mxu0
        %v894 = vadd.f32 0.0, %v893
        %v895 = vpop.f32.mrf.mxu0
        %896 = vmatprep.mubr.f32.mxu0 0.0
        %897 = vmatmul.mubr.f32.gmra.mxu0 %v806
        %v898 = vpop.f32.mrf.mxu0
        %v899 = vadd.f32 0.0, %v898
        %v900 = vpop.f32.mrf.mxu0
        %901 = vmatprep.mubr.f32.mxu0 0.0
        %902 = vmatmul.mubr.f32.gmra.mxu0 %v809
        %v903 = vpop.f32.mrf.mxu0
        %v904 = vadd.f32 0.0, %v903
        %v905 = vpop.f32.mrf.mxu0
        %906 = vmatprep.mubr.f32.mxu0 0.0
        %907 = vmatmul.mubr.f32.gmra.mxu0 %v812
        %v908 = vpop.f32.mrf.mxu0
        %v909 = vadd.f32 0.0, %v908
        %v910 = vpop.f32.mrf.mxu0
        %911 = vmatprep.mubr.f32.mxu0 0.0
        %912 = vmatmul.mubr.f32.gmra.mxu0 %v815
        %v913 = vpop.f32.mrf.mxu0
        %v914 = vadd.f32 0.0, %v913
        %v915 = vpop.f32.mrf.mxu0
        %916 = vdwg.mxu0
        %v917 = vpack.c.bf16 %v889, %v884
        %v918 = vpack.c.bf16 %v899, %v894
        %v919 = vpack.c.bf16 %v909, %v904
        %v920 = vpack.c.bf16 %v914, %v914
        %v921 = vld [vmem:[%s8] sm:$0xf]
        %v922 = vld [vmem:[%s8 + $0x4] sm:$0x3]
        %v925 = vunpack.c.l.b16 %v921
        %v926 = vunpack.c.l.b16 %v922
        %v927 = vpack.c.b16 %v926, %v925
        %vm928 = vcmask 97280
        %v930 = vsel %vm928, %v917, 0
        %v933 = vsel %vm928, %v918, 0
        %v936 = vsel %vm928, %v919, 0
        %v939 = vsel %vm928, %v920, 0
        %vm941 = vcmask 1045504
        %v943 = vsel %vm941, %v927, 0
        %945 = vmatprep.subr.bf16.mxu0 0
        %946 = vmatpush1.bf16.msra.mxu0 0
        %947 = vmatprep.subr.bf16.mxu0 0
        %948 = vmatpush1.bf16.msra.mxu0 0
        %949 = vmatprep.subr.bf16.mxu0 0
        %950 = vmatpush1.bf16.msra.mxu0 0
        %951 = vmatprep.subr.bf16.mxu0 0
        %952 = vmatpush1.bf16.msra.mxu0 0
        %953 = vmatprep.subr.bf16.mxu0 0
        %954 = vmatpush1.bf16.msra.mxu0 0
        %955 = vmatprep.subr.bf16.mxu0 0
        %956 = vmatpush1.bf16.msra.mxu0 0
        %957 = vmatprep.subr.bf16.mxu0 0
        %958 = vmatpush1.bf16.msra.mxu0 0
        %959 = vmatprep.subr.bf16.mxu0 0
        %960 = vmatpush1.bf16.msra.mxu0 %v943
        %961 = vmatprep.subr.bf16.mxu0 0
        %962 = vmatpush2.bf16.msra.mxu0 0
        %963 = vmatprep.subr.bf16.mxu0 0
        %964 = vmatpush2.bf16.msra.mxu0 0
        %965 = vmatprep.subr.bf16.mxu0 0
        %966 = vmatpush2.bf16.msra.mxu0 0
        %967 = vmatprep.subr.bf16.mxu0 0
        %968 = vmatpush2.bf16.msra.mxu0 0
        %969 = vmatprep.subr.bf16.mxu0 0
        %970 = vmatpush2.bf16.msra.mxu0 0
        %971 = vmatprep.subr.bf16.mxu0 0
        %972 = vmatpush2.bf16.msra.mxu0 0
        %973 = vmatprep.subr.bf16.mxu0 0
        %974 = vmatpush2.bf16.msra.mxu0 0
        %975 = vmatprep.subr.bf16.mxu0 0
        %976 = vmatpush2.bf16.msra.mxu0 0
        %977 = vmatprep.mubr.bf16.mxu0 0
        %978 = vmatmul.mubr.bf16.gmra.mxu0 %v930
        %v979 = vpop.f32.mrf.mxu0
        %v980 = vadd.f32 0.0, %v979
        %v981 = vpop.f32.mrf.mxu0
        %v982 = vpop.f32.mrf.mxu0
        %v983 = vadd.f32 0.0, %v982
        %v984 = vpop.f32.mrf.mxu0
        %985 = vmatprep.mubr.bf16.mxu0 0
        %986 = vmatmul.mubr.bf16.gmra.mxu0 %v933
        %v987 = vpop.f32.mrf.mxu0
        %v988 = vadd.f32 0.0, %v987
        %v989 = vpop.f32.mrf.mxu0
        %v990 = vpop.f32.mrf.mxu0
        %v991 = vadd.f32 0.0, %v990
        %v992 = vpop.f32.mrf.mxu0
        %993 = vmatprep.mubr.bf16.mxu0 0
        %994 = vmatmul.mubr.bf16.gmra.mxu0 %v936
        %v995 = vpop.f32.mrf.mxu0
        %v996 = vadd.f32 0.0, %v995
        %v997 = vpop.f32.mrf.mxu0
        %v998 = vpop.f32.mrf.mxu0
        %v999 = vadd.f32 0.0, %v998
        %v1000 = vpop.f32.mrf.mxu0
        %1001 = vmatprep.mubr.bf16.mxu0 0
        %1002 = vmatmul.mubr.bf16.gmra.mxu0 %v939
        %v1003 = vpop.f32.mrf.mxu0
        %v1004 = vadd.f32 0.0, %v1003
        %v1005 = vpop.f32.mrf.mxu0
        %v1006 = vpop.f32.mrf.mxu0
        %v1007 = vpop.f32.mrf.mxu0
        %1008 = vdwg.mxu0
        %v1009 = vld [vmem:[%s9] sm:$0xf]
        %v1010 = vld [vmem:[%s9 + $0x4] sm:$0x3]
        %v1013 = vunpack.c.l.b16 %v1009
        %v1014 = vunpack.c.l.b16 %v1010
        %v1015 = vpack.c.b16 %v1014, %v1013
        %v1017 = vsel %vm941, %v1015, 0
        %1019 = vmatprep.subr.bf16.mxu0 0
        %1020 = vmatpush1.bf16.msra.mxu0 0
        %1021 = vmatprep.subr.bf16.mxu0 0
        %1022 = vmatpush1.bf16.msra.mxu0 0
        %1023 = vmatprep.subr.bf16.mxu0 0
        %1024 = vmatpush1.bf16.msra.mxu0 0
        %1025 = vmatprep.subr.bf16.mxu0 0
        %1026 = vmatpush1.bf16.msra.mxu0 0
        %1027 = vmatprep.subr.bf16.mxu0 0
        %1028 = vmatpush1.bf16.msra.mxu0 0
        %1029 = vmatprep.subr.bf16.mxu0 0
        %1030 = vmatpush1.bf16.msra.mxu0 0
        %1031 = vmatprep.subr.bf16.mxu0 0
        %1032 = vmatpush1.bf16.msra.mxu0 0
        %1033 = vmatprep.subr.bf16.mxu0 0
        %1034 = vmatpush1.bf16.msra.mxu0 %v1017
        %1035 = vmatprep.subr.bf16.mxu0 0
        %1036 = vmatpush2.bf16.msra.mxu0 0
        %1037 = vmatprep.subr.bf16.mxu0 0
        %1038 = vmatpush2.bf16.msra.mxu0 0
        %1039 = vmatprep.subr.bf16.mxu0 0
        %1040 = vmatpush2.bf16.msra.mxu0 0
        %1041 = vmatprep.subr.bf16.mxu0 0
        %1042 = vmatpush2.bf16.msra.mxu0 0
        %1043 = vmatprep.subr.bf16.mxu0 0
        %1044 = vmatpush2.bf16.msra.mxu0 0
        %1045 = vmatprep.subr.bf16.mxu0 0
        %1046 = vmatpush2.bf16.msra.mxu0 0
        %1047 = vmatprep.subr.bf16.mxu0 0
        %1048 = vmatpush2.bf16.msra.mxu0 0
        %1049 = vmatprep.subr.bf16.mxu0 0
        %1050 = vmatpush2.bf16.msra.mxu0 0
        %1051 = vmatprep.mubr.bf16.mxu0 0
        %1052 = vmatmul.mubr.bf16.gmra.mxu0 %v930
        %v1053 = vpop.f32.mrf.mxu0
        %v1054 = vadd.f32 0.0, %v1053
        %v1055 = vpop.f32.mrf.mxu0
        %v1056 = vpop.f32.mrf.mxu0
        %v1057 = vadd.f32 0.0, %v1056
        %v1058 = vpop.f32.mrf.mxu0
        %1059 = vmatprep.mubr.bf16.mxu0 0
        %1060 = vmatmul.mubr.bf16.gmra.mxu0 %v933
        %v1061 = vpop.f32.mrf.mxu0
        %v1062 = vadd.f32 0.0, %v1061
        %v1063 = vpop.f32.mrf.mxu0
        %v1064 = vpop.f32.mrf.mxu0
        %v1065 = vadd.f32 0.0, %v1064
        %v1066 = vpop.f32.mrf.mxu0
        %1067 = vmatprep.mubr.bf16.mxu0 0
        %1068 = vmatmul.mubr.bf16.gmra.mxu0 %v936
        %v1069 = vpop.f32.mrf.mxu0
        %v1070 = vadd.f32 0.0, %v1069
        %v1071 = vpop.f32.mrf.mxu0
        %v1072 = vpop.f32.mrf.mxu0
        %v1073 = vadd.f32 0.0, %v1072
        %v1074 = vpop.f32.mrf.mxu0
        %1075 = vmatprep.mubr.bf16.mxu0 0
        %1076 = vmatmul.mubr.bf16.gmra.mxu0 %v939
        %v1077 = vpop.f32.mrf.mxu0
        %v1078 = vadd.f32 0.0, %v1077
        %v1079 = vpop.f32.mrf.mxu0
        %v1080 = vpop.f32.mrf.mxu0
        %v1081 = vpop.f32.mrf.mxu0
        %1082 = vdwg.mxu0
        %v1083 = vmul.f32 %v980, %v1054
        %v1084 = vmul.f32 %v983, %v1057
        %v1085 = vmul.f32 %v988, %v1062
        %v1086 = vmul.f32 %v991, %v1065
        %v1087 = vmul.f32 %v996, %v1070
        %v1088 = vmul.f32 %v999, %v1073
        %v1089 = vmul.f32 %v1004, %v1078
        %v1090 = vpack.c.bf16 %v1084, %v1083
        %v1091 = vpack.c.bf16 %v1086, %v1085
        %v1092 = vpack.c.bf16 %v1088, %v1087
        %v1093 = vpack.c.bf16 %v1089, %v1089
        %v1094 = vld [vmem:[%s10] sm:$0xf]
        %v1095 = vld [vmem:[%s10 + $0x4] sm:$0xf]
        %v1096 = vld [vmem:[%s10 + $0x8] sm:$0xf]
        %v1097 = vld [vmem:[%s10 + $0xc] sm:$0xf]
        %v1098 = vld [vmem:[%s10 + $0x10] sm:$0xf]
        %v1099 = vld [vmem:[%s10 + $0x14] sm:$0xf]
        %v1106 = vunpack.c.l.b16 %v1094
        %v1107 = vunpack.c.l.b16 %v1095
        %v1108 = vunpack.c.l.b16 %v1096
        %v1109 = vunpack.c.l.b16 %v1097
        %v1110 = vunpack.c.l.b16 %v1098
        %v1111 = vunpack.c.l.b16 %v1099
        %v1112 = vpack.c.b16 %v1107, %v1106
        %v1113 = vpack.c.b16 %v1109, %v1108
        %v1114 = vpack.c.b16 %v1111, %v1110
        %vm1118 = vcmask 392192
        %v1120 = vsel %vm1118, %v1090, 0
        %v1123 = vsel %vm1118, %v1091, 0
        %v1126 = vsel %vm1118, %v1092, 0
        %v1129 = vsel %vm1118, %v1093, 0
        %1131 = vmatprep.subr.bf16.mxu0 0
        %1132 = vmatpush1.bf16.msra.mxu0 0
        %1133 = vmatprep.subr.bf16.mxu0 0
        %1134 = vmatpush1.bf16.msra.mxu0 0
        %1135 = vmatprep.subr.bf16.mxu0 0
        %1136 = vmatpush1.bf16.msra.mxu0 0
        %1137 = vmatprep.subr.bf16.mxu0 0
        %1138 = vmatpush1.bf16.msra.mxu0 0
        %1139 = vmatprep.subr.bf16.mxu0 0
        %1140 = vmatpush1.bf16.msra.mxu0 0
        %1141 = vmatprep.subr.bf16.mxu0 0
        %1142 = vmatpush1.bf16.msra.mxu0 %v1114
        %1143 = vmatprep.subr.bf16.mxu0 0
        %1144 = vmatpush1.bf16.msra.mxu0 %v1113
        %1145 = vmatprep.subr.bf16.mxu0 0
        %1146 = vmatpush1.bf16.msra.mxu0 %v1112
        %1147 = vmatprep.subr.bf16.mxu0 0
        %1148 = vmatpush2.bf16.msra.mxu0 0
        %1149 = vmatprep.subr.bf16.mxu0 0
        %1150 = vmatpush2.bf16.msra.mxu0 0
        %1151 = vmatprep.subr.bf16.mxu0 0
        %1152 = vmatpush2.bf16.msra.mxu0 0
        %1153 = vmatprep.subr.bf16.mxu0 0
        %1154 = vmatpush2.bf16.msra.mxu0 0
        %1155 = vmatprep.subr.bf16.mxu0 0
        %1156 = vmatpush2.bf16.msra.mxu0 0
        %1157 = vmatprep.subr.bf16.mxu0 0
        %1158 = vmatpush2.bf16.msra.mxu0 0
        %1159 = vmatprep.subr.bf16.mxu0 0
        %1160 = vmatpush2.bf16.msra.mxu0 0
        %1161 = vmatprep.subr.bf16.mxu0 0
        %1162 = vmatpush2.bf16.msra.mxu0 0
        %1163 = vmatprep.mubr.bf16.mxu0 0
        %1164 = vmatmul.mubr.bf16.gmra.mxu0 %v1120
        %v1165 = vpop.f32.mrf.mxu0
        %v1166 = vadd.f32 0.0, %v1165
        %v1167 = vpop.f32.mrf.mxu0
        %v1168 = vpop.f32.mrf.mxu0
        %v1169 = vadd.f32 0.0, %v1168
        %v1170 = vpop.f32.mrf.mxu0
        %1171 = vmatprep.mubr.bf16.mxu0 0
        %1172 = vmatmul.mubr.bf16.gmra.mxu0 %v1123
        %v1173 = vpop.f32.mrf.mxu0
        %v1174 = vadd.f32 0.0, %v1173
        %v1175 = vpop.f32.mrf.mxu0
        %v1176 = vpop.f32.mrf.mxu0
        %v1177 = vadd.f32 0.0, %v1176
        %v1178 = vpop.f32.mrf.mxu0
        %1179 = vmatprep.mubr.bf16.mxu0 0
        %1180 = vmatmul.mubr.bf16.gmra.mxu0 %v1126
        %v1181 = vpop.f32.mrf.mxu0
        %v1182 = vadd.f32 0.0, %v1181
        %v1183 = vpop.f32.mrf.mxu0
        %v1184 = vpop.f32.mrf.mxu0
        %v1185 = vadd.f32 0.0, %v1184
        %v1186 = vpop.f32.mrf.mxu0
        %1187 = vmatprep.mubr.bf16.mxu0 0
        %1188 = vmatmul.mubr.bf16.gmra.mxu0 %v1129
        %v1189 = vpop.f32.mrf.mxu0
        %v1190 = vadd.f32 0.0, %v1189
        %v1191 = vpop.f32.mrf.mxu0
        %v1192 = vpop.f32.mrf.mxu0
        %v1193 = vpop.f32.mrf.mxu0
        %1194 = vdwg.mxu0
        %v1195 = vmul.f32 %v1166, %v1166
        %v1196 = vmul.f32 %v1169, %v1169
        %v1197 = vmul.f32 %v1174, %v1174
        %v1198 = vmul.f32 %v1177, %v1177
        %v1199 = vmul.f32 %v1182, %v1182
        %v1200 = vmul.f32 %v1185, %v1185
        %v1201 = vmul.f32 %v1190, %v1190
        %vm1202 = vcmask 130048
        %v1203 = vsel %vm1202, %v1195, 0.0
        %1204 = vadd.xlane.f32.xlu0 %v1203
        %v1205 = vpop.xlane.xlu0 %1204
        %v1206 = vsel %vm1202, %v1196, 0.0
        %1207 = vadd.xlane.f32.xlu0 %v1206
        %v1208 = vpop.xlane.xlu0 %1207
        %v1209 = vsel %vm1202, %v1197, 0.0
        %1210 = vadd.xlane.f32.xlu0 %v1209
        %v1211 = vpop.xlane.xlu0 %1210
        %v1212 = vsel %vm1202, %v1198, 0.0
        %1213 = vadd.xlane.f32.xlu0 %v1212
        %v1214 = vpop.xlane.xlu0 %1213
        %v1215 = vsel %vm1202, %v1199, 0.0
        %1216 = vadd.xlane.f32.xlu0 %v1215
        %v1217 = vpop.xlane.xlu0 %1216
        %v1218 = vsel %vm1202, %v1200, 0.0
        %1219 = vadd.xlane.f32.xlu0 %v1218
        %v1220 = vpop.xlane.xlu0 %1219
        %v1221 = vsel %vm1202, %v1201, 0.0
        %1222 = vadd.xlane.f32.xlu0 %v1221
        %v1223 = vpop.xlane.xlu0 %1222
        %v1224 = vmax.f32 %v1205, 1e-24
        %v1225 = vmax.f32 %v1208, 1e-24
        %v1226 = vmax.f32 %v1211, 1e-24
        %v1227 = vmax.f32 %v1214, 1e-24
        %v1228 = vmax.f32 %v1217, 1e-24
        %v1229 = vmax.f32 %v1220, 1e-24
        %v1230 = vmax.f32 %v1223, 1e-24
        %v1231 = vrsqrt.pop %v1224
        %v1232 = vrsqrt.pop %v1225
        %v1233 = vrsqrt.pop %v1226
        %v1234 = vrsqrt.pop %v1227
        %v1235 = vrsqrt.pop %v1228
        %v1236 = vrsqrt.pop %v1229
        %v1237 = vrsqrt.pop %v1230
        %v1238 = vmul.f32 %v1166, %v1231
        %v1239 = vmul.f32 %v1169, %v1232
        %v1240 = vmul.f32 %v1174, %v1233
        %v1241 = vmul.f32 %v1177, %v1234
        %v1242 = vmul.f32 %v1182, %v1235
        %v1243 = vmul.f32 %v1185, %v1236
        %v1244 = vmul.f32 %v1190, %v1237
        %v1245 = vpack.c.bf16 %v1239, %v1238
        %v1246 = vpack.c.bf16 %v1241, %v1240
        %v1247 = vpack.c.bf16 %v1243, %v1242
        %v1248 = vpack.c.bf16 %v1244, %v1244
        %v1249 = vld [vmem:[%s7] sm:$0xf]
        %v1250 = vld [vmem:[%s7 + $0x4] sm:$0xf]
        %v1251 = vld [vmem:[%s7 + $0x8] sm:$0xf]
        %v1252 = vld [vmem:[%s7 + $0xc] sm:$0xf]
        %v1253 = vld [vmem:[%s7 + $0x10] sm:$0xf]
        %v1254 = vld [vmem:[%s7 + $0x14] sm:$0xf]
        %v1255 = vld [vmem:[%s7 + $0x18] sm:$0xf]
        %v1263 = vunpack.c.l.b16 %v1249
        %v1264 = vunpack.c.l.b16 %v1250
        %v1265 = vunpack.c.l.b16 %v1251
        %v1266 = vunpack.c.l.b16 %v1252
        %v1267 = vunpack.c.l.b16 %v1253
        %v1268 = vunpack.c.l.b16 %v1254
        %v1269 = vunpack.c.l.b16 %v1255
        %v1270 = vpack.c.b16 %v1264, %v1263
        %v1271 = vpack.c.b16 %v1266, %v1265
        %v1272 = vpack.c.b16 %v1268, %v1267
        %v1273 = vpack.c.b16 %v1269, %v1269
        %1274 = vrot.lane.b32.xlu0 %v1270, 16
        %v1275 = vpop.permute.xlu0 %1274
        %1276 = vrot.lane.b32.xlu0 %v1271, 16
        %v1277 = vpop.permute.xlu0 %1276
        %1278 = vrot.lane.b32.xlu0 %v1272, 16
        %v1279 = vpop.permute.xlu0 %1278
        %1280 = vrot.lane.b32.xlu0 %v1273, 16
        %v1281 = vpop.permute.xlu0 %1280
        %v1284 = vsel %vm1202, %v1245, %v1275
        %v1287 = vsel %vm1202, %v1246, %v1277
        %v1290 = vsel %vm1202, %v1247, %v1279
        %v1293 = vsel %vm1202, %v1248, %v1281
        %v1294 = vld [vmem:[%s2] sm:$0xf]
        %v1295 = vld [vmem:[%s2 + $0x4] sm:$0xf]
        %v1296 = vld [vmem:[%s2 + $0x8] sm:$0xf]
        %v1297 = vld [vmem:[%s2 + $0xc] sm:$0xf]
        %v1298 = vld [vmem:[%s2 + $0x10] sm:$0xf]
        %v1299 = vld [vmem:[%s2 + $0x14] sm:$0xf]
        %v1300 = vld [vmem:[%s2 + $0x18] sm:$0xf]
        %v1301 = vld [vmem:[%s3] sm:$0xf]
        %v1302 = vld [vmem:[%s3 + $0x4] sm:$0xf]
        %v1303 = vld [vmem:[%s3 + $0x8] sm:$0xf]
        %v1304 = vld [vmem:[%s3 + $0xc] sm:$0xf]
        %v1305 = vld [vmem:[%s3 + $0x10] sm:$0xf]
        %v1306 = vld [vmem:[%s3 + $0x14] sm:$0xf]
        %v1307 = vld [vmem:[%s3 + $0x18] sm:$0xf]
        %v1315 = vunpack.c.l.b16 %v1301
        %v1316 = vunpack.c.l.b16 %v1302
        %v1317 = vunpack.c.l.b16 %v1303
        %v1318 = vunpack.c.l.b16 %v1304
        %v1319 = vunpack.c.l.b16 %v1305
        %v1320 = vunpack.c.l.b16 %v1306
        %v1321 = vunpack.c.l.b16 %v1307
        %v1322 = vpack.c.b16 %v1316, %v1315
        %v1323 = vpack.c.b16 %v1318, %v1317
        %v1324 = vpack.c.b16 %v1320, %v1319
        %v1325 = vpack.c.b16 %v1321, %v1321
        %1327 = vrot.lane.b32.xlu0 %v787, 96
        %v1328 = vpop.permute.xlu0 %1327
        %v1330 = vsel %vm795, %v1322, 0
        %v1333 = vsel %vm795, %v1323, 0
        %v1336 = vsel %vm795, %v1324, 0
        %v1339 = vsel %vm795, %v1325, 0
        %vm1341 = vcmask 1043456
        %v1343 = vsel %vm1341, %v1328, 0
        %1345 = vmatprep.subr.bf16.mxu0 0
        %1346 = vmatpush1.bf16.msra.mxu0 0
        %1347 = vmatprep.subr.bf16.mxu0 0
        %1348 = vmatpush1.bf16.msra.mxu0 0
        %1349 = vmatprep.subr.bf16.mxu0 0
        %1350 = vmatpush1.bf16.msra.mxu0 0
        %1351 = vmatprep.subr.bf16.mxu0 0
        %1352 = vmatpush1.bf16.msra.mxu0 0
        %1353 = vmatprep.subr.bf16.mxu0 0
        %1354 = vmatpush1.bf16.msra.mxu0 0
        %1355 = vmatprep.subr.bf16.mxu0 0
        %1356 = vmatpush1.bf16.msra.mxu0 0
        %1357 = vmatprep.subr.bf16.mxu0 0
        %1358 = vmatpush1.bf16.msra.mxu0 0
        %1359 = vmatprep.subr.bf16.mxu0 0
        %1360 = vmatpush1.bf16.msra.mxu0 %v1343
        %1361 = vmatprep.subr.bf16.mxu0 0
        %1362 = vmatpush2.bf16.msra.mxu0 0
        %1363 = vmatprep.subr.bf16.mxu0 0
        %1364 = vmatpush2.bf16.msra.mxu0 0
        %1365 = vmatprep.subr.bf16.mxu0 0
        %1366 = vmatpush2.bf16.msra.mxu0 0
        %1367 = vmatprep.subr.bf16.mxu0 0
        %1368 = vmatpush2.bf16.msra.mxu0 0
        %1369 = vmatprep.subr.bf16.mxu0 0
        %1370 = vmatpush2.bf16.msra.mxu0 0
        %1371 = vmatprep.subr.bf16.mxu0 0
        %1372 = vmatpush2.bf16.msra.mxu0 0
        %1373 = vmatprep.subr.bf16.mxu0 0
        %1374 = vmatpush2.bf16.msra.mxu0 0
        %1375 = vmatprep.subr.bf16.mxu0 0
        %1376 = vmatpush2.bf16.msra.mxu0 0
        %1377 = vmatprep.mubr.bf16.mxu0 0
        %1378 = vmatmul.mubr.bf16.gmra.mxu0 %v1330
        %v1379 = vpop.f32.mrf.mxu0
        %v1380 = vadd.f32 0.0, %v1379
        %v1381 = vpop.f32.mrf.mxu0
        %v1382 = vpop.f32.mrf.mxu0
        %v1383 = vadd.f32 0.0, %v1382
        %v1384 = vpop.f32.mrf.mxu0
        %1385 = vmatprep.mubr.bf16.mxu0 0
        %1386 = vmatmul.mubr.bf16.gmra.mxu0 %v1333
        %v1387 = vpop.f32.mrf.mxu0
        %v1388 = vadd.f32 0.0, %v1387
        %v1389 = vpop.f32.mrf.mxu0
        %v1390 = vpop.f32.mrf.mxu0
        %v1391 = vadd.f32 0.0, %v1390
        %v1392 = vpop.f32.mrf.mxu0
        %1393 = vmatprep.mubr.bf16.mxu0 0
        %1394 = vmatmul.mubr.bf16.gmra.mxu0 %v1336
        %v1395 = vpop.f32.mrf.mxu0
        %v1396 = vadd.f32 0.0, %v1395
        %v1397 = vpop.f32.mrf.mxu0
        %v1398 = vpop.f32.mrf.mxu0
        %v1399 = vadd.f32 0.0, %v1398
        %v1400 = vpop.f32.mrf.mxu0
        %1401 = vmatprep.mubr.bf16.mxu0 0
        %1402 = vmatmul.mubr.bf16.gmra.mxu0 %v1339
        %v1403 = vpop.f32.mrf.mxu0
        %v1404 = vadd.f32 0.0, %v1403
        %v1405 = vpop.f32.mrf.mxu0
        %v1406 = vpop.f32.mrf.mxu0
        %v1407 = vpop.f32.mrf.mxu0
        %1408 = vdwg.mxu0
        %v1416 = vunpack.c.l.b16 %v1294
        %v1417 = vunpack.c.l.b16 %v1295
        %v1418 = vunpack.c.l.b16 %v1296
        %v1419 = vunpack.c.l.b16 %v1297
        %v1420 = vunpack.c.l.b16 %v1298
        %v1421 = vunpack.c.l.b16 %v1299
        %v1422 = vunpack.c.l.b16 %v1300
        %v1423 = vpack.c.b16 %v1417, %v1416
        %v1424 = vpack.c.b16 %v1419, %v1418
        %v1425 = vpack.c.b16 %v1421, %v1420
        %v1426 = vpack.c.b16 %v1422, %v1422
        %v1428 = vsel %vm795, %v1423, 0
        %v1431 = vsel %vm795, %v1424, 0
        %v1434 = vsel %vm795, %v1425, 0
        %v1437 = vsel %vm795, %v1426, 0
        %v1440 = vsel %vm1341, %v787, 0
        %1442 = vmatprep.subr.bf16.mxu0 0
        %1443 = vmatpush1.bf16.msra.mxu0 0
        %1444 = vmatprep.subr.bf16.mxu0 0
        %1445 = vmatpush1.bf16.msra.mxu0 0
        %1446 = vmatprep.subr.bf16.mxu0 0
        %1447 = vmatpush1.bf16.msra.mxu0 0
        %1448 = vmatprep.subr.bf16.mxu0 0
        %1449 = vmatpush1.bf16.msra.mxu0 0
        %1450 = vmatprep.subr.bf16.mxu0 0
        %1451 = vmatpush1.bf16.msra.mxu0 0
        %1452 = vmatprep.subr.bf16.mxu0 0
        %1453 = vmatpush1.bf16.msra.mxu0 0
        %1454 = vmatprep.subr.bf16.mxu0 0
        %1455 = vmatpush1.bf16.msra.mxu0 0
        %1456 = vmatprep.subr.bf16.mxu0 0
        %1457 = vmatpush1.bf16.msra.mxu0 %v1440
        %1458 = vmatprep.subr.bf16.mxu0 0
        %1459 = vmatpush2.bf16.msra.mxu0 0
        %1460 = vmatprep.subr.bf16.mxu0 0
        %1461 = vmatpush2.bf16.msra.mxu0 0
        %1462 = vmatprep.subr.bf16.mxu0 0
        %1463 = vmatpush2.bf16.msra.mxu0 0
        %1464 = vmatprep.subr.bf16.mxu0 0
        %1465 = vmatpush2.bf16.msra.mxu0 0
        %1466 = vmatprep.subr.bf16.mxu0 0
        %1467 = vmatpush2.bf16.msra.mxu0 0
        %1468 = vmatprep.subr.bf16.mxu0 0
        %1469 = vmatpush2.bf16.msra.mxu0 0
        %1470 = vmatprep.subr.bf16.mxu0 0
        %1471 = vmatpush2.bf16.msra.mxu0 0
        %1472 = vmatprep.subr.bf16.mxu0 0
        %1473 = vmatpush2.bf16.msra.mxu0 0
        %1474 = vmatprep.mubr.bf16.mxu0 0
        %1475 = vmatmul.mubr.bf16.gmra.mxu0 %v1428
        %v1476 = vpop.f32.mrf.mxu0
        %v1477 = vadd.f32 %v1380, %v1476
        %v1478 = vpop.f32.mrf.mxu0
        %v1479 = vpop.f32.mrf.mxu0
        %v1480 = vadd.f32 %v1383, %v1479
        %v1481 = vpop.f32.mrf.mxu0
        %1482 = vmatprep.mubr.bf16.mxu0 0
        %1483 = vmatmul.mubr.bf16.gmra.mxu0 %v1431
        %v1484 = vpop.f32.mrf.mxu0
        %v1485 = vadd.f32 %v1388, %v1484
        %v1486 = vpop.f32.mrf.mxu0
        %v1487 = vpop.f32.mrf.mxu0
        %v1488 = vadd.f32 %v1391, %v1487
        %v1489 = vpop.f32.mrf.mxu0
        %1490 = vmatprep.mubr.bf16.mxu0 0
        %1491 = vmatmul.mubr.bf16.gmra.mxu0 %v1434
        %v1492 = vpop.f32.mrf.mxu0
        %v1493 = vadd.f32 %v1396, %v1492
        %v1494 = vpop.f32.mrf.mxu0
        %v1495 = vpop.f32.mrf.mxu0
        %v1496 = vadd.f32 %v1399, %v1495
        %v1497 = vpop.f32.mrf.mxu0
        %1498 = vmatprep.mubr.bf16.mxu0 0
        %1499 = vmatmul.mubr.bf16.gmra.mxu0 %v1437
        %v1500 = vpop.f32.mrf.mxu0
        %v1501 = vadd.f32 %v1404, %v1500
        %v1502 = vpop.f32.mrf.mxu0
        %v1503 = vpop.f32.mrf.mxu0
        %v1504 = vpop.f32.mrf.mxu0
        %1505 = vdwg.mxu0
        %v1506 = vld [vmem:[%s12] sm:$0xf]
        %v1507 = vld [vmem:[%s12 + $0x4] sm:$0xf]
        %v1508 = vld [vmem:[%s12 + $0x8] sm:$0xf]
        %v1512 = vunpack.c.l.b16 %v1506
        %v1513 = vunpack.c.l.b16 %v1507
        %v1514 = vunpack.c.l.b16 %v1508
        %v1515 = vpack.c.b16 %v1513, %v1512
        %v1516 = vpack.c.b16 %v1514, %v1514
        %vm1518 = vcmask 195584
        %v1519 = vsel %vm1518, %v1284, 0
        %v1521 = vsel %vm1518, %v1287, 0
        %v1523 = vsel %vm1518, %v1290, 0
        %v1525 = vsel %vm1518, %v1293, 0
        %v1528 = vsel %vm1341, %v1516, 0
        %1530 = vmatprep.subr.bf16.mxu0 0
        %1531 = vmatpush1.bf16.msra.mxu0 0
        %1532 = vmatprep.subr.bf16.mxu0 0
        %1533 = vmatpush1.bf16.msra.mxu0 0
        %1534 = vmatprep.subr.bf16.mxu0 0
        %1535 = vmatpush1.bf16.msra.mxu0 0
        %1536 = vmatprep.subr.bf16.mxu0 0
        %1537 = vmatpush1.bf16.msra.mxu0 0
        %1538 = vmatprep.subr.bf16.mxu0 0
        %1539 = vmatpush1.bf16.msra.mxu0 0
        %1540 = vmatprep.subr.bf16.mxu0 0
        %1541 = vmatpush1.bf16.msra.mxu0 0
        %1542 = vmatprep.subr.bf16.mxu0 0
        %1543 = vmatpush1.bf16.msra.mxu0 %v1528
        %1544 = vmatprep.subr.bf16.mxu0 0
        %1545 = vmatpush1.bf16.msra.mxu0 %v1515
        %1546 = vmatprep.subr.bf16.mxu0 0
        %1547 = vmatpush2.bf16.msra.mxu0 0
        %1548 = vmatprep.subr.bf16.mxu0 0
        %1549 = vmatpush2.bf16.msra.mxu0 0
        %1550 = vmatprep.subr.bf16.mxu0 0
        %1551 = vmatpush2.bf16.msra.mxu0 0
        %1552 = vmatprep.subr.bf16.mxu0 0
        %1553 = vmatpush2.bf16.msra.mxu0 0
        %1554 = vmatprep.subr.bf16.mxu0 0
        %1555 = vmatpush2.bf16.msra.mxu0 0
        %1556 = vmatprep.subr.bf16.mxu0 0
        %1557 = vmatpush2.bf16.msra.mxu0 0
        %1558 = vmatprep.subr.bf16.mxu0 0
        %1559 = vmatpush2.bf16.msra.mxu0 0
        %1560 = vmatprep.subr.bf16.mxu0 0
        %1561 = vmatpush2.bf16.msra.mxu0 0
        %1562 = vmatprep.mubr.bf16.mxu0 0
        %1563 = vmatmul.mubr.bf16.gmra.mxu0 %v1519
        %v1564 = vpop.f32.mrf.mxu0
        %v1565 = vadd.f32 0.0, %v1564
        %v1566 = vpop.f32.mrf.mxu0
        %v1567 = vpop.f32.mrf.mxu0
        %v1568 = vadd.f32 0.0, %v1567
        %v1569 = vpop.f32.mrf.mxu0
        %1570 = vmatprep.mubr.bf16.mxu0 0
        %1571 = vmatmul.mubr.bf16.gmra.mxu0 %v1521
        %v1572 = vpop.f32.mrf.mxu0
        %v1573 = vadd.f32 0.0, %v1572
        %v1574 = vpop.f32.mrf.mxu0
        %v1575 = vpop.f32.mrf.mxu0
        %v1576 = vadd.f32 0.0, %v1575
        %v1577 = vpop.f32.mrf.mxu0
        %1578 = vmatprep.mubr.bf16.mxu0 0
        %1579 = vmatmul.mubr.bf16.gmra.mxu0 %v1523
        %v1580 = vpop.f32.mrf.mxu0
        %v1581 = vadd.f32 0.0, %v1580
        %v1582 = vpop.f32.mrf.mxu0
        %v1583 = vpop.f32.mrf.mxu0
        %v1584 = vadd.f32 0.0, %v1583
        %v1585 = vpop.f32.mrf.mxu0
        %1586 = vmatprep.mubr.bf16.mxu0 0
        %1587 = vmatmul.mubr.bf16.gmra.mxu0 %v1525
        %v1588 = vpop.f32.mrf.mxu0
        %v1589 = vadd.f32 0.0, %v1588
        %v1590 = vpop.f32.mrf.mxu0
        %v1591 = vpop.f32.mrf.mxu0
        %v1592 = vpop.f32.mrf.mxu0
        %1593 = vdwg.mxu0
        %v1594 = vadd.f32 %v1477, %v1565
        %v1595 = vadd.f32 %v1480, %v1568
        %v1596 = vadd.f32 %v1485, %v1573
        %v1597 = vadd.f32 %v1488, %v1576
        %v1598 = vadd.f32 %v1493, %v1581
        %v1599 = vadd.f32 %v1496, %v1584
        %v1600 = vadd.f32 %v1501, %v1589
        %v1601 = vld [vmem:[%s13] sm:$0x1]
        %v1603 = vlaneseq
        %v1604 = vshrl.u32 %v1603, 7
        %v1605 = vsub.s32 0, %v1604
        %v1606 = vrot.slane %v1601, %v1605
        %v1608 = vadd.f32 %v1594, %v1606
        %v1609 = vadd.f32 %v1595, %v1606
        %v1610 = vadd.f32 %v1596, %v1606
        %v1611 = vadd.f32 %v1597, %v1606
        %v1612 = vadd.f32 %v1598, %v1606
        %v1613 = vadd.f32 %v1599, %v1606
        %v1614 = vadd.f32 %v1600, %v1606
        %v1615 = vmax.f32 %v1608, 0.0
        %v1616 = vmax.f32 %v1609, 0.0
        %v1617 = vmax.f32 %v1610, 0.0
        %v1618 = vmax.f32 %v1611, 0.0
        %v1619 = vmax.f32 %v1612, 0.0
        %v1620 = vmax.f32 %v1613, 0.0
        %v1621 = vmax.f32 %v1614, 0.0
        %v1622 = vpack.c.bf16 %v1616, %v1615
        %v1623 = vpack.c.bf16 %v1618, %v1617
        %v1624 = vpack.c.bf16 %v1620, %v1619
        %v1625 = vpack.c.bf16 %v1621, %v1621
        %v1626 = vld [vmem:[%s14] sm:$0xf]
        %v1627 = vld [vmem:[%s14 + $0x4] sm:$0xf]
        %v1628 = vld [vmem:[%s14 + $0x8] sm:$0xf]
        %v1629 = vld [vmem:[%s14 + $0xc] sm:$0xf]
        %v1630 = vld [vmem:[%s15] sm:$0x1]
        %v1632 = vlaneseq
        %v1633 = vshrl.u32 %v1632, 7
        %v1634 = vsub.s32 0, %v1633
        %v1635 = vrot.slane %v1630, %v1634
        %v1641 = vunpack.c.l.b16 %v1626
        %v1642 = vunpack.c.l.b16 %v1627
        %v1643 = vunpack.c.l.b16 %v1628
        %v1644 = vunpack.c.l.b16 %v1629
        %v1645 = vpack.c.b16 %v1642, %v1641
        %v1646 = vpack.c.b16 %v1644, %v1643
        %v1650 = vsel %vm743, %v1622, 0
        %v1653 = vsel %vm743, %v1623, 0
        %v1656 = vsel %vm743, %v1624, 0
        %v1659 = vsel %vm743, %v1625, 0
        %1661 = vmatprep.subr.bf16.mxu0 0
        %1662 = vmatpush1.bf16.msra.mxu0 0
        %1663 = vmatprep.subr.bf16.mxu0 0
        %1664 = vmatpush1.bf16.msra.mxu0 0
        %1665 = vmatprep.subr.bf16.mxu0 0
        %1666 = vmatpush1.bf16.msra.mxu0 0
        %1667 = vmatprep.subr.bf16.mxu0 0
        %1668 = vmatpush1.bf16.msra.mxu0 0
        %1669 = vmatprep.subr.bf16.mxu0 0
        %1670 = vmatpush1.bf16.msra.mxu0 0
        %1671 = vmatprep.subr.bf16.mxu0 0
        %1672 = vmatpush1.bf16.msra.mxu0 0
        %1673 = vmatprep.subr.bf16.mxu0 0
        %1674 = vmatpush1.bf16.msra.mxu0 %v1646
        %1675 = vmatprep.subr.bf16.mxu0 0
        %1676 = vmatpush1.bf16.msra.mxu0 %v1645
        %1677 = vmatprep.subr.bf16.mxu0 0
        %1678 = vmatpush2.bf16.msra.mxu0 0
        %1679 = vmatprep.subr.bf16.mxu0 0
        %1680 = vmatpush2.bf16.msra.mxu0 0
        %1681 = vmatprep.subr.bf16.mxu0 0
        %1682 = vmatpush2.bf16.msra.mxu0 0
        %1683 = vmatprep.subr.bf16.mxu0 0
        %1684 = vmatpush2.bf16.msra.mxu0 0
        %1685 = vmatprep.subr.bf16.mxu0 0
        %1686 = vmatpush2.bf16.msra.mxu0 0
        %1687 = vmatprep.subr.bf16.mxu0 0
        %1688 = vmatpush2.bf16.msra.mxu0 0
        %1689 = vmatprep.subr.bf16.mxu0 0
        %1690 = vmatpush2.bf16.msra.mxu0 0
        %1691 = vmatprep.subr.bf16.mxu0 0
        %1692 = vmatpush2.bf16.msra.mxu0 0
        %1693 = vmatprep.mubr.bf16.mxu0 0
        %1694 = vmatmul.mubr.bf16.gmra.mxu0 %v1650
        %v1695 = vpop.f32.mrf.mxu0
        %v1696 = vadd.f32 %v1635, %v1695
        %v1697 = vpop.f32.mrf.mxu0
        %v1698 = vpop.f32.mrf.mxu0
        %v1699 = vadd.f32 %v1635, %v1698
        %v1700 = vpop.f32.mrf.mxu0
        %1701 = vmatprep.mubr.bf16.mxu0 0
        %1702 = vmatmul.mubr.bf16.gmra.mxu0 %v1653
        %v1703 = vpop.f32.mrf.mxu0
        %v1704 = vadd.f32 %v1635, %v1703
        %v1705 = vpop.f32.mrf.mxu0
        %v1706 = vpop.f32.mrf.mxu0
        %v1707 = vadd.f32 %v1635, %v1706
        %v1708 = vpop.f32.mrf.mxu0
        %1709 = vmatprep.mubr.bf16.mxu0 0
        %1710 = vmatmul.mubr.bf16.gmra.mxu0 %v1656
        %v1711 = vpop.f32.mrf.mxu0
        %v1712 = vadd.f32 %v1635, %v1711
        %v1713 = vpop.f32.mrf.mxu0
        %v1714 = vpop.f32.mrf.mxu0
        %v1715 = vadd.f32 %v1635, %v1714
        %v1716 = vpop.f32.mrf.mxu0
        %1717 = vmatprep.mubr.bf16.mxu0 0
        %1718 = vmatmul.mubr.bf16.gmra.mxu0 %v1659
        %v1719 = vpop.f32.mrf.mxu0
        %v1720 = vadd.f32 %v1635, %v1719
        %v1721 = vpop.f32.mrf.mxu0
        %v1722 = vpop.f32.mrf.mxu0
        %v1723 = vpop.f32.mrf.mxu0
        %1724 = vdwg.mxu0
        %v1725 = vmax.f32 %v1696, 0.0
        %v1726 = vmax.f32 %v1699, 0.0
        %v1727 = vmax.f32 %v1704, 0.0
        %v1728 = vmax.f32 %v1707, 0.0
        %v1729 = vmax.f32 %v1712, 0.0
        %v1730 = vmax.f32 %v1715, 0.0
        %v1731 = vmax.f32 %v1720, 0.0
        %v1732 = vpack.c.bf16 %v1726, %v1725
        %v1733 = vpack.c.bf16 %v1728, %v1727
        %v1734 = vpack.c.bf16 %v1730, %v1729
        %v1735 = vpack.c.bf16 %v1731, %v1731
        %v1736 = vld [vmem:[%s16] sm:$0xf]
        %v1737 = vld [vmem:[%s16 + $0x4] sm:$0xf]
        %v1738 = vld [vmem:[%s16 + $0x8] sm:$0xf]
        %v1739 = vld [vmem:[%s16 + $0xc] sm:$0xf]
        %v1740 = vld [vmem:[%s17] sm:$0x1]
        %v1742 = vlaneseq
        %v1743 = vshrl.u32 %v1742, 7
        %v1744 = vsub.s32 0, %v1743
        %v1745 = vrot.slane %v1740, %v1744
        %v1751 = vunpack.c.l.b16 %v1736
        %v1752 = vunpack.c.l.b16 %v1737
        %v1753 = vunpack.c.l.b16 %v1738
        %v1754 = vunpack.c.l.b16 %v1739
        %v1755 = vpack.c.b16 %v1752, %v1751
        %v1756 = vpack.c.b16 %v1754, %v1753
        %v1760 = vsel %vm743, %v1732, 0
        %v1763 = vsel %vm743, %v1733, 0
        %v1766 = vsel %vm743, %v1734, 0
        %v1769 = vsel %vm743, %v1735, 0
        %1771 = vmatprep.subr.bf16.mxu0 0
        %1772 = vmatpush1.bf16.msra.mxu0 0
        %1773 = vmatprep.subr.bf16.mxu0 0
        %1774 = vmatpush1.bf16.msra.mxu0 0
        %1775 = vmatprep.subr.bf16.mxu0 0
        %1776 = vmatpush1.bf16.msra.mxu0 0
        %1777 = vmatprep.subr.bf16.mxu0 0
        %1778 = vmatpush1.bf16.msra.mxu0 0
        %1779 = vmatprep.subr.bf16.mxu0 0
        %1780 = vmatpush1.bf16.msra.mxu0 0
        %1781 = vmatprep.subr.bf16.mxu0 0
        %1782 = vmatpush1.bf16.msra.mxu0 0
        %1783 = vmatprep.subr.bf16.mxu0 0
        %1784 = vmatpush1.bf16.msra.mxu0 %v1756
        %1785 = vmatprep.subr.bf16.mxu0 0
        %1786 = vmatpush1.bf16.msra.mxu0 %v1755
        %1787 = vmatprep.subr.bf16.mxu0 0
        %1788 = vmatpush2.bf16.msra.mxu0 0
        %1789 = vmatprep.subr.bf16.mxu0 0
        %1790 = vmatpush2.bf16.msra.mxu0 0
        %1791 = vmatprep.subr.bf16.mxu0 0
        %1792 = vmatpush2.bf16.msra.mxu0 0
        %1793 = vmatprep.subr.bf16.mxu0 0
        %1794 = vmatpush2.bf16.msra.mxu0 0
        %1795 = vmatprep.subr.bf16.mxu0 0
        %1796 = vmatpush2.bf16.msra.mxu0 0
        %1797 = vmatprep.subr.bf16.mxu0 0
        %1798 = vmatpush2.bf16.msra.mxu0 0
        %1799 = vmatprep.subr.bf16.mxu0 0
        %1800 = vmatpush2.bf16.msra.mxu0 0
        %1801 = vmatprep.subr.bf16.mxu0 0
        %1802 = vmatpush2.bf16.msra.mxu0 0
        %1803 = vmatprep.mubr.bf16.mxu0 0
        %1804 = vmatmul.mubr.bf16.gmra.mxu0 %v1760
        %v1805 = vpop.f32.mrf.mxu0
        %v1806 = vadd.f32 %v1745, %v1805
        %v1807 = vpop.f32.mrf.mxu0
        %v1808 = vpop.f32.mrf.mxu0
        %v1809 = vadd.f32 %v1745, %v1808
        %v1810 = vpop.f32.mrf.mxu0
        %1811 = vmatprep.mubr.bf16.mxu0 0
        %1812 = vmatmul.mubr.bf16.gmra.mxu0 %v1763
        %v1813 = vpop.f32.mrf.mxu0
        %v1814 = vadd.f32 %v1745, %v1813
        %v1815 = vpop.f32.mrf.mxu0
        %v1816 = vpop.f32.mrf.mxu0
        %v1817 = vadd.f32 %v1745, %v1816
        %v1818 = vpop.f32.mrf.mxu0
        %1819 = vmatprep.mubr.bf16.mxu0 0
        %1820 = vmatmul.mubr.bf16.gmra.mxu0 %v1766
        %v1821 = vpop.f32.mrf.mxu0
        %v1822 = vadd.f32 %v1745, %v1821
        %v1823 = vpop.f32.mrf.mxu0
        %v1824 = vpop.f32.mrf.mxu0
        %v1825 = vadd.f32 %v1745, %v1824
        %v1826 = vpop.f32.mrf.mxu0
        %1827 = vmatprep.mubr.bf16.mxu0 0
        %1828 = vmatmul.mubr.bf16.gmra.mxu0 %v1769
        %v1829 = vpop.f32.mrf.mxu0
        %v1830 = vadd.f32 %v1745, %v1829
        %v1831 = vpop.f32.mrf.mxu0
        %v1832 = vpop.f32.mrf.mxu0
        %v1833 = vpop.f32.mrf.mxu0
        %1834 = vdwg.mxu0
        %v1835 = vmax.f32 %v1806, 0.0
        %v1836 = vmax.f32 %v1809, 0.0
        %v1837 = vmax.f32 %v1814, 0.0
        %v1838 = vmax.f32 %v1817, 0.0
        %v1839 = vmax.f32 %v1822, 0.0
        %v1840 = vmax.f32 %v1825, 0.0
        %v1841 = vmax.f32 %v1830, 0.0
        %v1842 = vpack.c.bf16 %v1836, %v1835
        %v1843 = vpack.c.bf16 %v1838, %v1837
        %v1844 = vpack.c.bf16 %v1840, %v1839
        %v1845 = vpack.c.bf16 %v1841, %v1841
        %v1846 = vld [vmem:[%s18] sm:$0xf]
        %v1847 = vld [vmem:[%s18 + $0x4] sm:$0xf]
        %v1848 = vld [vmem:[%s18 + $0x8] sm:$0xf]
        %v1849 = vld [vmem:[%s18 + $0xc] sm:$0xf]
        %v1854 = vunpack.c.l.b16 %v1846
        %v1855 = vunpack.c.l.b16 %v1847
        %v1856 = vunpack.c.l.b16 %v1848
        %v1857 = vunpack.c.l.b16 %v1849
        %v1858 = vpack.c.b16 %v1855, %v1854
        %v1859 = vpack.c.b16 %v1857, %v1856
        %v1863 = vsel %vm743, %v1842, 0
        %v1866 = vsel %vm743, %v1843, 0
        %v1869 = vsel %vm743, %v1844, 0
        %v1872 = vsel %vm743, %v1845, 0
        %1874 = vmatprep.subr.bf16.mxu0 0
        %1875 = vmatpush1.bf16.msra.mxu0 0
        %1876 = vmatprep.subr.bf16.mxu0 0
        %1877 = vmatpush1.bf16.msra.mxu0 0
        %1878 = vmatprep.subr.bf16.mxu0 0
        %1879 = vmatpush1.bf16.msra.mxu0 0
        %1880 = vmatprep.subr.bf16.mxu0 0
        %1881 = vmatpush1.bf16.msra.mxu0 0
        %1882 = vmatprep.subr.bf16.mxu0 0
        %1883 = vmatpush1.bf16.msra.mxu0 0
        %1884 = vmatprep.subr.bf16.mxu0 0
        %1885 = vmatpush1.bf16.msra.mxu0 0
        %1886 = vmatprep.subr.bf16.mxu0 0
        %1887 = vmatpush1.bf16.msra.mxu0 %v1859
        %1888 = vmatprep.subr.bf16.mxu0 0
        %1889 = vmatpush1.bf16.msra.mxu0 %v1858
        %1890 = vmatprep.subr.bf16.mxu0 0
        %1891 = vmatpush2.bf16.msra.mxu0 0
        %1892 = vmatprep.subr.bf16.mxu0 0
        %1893 = vmatpush2.bf16.msra.mxu0 0
        %1894 = vmatprep.subr.bf16.mxu0 0
        %1895 = vmatpush2.bf16.msra.mxu0 0
        %1896 = vmatprep.subr.bf16.mxu0 0
        %1897 = vmatpush2.bf16.msra.mxu0 0
        %1898 = vmatprep.subr.bf16.mxu0 0
        %1899 = vmatpush2.bf16.msra.mxu0 0
        %1900 = vmatprep.subr.bf16.mxu0 0
        %1901 = vmatpush2.bf16.msra.mxu0 0
        %1902 = vmatprep.subr.bf16.mxu0 0
        %1903 = vmatpush2.bf16.msra.mxu0 0
        %1904 = vmatprep.subr.bf16.mxu0 0
        %1905 = vmatpush2.bf16.msra.mxu0 0
        %1906 = vmatprep.mubr.bf16.mxu0 0
        %1907 = vmatmul.mubr.bf16.gmra.mxu0 %v1863
        %v1908 = vpop.f32.mrf.mxu0
        %v1909 = vadd.f32 0.0, %v1908
        %v1910 = vpop.f32.mrf.mxu0
        %v1911 = vpop.f32.mrf.mxu0
        %v1912 = vadd.f32 0.0, %v1911
        %v1913 = vpop.f32.mrf.mxu0
        %1914 = vmatprep.mubr.bf16.mxu0 0
        %1915 = vmatmul.mubr.bf16.gmra.mxu0 %v1866
        %v1916 = vpop.f32.mrf.mxu0
        %v1917 = vadd.f32 0.0, %v1916
        %v1918 = vpop.f32.mrf.mxu0
        %v1919 = vpop.f32.mrf.mxu0
        %v1920 = vadd.f32 0.0, %v1919
        %v1921 = vpop.f32.mrf.mxu0
        %1922 = vmatprep.mubr.bf16.mxu0 0
        %1923 = vmatmul.mubr.bf16.gmra.mxu0 %v1869
        %v1924 = vpop.f32.mrf.mxu0
        %v1925 = vadd.f32 0.0, %v1924
        %v1926 = vpop.f32.mrf.mxu0
        %v1927 = vpop.f32.mrf.mxu0
        %v1928 = vadd.f32 0.0, %v1927
        %v1929 = vpop.f32.mrf.mxu0
        %1930 = vmatprep.mubr.bf16.mxu0 0
        %1931 = vmatmul.mubr.bf16.gmra.mxu0 %v1872
        %v1932 = vpop.f32.mrf.mxu0
        %v1933 = vadd.f32 0.0, %v1932
        %v1934 = vpop.f32.mrf.mxu0
        %v1935 = vpop.f32.mrf.mxu0
        %v1936 = vpop.f32.mrf.mxu0
        %1937 = vdwg.mxu0
        %v1938 = vmul.f32 %v884, %v1909
        %v1939 = vmul.f32 %v889, %v1912
        %v1940 = vmul.f32 %v894, %v1917
        %v1941 = vmul.f32 %v899, %v1920
        %v1942 = vmul.f32 %v904, %v1925
        %v1943 = vmul.f32 %v909, %v1928
        %v1944 = vmul.f32 %v914, %v1933
        %v1945 = vmax.f32 %v1938, -100.0
        %v1946 = vmax.f32 %v1939, -100.0
        %v1947 = vmax.f32 %v1940, -100.0
        %v1948 = vmax.f32 %v1941, -100.0
        %v1949 = vmax.f32 %v1942, -100.0
        %v1950 = vmax.f32 %v1943, -100.0
        %v1951 = vmax.f32 %v1944, -100.0
        %v1952 = vmin.f32 %v1945, 100.0
        %v1953 = vmin.f32 %v1946, 100.0
        %v1954 = vmin.f32 %v1947, 100.0
        %v1955 = vmin.f32 %v1948, 100.0
        %v1956 = vmin.f32 %v1949, 100.0
        %v1957 = vmin.f32 %v1950, 100.0
        %v1958 = vmin.f32 %v1951, 100.0
        %v1959 = vpack.c.bf16 %v1953, %v1952
        %v1960 = vpack.c.bf16 %v1955, %v1954
        %v1961 = vpack.c.bf16 %v1957, %v1956
        %v1962 = vpack.c.bf16 %v1958, %v1958
        %1967 = vrot.lane.b32.xlu0 %v1732, 12
        %v1968 = vpop.permute.xlu0 %1967
        %1969 = vrot.lane.b32.xlu0 %v1733, 12
        %v1970 = vpop.permute.xlu0 %1969
        %1971 = vrot.lane.b32.xlu0 %v1734, 12
        %v1972 = vpop.permute.xlu0 %1971
        %1973 = vrot.lane.b32.xlu0 %v1735, 12
        %v1974 = vpop.permute.xlu0 %1973
        %v1977 = vsel %vm928, %v1959, %v1968
        %v1981 = vsel %vm928, %v1960, %v1970
        %v1985 = vsel %vm928, %v1961, %v1972
        %v1989 = vsel %vm928, %v1962, %v1974
        %v1990 = vld [vmem:[%s5] sm:$0xf]
        %vm1991 = vcmask 457728
        %v1993 = vsel %vm1991, %v1990, 0
        %v1995 = vsel %vm1341, %v1989, 0
        %1997 = vmatprep.subr.bf16.mxu0 0
        %1998 = vmatpush1.bf16.msra.mxu0 0
        %1999 = vmatprep.subr.bf16.mxu0 0
        %2000 = vmatpush1.bf16.msra.mxu0 0
        %2001 = vmatprep.subr.bf16.mxu0 0
        %2002 = vmatpush1.bf16.msra.mxu0 0
        %2003 = vmatprep.subr.bf16.mxu0 0
        %2004 = vmatpush1.bf16.msra.mxu0 0
        %2005 = vmatprep.subr.bf16.mxu0 0
        %2006 = vmatpush1.bf16.msra.mxu0 %v1995
        %2007 = vmatprep.subr.bf16.mxu0 0
        %2008 = vmatpush1.bf16.msra.mxu0 %v1985
        %2009 = vmatprep.subr.bf16.mxu0 0
        %2010 = vmatpush1.bf16.msra.mxu0 %v1981
        %2011 = vmatprep.subr.bf16.mxu0 0
        %2012 = vmatpush1.bf16.msra.mxu0 %v1977
        %2013 = vmatprep.subr.bf16.mxu0 0
        %2014 = vmatpush2.bf16.msra.mxu0 0
        %2015 = vmatprep.subr.bf16.mxu0 0
        %2016 = vmatpush2.bf16.msra.mxu0 0
        %2017 = vmatprep.subr.bf16.mxu0 0
        %2018 = vmatpush2.bf16.msra.mxu0 0
        %2019 = vmatprep.subr.bf16.mxu0 0
        %2020 = vmatpush2.bf16.msra.mxu0 0
        %2021 = vmatprep.subr.bf16.mxu0 0
        %2022 = vmatpush2.bf16.msra.mxu0 0
        %2023 = vmatprep.subr.bf16.mxu0 0
        %2024 = vmatpush2.bf16.msra.mxu0 0
        %2025 = vmatprep.subr.bf16.mxu0 0
        %2026 = vmatpush2.bf16.msra.mxu0 0
        %2027 = vmatprep.subr.bf16.mxu0 0
        %2028 = vmatpush2.bf16.msra.mxu0 0
        %2029 = vmatprep.mubr.bf16.mxu0 0
        %2030 = vmatmul.mubr.bf16.gmra.mxu0 %v1993
        %v2031 = vpop.f32.mrf.mxu0
        %v2032 = vadd.f32 0.0, %v2031
        %v2033 = vpop.f32.mrf.mxu0
        %v2034 = vpop.f32.mrf.mxu0
        %v2035 = vpop.f32.mrf.mxu0
        %2036 = vdwg.mxu0
        %v2037 = vld [vmem:[%s6] sm:$0xff]
        %2039 = vset.pattern.permute.xlu0 0
        %2040 = vperm.xlu0 %2039, %v2037
        %v2041 = vpop.permute.xlu0 %2040
        %v2043 = vmul.f32 %v2032, %v2041
        %v2044 = vadd.f32 %v725, %v2043
        %2046 = vrot.lane.b32.xlu0 %v2032, 20
        %v2047 = vpop.permute.xlu0 %2046
        %v2049 = vsel %vm743, %v724, %v2047
        %v2050 = vpack.c.bf16 %v2049, %v2049
        %v2051 = vld [vmem:[%s19] sm:$0xf]
        %v2052 = vld [vmem:[%s19 + $0x4] sm:$0xf]
        %v2053 = vld [vmem:[%s19 + $0x8] sm:$0xf]
        %v2054 = vld [vmem:[%s19 + $0xc] sm:$0xf]
        %v2055 = vld [vmem:[%s19 + $0x10] sm:$0xf]
        %v2056 = vld [vmem:[%s19 + $0x14] sm:$0xf]
        %v2057 = vld [vmem:[%s19 + $0x18] sm:$0xf]
        %v2058 = vld [vmem:[%s19 + $0x1c] sm:$0xf]
        %v2059 = vld [vmem:[%s20] sm:$0x1]
        %v2061 = vlaneseq
        %v2062 = vshrl.u32 %v2061, 7
        %v2063 = vsub.s32 0, %v2062
        %v2064 = vrot.slane %v2059, %v2063
        %v2074 = vunpack.c.l.b16 %v2051
        %v2075 = vunpack.c.l.b16 %v2052
        %v2076 = vunpack.c.l.b16 %v2053
        %v2077 = vunpack.c.l.b16 %v2054
        %v2078 = vunpack.c.l.b16 %v2055
        %v2079 = vunpack.c.l.b16 %v2056
        %v2080 = vunpack.c.l.b16 %v2057
        %v2081 = vunpack.c.l.b16 %v2058
        %v2082 = vpack.c.b16 %v2075, %v2074
        %v2083 = vpack.c.b16 %v2077, %v2076
        %v2084 = vpack.c.b16 %v2079, %v2078
        %v2085 = vpack.c.b16 %v2081, %v2080
        %vm2090 = vcmask 523264
        %v2092 = vsel %vm2090, %v2050, 0
        %2094 = vmatprep.subr.bf16.mxu0 0
        %2095 = vmatpush1.bf16.msra.mxu0 0
        %2096 = vmatprep.subr.bf16.mxu0 0
        %2097 = vmatpush1.bf16.msra.mxu0 0
        %2098 = vmatprep.subr.bf16.mxu0 0
        %2099 = vmatpush1.bf16.msra.mxu0 0
        %2100 = vmatprep.subr.bf16.mxu0 0
        %2101 = vmatpush1.bf16.msra.mxu0 0
        %2102 = vmatprep.subr.bf16.mxu0 0
        %2103 = vmatpush1.bf16.msra.mxu0 %v2085
        %2104 = vmatprep.subr.bf16.mxu0 0
        %2105 = vmatpush1.bf16.msra.mxu0 %v2084
        %2106 = vmatprep.subr.bf16.mxu0 0
        %2107 = vmatpush1.bf16.msra.mxu0 %v2083
        %2108 = vmatprep.subr.bf16.mxu0 0
        %2109 = vmatpush1.bf16.msra.mxu0 %v2082
        %2110 = vmatprep.subr.bf16.mxu0 0
        %2111 = vmatpush2.bf16.msra.mxu0 0
        %2112 = vmatprep.subr.bf16.mxu0 0
        %2113 = vmatpush2.bf16.msra.mxu0 0
        %2114 = vmatprep.subr.bf16.mxu0 0
        %2115 = vmatpush2.bf16.msra.mxu0 0
        %2116 = vmatprep.subr.bf16.mxu0 0
        %2117 = vmatpush2.bf16.msra.mxu0 0
        %2118 = vmatprep.subr.bf16.mxu0 0
        %2119 = vmatpush2.bf16.msra.mxu0 0
        %2120 = vmatprep.subr.bf16.mxu0 0
        %2121 = vmatpush2.bf16.msra.mxu0 0
        %2122 = vmatprep.subr.bf16.mxu0 0
        %2123 = vmatpush2.bf16.msra.mxu0 0
        %2124 = vmatprep.subr.bf16.mxu0 0
        %2125 = vmatpush2.bf16.msra.mxu0 0
        %2126 = vmatprep.mubr.bf16.mxu0 0
        %2127 = vmatmul.mubr.bf16.gmra.mxu0 %v2092
        %v2128 = vpop.f32.mrf.mxu0
        %v2129 = vadd.f32 %v2064, %v2128
        %v2130 = vpop.f32.mrf.mxu0
        %v2131 = vpop.f32.mrf.mxu0
        %v2132 = vpop.f32.mrf.mxu0
        %2133 = vdwg.mxu0
        %v2134 = vmax.f32 %v2129, 0.0
        %v2135 = vpack.c.bf16 %v2134, %v2134
        %v2136 = vld [vmem:[%s21] sm:$0xf]
        %v2137 = vld [vmem:[%s21 + $0x4] sm:$0xf]
        %v2138 = vld [vmem:[%s21 + $0x8] sm:$0xf]
        %v2139 = vld [vmem:[%s21 + $0xc] sm:$0xf]
        %v2140 = vld [vmem:[%s22] sm:$0x1]
        %v2142 = vlaneseq
        %v2143 = vshrl.u32 %v2142, 7
        %v2144 = vsub.s32 0, %v2143
        %v2145 = vrot.slane %v2140, %v2144
        %v2151 = vunpack.c.l.b16 %v2136
        %v2152 = vunpack.c.l.b16 %v2137
        %v2153 = vunpack.c.l.b16 %v2138
        %v2154 = vunpack.c.l.b16 %v2139
        %v2155 = vpack.c.b16 %v2152, %v2151
        %v2156 = vpack.c.b16 %v2154, %v2153
        %v2160 = vsel %vm743, %v2135, 0
        %2162 = vmatprep.subr.bf16.mxu0 0
        %2163 = vmatpush1.bf16.msra.mxu0 0
        %2164 = vmatprep.subr.bf16.mxu0 0
        %2165 = vmatpush1.bf16.msra.mxu0 0
        %2166 = vmatprep.subr.bf16.mxu0 0
        %2167 = vmatpush1.bf16.msra.mxu0 0
        %2168 = vmatprep.subr.bf16.mxu0 0
        %2169 = vmatpush1.bf16.msra.mxu0 0
        %2170 = vmatprep.subr.bf16.mxu0 0
        %2171 = vmatpush1.bf16.msra.mxu0 0
        %2172 = vmatprep.subr.bf16.mxu0 0
        %2173 = vmatpush1.bf16.msra.mxu0 0
        %2174 = vmatprep.subr.bf16.mxu0 0
        %2175 = vmatpush1.bf16.msra.mxu0 %v2156
        %2176 = vmatprep.subr.bf16.mxu0 0
        %2177 = vmatpush1.bf16.msra.mxu0 %v2155
        %2178 = vmatprep.subr.bf16.mxu0 0
        %2179 = vmatpush2.bf16.msra.mxu0 0
        %2180 = vmatprep.subr.bf16.mxu0 0
        %2181 = vmatpush2.bf16.msra.mxu0 0
        %2182 = vmatprep.subr.bf16.mxu0 0
        %2183 = vmatpush2.bf16.msra.mxu0 0
        %2184 = vmatprep.subr.bf16.mxu0 0
        %2185 = vmatpush2.bf16.msra.mxu0 0
        %2186 = vmatprep.subr.bf16.mxu0 0
        %2187 = vmatpush2.bf16.msra.mxu0 0
        %2188 = vmatprep.subr.bf16.mxu0 0
        %2189 = vmatpush2.bf16.msra.mxu0 0
        %2190 = vmatprep.subr.bf16.mxu0 0
        %2191 = vmatpush2.bf16.msra.mxu0 0
        %2192 = vmatprep.subr.bf16.mxu0 0
        %2193 = vmatpush2.bf16.msra.mxu0 0
        %2194 = vmatprep.mubr.bf16.mxu0 0
        %2195 = vmatmul.mubr.bf16.gmra.mxu0 %v2160
        %v2196 = vpop.f32.mrf.mxu0
        %v2197 = vadd.f32 %v2145, %v2196
        %v2198 = vpop.f32.mrf.mxu0
        %v2199 = vpop.f32.mrf.mxu0
        %v2200 = vpop.f32.mrf.mxu0
        %2201 = vdwg.mxu0
        %v2202 = vadd.f32 %v724, %v2197
        %2204 = vrot.lane.b32.xlu0 %v2044, 32
        %v2205 = vpop.permute.xlu0 %2204
        %v2207 = vsel %vm743, %v2202, %v2205
        %vm2208 = vcmask 359424
        %v2209 = vsel %vm2208, %v2207, 0.0
        %2210 = vst [vmem:[%s714] sm:$0xff] %v2209
        %s2211 = sand.u32 %s538, 1
        %s2212 = scalar_lea.sflag [#allocation3], %s2211
        %s2213 = sand.u32 %s538, 1
        %s2214 = smul.addr %s2213, 8
        %s2215 = scalar_lea.vmem [#allocation2], %s2214
        // Predicated region
        $region113: #{tpu_custom_call.1} parent=111 // pred_check
          %p2216 = pneg %p548
        $region114: #{tpu_custom_call.1} parent=111 // pred_check_branch
          %2218 = sbr.rel (%p2216) target = $region116
        $region115: #{tpu_custom_call.1} parent=111 // pred_region
          %s2220 = ssub.s32 128, 128
          %2221 = vsyncadd %s2212, %s2220
          %s2222 = smul.addr %s37, 128
          %s2223 = scalar_lea.hbm %s23, %s2222
          %s2225 = sshll.u32 %s2215, 4
          %s2226 = int_to_ptr.vmem [resolvable:$true] %s2225
          %2228 = dma.vmem_to_hbm [thread:$0]  %s2226, 128, %s2223, %s2212
        $region116: #{tpu_custom_call.1} parent=111 // pred_fallthru
          _
      $region112: #{tpu_custom_call.1} parent=5 // pred_fallthru
        _
      %p2229 = scmp.le.s32.totalorder 2, %s32
      // Predicated region
      $region117: #{tpu_custom_call.1} parent=5 // pred_check
        %p2230 = pneg %p2229
      $region118: #{tpu_custom_call.1} parent=5 // pred_check_branch
        %2232 = sbr.rel (%p2230) target = $region120
      $region119: #{tpu_custom_call.1} parent=5 // pred_region
        %s2233 = ssub.s32 %s32, 2
        // Predicated region
        $region121: #{tpu_custom_call.1} parent=119 // pred_check
          %p2234 = pneg %p554
        $region122: #{tpu_custom_call.1} parent=119 // pred_check_branch
          %2236 = sbr.rel (%p2234) target = $region124
        $region123: #{tpu_custom_call.1} parent=119 // pred_region
          %s2237 = sand.u32 %s539, 1
          %s2238 = scalar_lea.sflag [#allocation3], %s2237
          %s2239 = sand.u32 %s539, 1
          %s2240 = smul.addr %s2239, 8
          %s2241 = scalar_lea.vmem [#allocation2], %s2240
          %2242 = dma.done %s2238, 128
        $region124: #{tpu_custom_call.1} parent=119 // pred_fallthru
          _
      $region120: #{tpu_custom_call.1} parent=5 // pred_fallthru
        _
    $region6: #{tpu_custom_call.1} parent=1 // loop_footer
      %s36 = sadd.s32 1, %s32
    $region7: #{tpu_custom_call.1} parent=1 // loop_footer_branch
      %31 = sbr.rel target = $region3
    $region8: #{tpu_custom_call.1} parent=1 // loop_exit
      _
    %2243 = vsyncpa [#allocation3], 1
    %s2244 = scalar_lea.sflag [#allocation3], 1
    %2245 = vsyncpa %s2244, 1

// kernel: tpu_custom_call.1
$region0: #{tpu_custom_call.1}
  #allocation0 [shape = 'u32[]', space=smem, size = 0x4, offset = 0x4, fixed_abs, tag = 'smem constant byte address 0x4 - core index']
  #allocation1 [shape = 'u32[144,128]{1,0:T(1,128)}', space=vmem, size = 0x12000, scoped, tag = 'internal scratch']
  %s0 = inlined_call_operand.vmem [shape: f32[2,8,32], index: 0, kind: input, shape index: {}]
  %s1 = inlined_call_operand.vmem [shape: f32[2,8,12], index: 1, kind: input, shape index: {}]
  %s2 = inlined_call_operand.vmem [shape: bf16[56,8], index: 2, kind: input, shape index: {}]
  %s3 = inlined_call_operand.vmem [shape: bf16[56,8], index: 3, kind: input, shape index: {}]
  %s4 = inlined_call_operand.vmem [shape: f32[56,8], index: 4, kind: input, shape index: {}]
  %s5 = inlined_call_operand.vmem [shape: bf16[8,56], index: 5, kind: input, shape index: {}]
  %s6 = inlined_call_operand.vmem [shape: f32[8,1], index: 6, kind: input, shape index: {}]
  %s7 = inlined_call_operand.vmem [shape: bf16[56,8], index: 7, kind: input, shape index: {}]
  %s8 = inlined_call_operand.vmem [shape: bf16[12,48], index: 8, kind: input, shape index: {}]
  %s9 = inlined_call_operand.vmem [shape: bf16[12,48], index: 9, kind: input, shape index: {}]
  %s10 = inlined_call_operand.vmem [shape: bf16[48,16], index: 10, kind: input, shape index: {}]
  %s11 = inlined_call_operand.vmem [shape: bf16[32,64], index: 11, kind: input, shape index: {}]
  %s12 = inlined_call_operand.vmem [shape: bf16[24,32], index: 12, kind: input, shape index: {}]
  %s13 = inlined_call_operand.vmem [shape: f32[1,32], index: 13, kind: input, shape index: {}]
  %s14 = inlined_call_operand.vmem [shape: bf16[32,32], index: 14, kind: input, shape index: {}]
  %s15 = inlined_call_operand.vmem [shape: f32[1,32], index: 15, kind: input, shape index: {}]
  %s16 = inlined_call_operand.vmem [shape: bf16[32,32], index: 16, kind: input, shape index: {}]
  %s17 = inlined_call_operand.vmem [shape: f32[1,32], index: 17, kind: input, shape index: {}]
  %s18 = inlined_call_operand.vmem [shape: bf16[32,12], index: 18, kind: input, shape index: {}]
  %s19 = inlined_call_operand.vmem [shape: bf16[64,32], index: 19, kind: input, shape index: {}]
  %s20 = inlined_call_operand.vmem [shape: f32[1,32], index: 20, kind: input, shape index: {}]
  %s21 = inlined_call_operand.vmem [shape: bf16[32,32], index: 21, kind: input, shape index: {}]
  %s22 = inlined_call_operand.vmem [shape: f32[1,32], index: 22, kind: input, shape index: {}]
  %s23 = inlined_call_operand.hbm [shape: f32[2,8,128], index: 23, kind: output, shape index: {}]
  %s24 = sld [smem:[#allocation0]]
  $region125: #{tpu_custom_call.1} parent=0
    _
  %s26 = ssub.s32 1, %s24
  %s27 = scalar_select 0, %s26, %s24
  $region1: #{tpu_custom_call.1} parent=0
    #allocation2 [shape = 'u8[8192]{0}', space=vmem, size = 0x2000, scoped, tag = 'output window, operand 0']
    #allocation3 [shape = 's32[2]{0}', space=sflag, size = 0x8, scoped, tag = 'scoped memory for tpu_custom_call.1']
    %28 = vsyncpa [#allocation3], 0
    %s29 = scalar_lea.sflag [#allocation3], 1
    %30 = vsyncpa %s29, 0
    loop: start=0, step=1, limit=4
    $region2: #{tpu_custom_call.1} parent=1 // loop_pre_header
      _
    $region3: #{tpu_custom_call.1} parent=1 // loop_header
      %s32 = sphi 0, %s36
      %p33 = scmp.ge.s32.totalorder %s32, 4
      %s42 = sphi 0, %s44
      %s45 = sphi 0, %s42
      %s46 = sphi 0, %s45
      %s62 = sphi 0, %s46
      %s68 = sphi 0, %s70
      %s71 = sphi 0, %s68
      %s72 = sphi 0, %s71
      %s88 = sphi 0, %s72
      %s92 = sphi 0, %s92
      %s94 = sphi 0, %s92
      %s95 = sphi 0, %s94
      %s109 = sphi 0, %s95
      %s113 = sphi 0, %s113
      %s115 = sphi 0, %s113
      %s116 = sphi 0, %s115
      %s130 = sphi 0, %s116
      %s134 = sphi 0, %s134
      %s136 = sphi 0, %s134
      %s137 = sphi 0, %s136
      %s151 = sphi 0, %s137
      %s155 = sphi 0, %s155
      %s157 = sphi 0, %s155
      %s158 = sphi 0, %s157
      %s172 = sphi 0, %s158
      %s176 = sphi 0, %s176
      %s178 = sphi 0, %s176
      %s179 = sphi 0, %s178
      %s193 = sphi 0, %s179
      %s197 = sphi 0, %s197
      %s199 = sphi 0, %s197
      %s200 = sphi 0, %s199
      %s214 = sphi 0, %s200
      %s218 = sphi 0, %s218
      %s220 = sphi 0, %s218
      %s221 = sphi 0, %s220
      %s235 = sphi 0, %s221
      %s239 = sphi 0, %s239
      %s241 = sphi 0, %s239
      %s242 = sphi 0, %s241
      %s256 = sphi 0, %s242
      %s260 = sphi 0, %s260
      %s262 = sphi 0, %s260
      %s263 = sphi 0, %s262
      %s277 = sphi 0, %s263
      %s281 = sphi 0, %s281
      %s283 = sphi 0, %s281
      %s284 = sphi 0, %s283
      %s298 = sphi 0, %s284
      %s302 = sphi 0, %s302
      %s304 = sphi 0, %s302
      %s305 = sphi 0, %s304
      %s319 = sphi 0, %s305
      %s323 = sphi 0, %s323
      %s325 = sphi 0, %s323
      %s326 = sphi 0, %s325
      %s340 = sphi 0, %s326
      %s344 = sphi 0, %s344
      %s346 = sphi 0, %s344
      %s347 = sphi 0, %s346
      %s361 = sphi 0, %s347
      %s365 = sphi 0, %s365
      %s367 = sphi 0, %s365
      %s368 = sphi 0, %s367
      %s382 = sphi 0, %s368
      %s386 = sphi 0, %s386
      %s388 = sphi 0, %s386
      %s389 = sphi 0, %s388
      %s403 = sphi 0, %s389
      %s407 = sphi 0, %s407
      %s409 = sphi 0, %s407
      %s410 = sphi 0, %s409
      %s424 = sphi 0, %s410
      %s428 = sphi 0, %s428
      %s430 = sphi 0, %s428
      %s431 = sphi 0, %s430
      %s445 = sphi 0, %s431
      %s449 = sphi 0, %s449
      %s451 = sphi 0, %s449
      %s452 = sphi 0, %s451
      %s466 = sphi 0, %s452
      %s470 = sphi 0, %s470
      %s472 = sphi 0, %s470
      %s473 = sphi 0, %s472
      %s487 = sphi 0, %s473
      %s491 = sphi 0, %s491
      %s493 = sphi 0, %s491
      %s494 = sphi 0, %s493
      %s508 = sphi 0, %s494
      %s512 = sphi 0, %s512
      %s514 = sphi 0, %s512
      %s515 = sphi 0, %s514
      %s529 = sphi 0, %s515
      %s535 = sphi 0, %s537
      %s538 = sphi 0, %s535
      %s539 = sphi 0, %s538
      %s555 = sphi 0, %s539
    $region4: #{tpu_custom_call.1} parent=1 // loop_header_branch
      %35 = sbr.rel (%p33) target = $region8
    $region5: #{tpu_custom_call.1} parent=1 // loop_body
      %s37 = ssub.s32 %s32, 1
      %s38 = ssub.s32 %s32, 2
      %s39 = sadd.s32 %s32, 1
      %s40 = ssub.s32 %s32, %s39
      %p41 = scmp.eq.s32.totalorder %s40, 0
      %s43 = sadd.s32 %s42, 1
      %s44 = scalar_select %p41, %s42, %s43
      %p47 = pneg %p41
      %p48 = scmp.eq.s32.totalorder %s32, 1
      %p49 = por %p47, %p48
      %p50 = scmp.ne.s32.totalorder %s42, %s45
      %p51 = scmp.eq.s32.totalorder %s32, 0
      %p52 = por %p50, %p51
      %p53 = scmp.ne.s32.totalorder %s42, %s45
      %p54 = scmp.eq.s32.totalorder %s37, 1
      %p55 = por %p53, %p54
      %p56 = scmp.ne.s32.totalorder %s45, %s46
      %p57 = scmp.eq.s32.totalorder %s37, 0
      %p58 = por %p56, %p57
      %p59 = scmp.ne.s32.totalorder %s45, %s46
      %p60 = scmp.eq.s32.totalorder %s38, 1
      %p61 = por %p59, %p60
      %p63 = scmp.ne.s32.totalorder %s46, %s62
      %p64 = scmp.eq.s32.totalorder %s38, 0
      %p65 = por %p63, %p64
      %s66 = ssub.s32 %s32, %s39
      %p67 = scmp.eq.s32.totalorder %s66, 0
      %s69 = sadd.s32 %s68, 1
      %s70 = scalar_select %p67, %s68, %s69
      %p73 = pneg %p67
      %p74 = scmp.eq.s32.totalorder %s32, 1
      %p75 = por %p73, %p74
      %p76 = scmp.ne.s32.totalorder %s68, %s71
      %p77 = scmp.eq.s32.totalorder %s32, 0
      %p78 = por %p76, %p77
      %p79 = scmp.ne.s32.totalorder %s68, %s71
      %p80 = scmp.eq.s32.totalorder %s37, 1
      %p81 = por %p79, %p80
      %p82 = scmp.ne.s32.totalorder %s71, %s72
      %p83 = scmp.eq.s32.totalorder %s37, 0
      %p84 = por %p82, %p83
      %p85 = scmp.ne.s32.totalorder %s71, %s72
      %p86 = scmp.eq.s32.totalorder %s38, 1
      %p87 = por %p85, %p86
      %p89 = scmp.ne.s32.totalorder %s72, %s88
      %p90 = scmp.eq.s32.totalorder %s38, 0
      %p91 = por %p89, %p90
      %s93 = sadd.s32 %s92, 1
      %p96 = scmp.eq.s32.totalorder %s32, 1
      %p97 = scmp.ne.s32.totalorder %s92, %s94
      %p98 = scmp.eq.s32.totalorder %s32, 0
      %p99 = por %p97, %p98
      %p100 = scmp.ne.s32.totalorder %s92, %s94
      %p101 = scmp.eq.s32.totalorder %s37, 1
      %p102 = por %p100, %p101
      %p103 = scmp.ne.s32.totalorder %s94, %s95
      %p104 = scmp.eq.s32.totalorder %s37, 0
      %p105 = por %p103, %p104
      %p106 = scmp.ne.s32.totalorder %s94, %s95
      %p107 = scmp.eq.s32.totalorder %s38, 1
      %p108 = por %p106, %p107
      %p110 = scmp.ne.s32.totalorder %s95, %s109
      %p111 = scmp.eq.s32.totalorder %s38, 0
      %p112 = por %p110, %p111
      %s114 = sadd.s32 %s113, 1
      %p117 = scmp.eq.s32.totalorder %s32, 1
      %p118 = scmp.ne.s32.totalorder %s113, %s115
      %p119 = scmp.eq.s32.totalorder %s32, 0
      %p120 = por %p118, %p119
      %p121 = scmp.ne.s32.totalorder %s113, %s115
      %p122 = scmp.eq.s32.totalorder %s37, 1
      %p123 = por %p121, %p122
      %p124 = scmp.ne.s32.totalorder %s115, %s116
      %p125 = scmp.eq.s32.totalorder %s37, 0
      %p126 = por %p124, %p125
      %p127 = scmp.ne.s32.totalorder %s115, %s116
      %p128 = scmp.eq.s32.totalorder %s38, 1
      %p129 = por %p127, %p128
      %p131 = scmp.ne.s32.totalorder %s116, %s130
      %p132 = scmp.eq.s32.totalorder %s38, 0
      %p133 = por %p131, %p132
      %s135 = sadd.s32 %s134, 1
      %p138 = scmp.eq.s32.totalorder %s32, 1
      %p139 = scmp.ne.s32.totalorder %s134, %s136
      %p140 = scmp.eq.s32.totalorder %s32, 0
      %p141 = por %p139, %p140
      %p142 = scmp.ne.s32.totalorder %s134, %s136
      %p143 = scmp.eq.s32.totalorder %s37, 1
      %p144 = por %p142, %p143
      %p145 = scmp.ne.s32.totalorder %s136, %s137
      %p146 = scmp.eq.s32.totalorder %s37, 0
      %p147 = por %p145, %p146
      %p148 = scmp.ne.s32.totalorder %s136, %s137
      %p149 = scmp.eq.s32.totalorder %s38, 1
      %p150 = por %p148, %p149
      %p152 = scmp.ne.s32.totalorder %s137, %s151
      %p153 = scmp.eq.s32.totalorder %s38, 0
      %p154 = por %p152, %p153
      %s156 = sadd.s32 %s155, 1
      %p159 = scmp.eq.s32.totalorder %s32, 1
      %p160 = scmp.ne.s32.totalorder %s155, %s157
      %p161 = scmp.eq.s32.totalorder %s32, 0
      %p162 = por %p160, %p161
      %p163 = scmp.ne.s32.totalorder %s155, %s157
      %p164 = scmp.eq.s32.totalorder %s37, 1
      %p165 = por %p163, %p164
      %p166 = scmp.ne.s32.totalorder %s157, %s158
      %p167 = scmp.eq.s32.totalorder %s37, 0
      %p168 = por %p166, %p167
      %p169 = scmp.ne.s32.totalorder %s157, %s158
      %p170 = scmp.eq.s32.totalorder %s38, 1
      %p171 = por %p169, %p170
      %p173 = scmp.ne.s32.totalorder %s158, %s172
      %p174 = scmp.eq.s32.totalorder %s38, 0
      %p175 = por %p173, %p174
      %s177 = sadd.s32 %s176, 1
      %p180 = scmp.eq.s32.totalorder %s32, 1
      %p181 = scmp.ne.s32.totalorder %s176, %s178
      %p182 = scmp.eq.s32.totalorder %s32, 0
      %p183 = por %p181, %p182
      %p184 = scmp.ne.s32.totalorder %s176, %s178
      %p185 = scmp.eq.s32.totalorder %s37, 1
      %p186 = por %p184, %p185
      %p187 = scmp.ne.s32.totalorder %s178, %s179
      %p188 = scmp.eq.s32.totalorder %s37, 0
      %p189 = por %p187, %p188
      %p190 = scmp.ne.s32.totalorder %s178, %s179
      %p191 = scmp.eq.s32.totalorder %s38, 1
      %p192 = por %p190, %p191
      %p194 = scmp.ne.s32.totalorder %s179, %s193
      %p195 = scmp.eq.s32.totalorder %s38, 0
      %p196 = por %p194, %p195
      %s198 = sadd.s32 %s197, 1
      %p201 = scmp.eq.s32.totalorder %s32, 1
      %p202 = scmp.ne.s32.totalorder %s197, %s199
      %p203 = scmp.eq.s32.totalorder %s32, 0
      %p204 = por %p202, %p203
      %p205 = scmp.ne.s32.totalorder %s197, %s199
      %p206 = scmp.eq.s32.totalorder %s37, 1
      %p207 = por %p205, %p206
      %p208 = scmp.ne.s32.totalorder %s199, %s200
      %p209 = scmp.eq.s32.totalorder %s37, 0
      %p210 = por %p208, %p209
      %p211 = scmp.ne.s32.totalorder %s199, %s200
      %p212 = scmp.eq.s32.totalorder %s38, 1
      %p213 = por %p211, %p212
      %p215 = scmp.ne.s32.totalorder %s200, %s214
      %p216 = scmp.eq.s32.totalorder %s38, 0
      %p217 = por %p215, %p216
      %s219 = sadd.s32 %s218, 1
      %p222 = scmp.eq.s32.totalorder %s32, 1
      %p223 = scmp.ne.s32.totalorder %s218, %s220
      %p224 = scmp.eq.s32.totalorder %s32, 0
      %p225 = por %p223, %p224
      %p226 = scmp.ne.s32.totalorder %s218, %s220
      %p227 = scmp.eq.s32.totalorder %s37, 1
      %p228 = por %p226, %p227
      %p229 = scmp.ne.s32.totalorder %s220, %s221
      %p230 = scmp.eq.s32.totalorder %s37, 0
      %p231 = por %p229, %p230
      %p232 = scmp.ne.s32.totalorder %s220, %s221
      %p233 = scmp.eq.s32.totalorder %s38, 1
      %p234 = por %p232, %p233
      %p236 = scmp.ne.s32.totalorder %s221, %s235
      %p237 = scmp.eq.s32.totalorder %s38, 0
      %p238 = por %p236, %p237
      %s240 = sadd.s32 %s239, 1
      %p243 = scmp.eq.s32.totalorder %s32, 1
      %p244 = scmp.ne.s32.totalorder %s239, %s241
      %p245 = scmp.eq.s32.totalorder %s32, 0
      %p246 = por %p244, %p245
      %p247 = scmp.ne.s32.totalorder %s239, %s241
      %p248 = scmp.eq.s32.totalorder %s37, 1
      %p249 = por %p247, %p248
      %p250 = scmp.ne.s32.totalorder %s241, %s242
      %p251 = scmp.eq.s32.totalorder %s37, 0
      %p252 = por %p250, %p251
      %p253 = scmp.ne.s32.totalorder %s241, %s242
      %p254 = scmp.eq.s32.totalorder %s38, 1
      %p255 = por %p253, %p254
      %p257 = scmp.ne.s32.totalorder %s242, %s256
      %p258 = scmp.eq.s32.totalorder %s38, 0
      %p259 = por %p257, %p258
      %s261 = sadd.s32 %s260, 1
      %p264 = scmp.eq.s32.totalorder %s32, 1
      %p265 = scmp.ne.s32.totalorder %s260, %s262
      %p266 = scmp.eq.s32.totalorder %s32, 0
      %p267 = por %p265, %p266
      %p268 = scmp.ne.s32.totalorder %s260, %s262
      %p269 = scmp.eq.s32.totalorder %s37, 1
      %p270 = por %p268, %p269
      %p271 = scmp.ne.s32.totalorder %s262, %s263
      %p272 = scmp.eq.s32.totalorder %s37, 0
      %p273 = por %p271, %p272
      %p274 = scmp.ne.s32.totalorder %s262, %s263
      %p275 = scmp.eq.s32.totalorder %s38, 1
      %p276 = por %p274, %p275
      %p278 = scmp.ne.s32.totalorder %s263, %s277
      %p279 = scmp.eq.s32.totalorder %s38, 0
      %p280 = por %p278, %p279
      %s282 = sadd.s32 %s281, 1
      %p285 = scmp.eq.s32.totalorder %s32, 1
      %p286 = scmp.ne.s32.totalorder %s281, %s283
      %p287 = scmp.eq.s32.totalorder %s32, 0
      %p288 = por %p286, %p287
      %p289 = scmp.ne.s32.totalorder %s281, %s283
      %p290 = scmp.eq.s32.totalorder %s37, 1
      %p291 = por %p289, %p290
      %p292 = scmp.ne.s32.totalorder %s283, %s284
      %p293 = scmp.eq.s32.totalorder %s37, 0
      %p294 = por %p292, %p293
      %p295 = scmp.ne.s32.totalorder %s283, %s284
      %p296 = scmp.eq.s32.totalorder %s38, 1
      %p297 = por %p295, %p296
      %p299 = scmp.ne.s32.totalorder %s284, %s298
      %p300 = scmp.eq.s32.totalorder %s38, 0
      %p301 = por %p299, %p300
      %s303 = sadd.s32 %s302, 1
      %p306 = scmp.eq.s32.totalorder %s32, 1
      %p307 = scmp.ne.s32.totalorder %s302, %s304
      %p308 = scmp.eq.s32.totalorder %s32, 0
      %p309 = por %p307, %p308
      %p310 = scmp.ne.s32.totalorder %s302, %s304
      %p311 = scmp.eq.s32.totalorder %s37, 1
      %p312 = por %p310, %p311
      %p313 = scmp.ne.s32.totalorder %s304, %s305
      %p314 = scmp.eq.s32.totalorder %s37, 0
      %p315 = por %p313, %p314
      %p316 = scmp.ne.s32.totalorder %s304, %s305
      %p317 = scmp.eq.s32.totalorder %s38, 1
      %p318 = por %p316, %p317
      %p320 = scmp.ne.s32.totalorder %s305, %s319
      %p321 = scmp.eq.s32.totalorder %s38, 0
      %p322 = por %p320, %p321
      %s324 = sadd.s32 %s323, 1
      %p327 = scmp.eq.s32.totalorder %s32, 1
      %p328 = scmp.ne.s32.totalorder %s323, %s325
      %p329 = scmp.eq.s32.totalorder %s32, 0
      %p330 = por %p328, %p329
      %p331 = scmp.ne.s32.totalorder %s323, %s325
      %p332 = scmp.eq.s32.totalorder %s37, 1
      %p333 = por %p331, %p332
      %p334 = scmp.ne.s32.totalorder %s325, %s326
      %p335 = scmp.eq.s32.totalorder %s37, 0
      %p336 = por %p334, %p335
      %p337 = scmp.ne.s32.totalorder %s325, %s326
      %p338 = scmp.eq.s32.totalorder %s38, 1
      %p339 = por %p337, %p338
      %p341 = scmp.ne.s32.totalorder %s326, %s340
      %p342 = scmp.eq.s32.totalorder %s38, 0
      %p343 = por %p341, %p342
      %s345 = sadd.s32 %s344, 1
      %p348 = scmp.eq.s32.totalorder %s32, 1
      %p349 = scmp.ne.s32.totalorder %s344, %s346
      %p350 = scmp.eq.s32.totalorder %s32, 0
      %p351 = por %p349, %p350
      %p352 = scmp.ne.s32.totalorder %s344, %s346
      %p353 = scmp.eq.s32.totalorder %s37, 1
      %p354 = por %p352, %p353
      %p355 = scmp.ne.s32.totalorder %s346, %s347
      %p356 = scmp.eq.s32.totalorder %s37, 0
      %p357 = por %p355, %p356
      %p358 = scmp.ne.s32.totalorder %s346, %s347
      %p359 = scmp.eq.s32.totalorder %s38, 1
      %p360 = por %p358, %p359
      %p362 = scmp.ne.s32.totalorder %s347, %s361
      %p363 = scmp.eq.s32.totalorder %s38, 0
      %p364 = por %p362, %p363
      %s366 = sadd.s32 %s365, 1
      %p369 = scmp.eq.s32.totalorder %s32, 1
      %p370 = scmp.ne.s32.totalorder %s365, %s367
      %p371 = scmp.eq.s32.totalorder %s32, 0
      %p372 = por %p370, %p371
      %p373 = scmp.ne.s32.totalorder %s365, %s367
      %p374 = scmp.eq.s32.totalorder %s37, 1
      %p375 = por %p373, %p374
      %p376 = scmp.ne.s32.totalorder %s367, %s368
      %p377 = scmp.eq.s32.totalorder %s37, 0
      %p378 = por %p376, %p377
      %p379 = scmp.ne.s32.totalorder %s367, %s368
      %p380 = scmp.eq.s32.totalorder %s38, 1
      %p381 = por %p379, %p380
      %p383 = scmp.ne.s32.totalorder %s368, %s382
      %p384 = scmp.eq.s32.totalorder %s38, 0
      %p385 = por %p383, %p384
      %s387 = sadd.s32 %s386, 1
      %p390 = scmp.eq.s32.totalorder %s32, 1
      %p391 = scmp.ne.s32.totalorder %s386, %s388
      %p392 = scmp.eq.s32.totalorder %s32, 0
      %p393 = por %p391, %p392
      %p394 = scmp.ne.s32.totalorder %s386, %s388
      %p395 = scmp.eq.s32.totalorder %s37, 1
      %p396 = por %p394, %p395
      %p397 = scmp.ne.s32.totalorder %s388, %s389
      %p398 = scmp.eq.s32.totalorder %s37, 0
      %p399 = por %p397, %p398
      %p400 = scmp.ne.s32.totalorder %s388, %s389
      %p401 = scmp.eq.s32.totalorder %s38, 1
      %p402 = por %p400, %p401
      %p404 = scmp.ne.s32.totalorder %s389, %s403
      %p405 = scmp.eq.s32.totalorder %s38, 0
      %p406 = por %p404, %p405
      %s408 = sadd.s32 %s407, 1
      %p411 = scmp.eq.s32.totalorder %s32, 1
      %p412 = scmp.ne.s32.totalorder %s407, %s409
      %p413 = scmp.eq.s32.totalorder %s32, 0
      %p414 = por %p412, %p413
      %p415 = scmp.ne.s32.totalorder %s407, %s409
      %p416 = scmp.eq.s32.totalorder %s37, 1
      %p417 = por %p415, %p416
      %p418 = scmp.ne.s32.totalorder %s409, %s410
      %p419 = scmp.eq.s32.totalorder %s37, 0
      %p420 = por %p418, %p419
      %p421 = scmp.ne.s32.totalorder %s409, %s410
      %p422 = scmp.eq.s32.totalorder %s38, 1
      %p423 = por %p421, %p422
      %p425 = scmp.ne.s32.totalorder %s410, %s424
      %p426 = scmp.eq.s32.totalorder %s38, 0
      %p427 = por %p425, %p426
      %s429 = sadd.s32 %s428, 1
      %p432 = scmp.eq.s32.totalorder %s32, 1
      %p433 = scmp.ne.s32.totalorder %s428, %s430
      %p434 = scmp.eq.s32.totalorder %s32, 0
      %p435 = por %p433, %p434
      %p436 = scmp.ne.s32.totalorder %s428, %s430
      %p437 = scmp.eq.s32.totalorder %s37, 1
      %p438 = por %p436, %p437
      %p439 = scmp.ne.s32.totalorder %s430, %s431
      %p440 = scmp.eq.s32.totalorder %s37, 0
      %p441 = por %p439, %p440
      %p442 = scmp.ne.s32.totalorder %s430, %s431
      %p443 = scmp.eq.s32.totalorder %s38, 1
      %p444 = por %p442, %p443
      %p446 = scmp.ne.s32.totalorder %s431, %s445
      %p447 = scmp.eq.s32.totalorder %s38, 0
      %p448 = por %p446, %p447
      %s450 = sadd.s32 %s449, 1
      %p453 = scmp.eq.s32.totalorder %s32, 1
      %p454 = scmp.ne.s32.totalorder %s449, %s451
      %p455 = scmp.eq.s32.totalorder %s32, 0
      %p456 = por %p454, %p455
      %p457 = scmp.ne.s32.totalorder %s449, %s451
      %p458 = scmp.eq.s32.totalorder %s37, 1
      %p459 = por %p457, %p458
      %p460 = scmp.ne.s32.totalorder %s451, %s452
      %p461 = scmp.eq.s32.totalorder %s37, 0
      %p462 = por %p460, %p461
      %p463 = scmp.ne.s32.totalorder %s451, %s452
      %p464 = scmp.eq.s32.totalorder %s38, 1
      %p465 = por %p463, %p464
      %p467 = scmp.ne.s32.totalorder %s452, %s466
      %p468 = scmp.eq.s32.totalorder %s38, 0
      %p469 = por %p467, %p468
      %s471 = sadd.s32 %s470, 1
      %p474 = scmp.eq.s32.totalorder %s32, 1
      %p475 = scmp.ne.s32.totalorder %s470, %s472
      %p476 = scmp.eq.s32.totalorder %s32, 0
      %p477 = por %p475, %p476
      %p478 = scmp.ne.s32.totalorder %s470, %s472
      %p479 = scmp.eq.s32.totalorder %s37, 1
      %p480 = por %p478, %p479
      %p481 = scmp.ne.s32.totalorder %s472, %s473
      %p482 = scmp.eq.s32.totalorder %s37, 0
      %p483 = por %p481, %p482
      %p484 = scmp.ne.s32.totalorder %s472, %s473
      %p485 = scmp.eq.s32.totalorder %s38, 1
      %p486 = por %p484, %p485
      %p488 = scmp.ne.s32.totalorder %s473, %s487
      %p489 = scmp.eq.s32.totalorder %s38, 0
      %p490 = por %p488, %p489
      %s492 = sadd.s32 %s491, 1
      %p495 = scmp.eq.s32.totalorder %s32, 1
      %p496 = scmp.ne.s32.totalorder %s491, %s493
      %p497 = scmp.eq.s32.totalorder %s32, 0
      %p498 = por %p496, %p497
      %p499 = scmp.ne.s32.totalorder %s491, %s493
      %p500 = scmp.eq.s32.totalorder %s37, 1
      %p501 = por %p499, %p500
      %p502 = scmp.ne.s32.totalorder %s493, %s494
      %p503 = scmp.eq.s32.totalorder %s37, 0
      %p504 = por %p502, %p503
      %p505 = scmp.ne.s32.totalorder %s493, %s494
      %p506 = scmp.eq.s32.totalorder %s38, 1
      %p507 = por %p505, %p506
      %p509 = scmp.ne.s32.totalorder %s494, %s508
      %p510 = scmp.eq.s32.totalorder %s38, 0
      %p511 = por %p509, %p510
      %s513 = sadd.s32 %s512, 1
      %p516 = scmp.eq.s32.totalorder %s32, 1
      %p517 = scmp.ne.s32.totalorder %s512, %s514
      %p518 = scmp.eq.s32.totalorder %s32, 0
      %p519 = por %p517, %p518
      %p520 = scmp.ne.s32.totalorder %s512, %s514
      %p521 = scmp.eq.s32.totalorder %s37, 1
      %p522 = por %p520, %p521
      %p523 = scmp.ne.s32.totalorder %s514, %s515
      %p524 = scmp.eq.s32.totalorder %s37, 0
      %p525 = por %p523, %p524
      %p526 = scmp.ne.s32.totalorder %s514, %s515
      %p527 = scmp.eq.s32.totalorder %s38, 1
      %p528 = por %p526, %p527
      %p530 = scmp.ne.s32.totalorder %s515, %s529
      %p531 = scmp.eq.s32.totalorder %s38, 0
      %p532 = por %p530, %p531
      %s533 = ssub.s32 %s32, %s39
      %p534 = scmp.eq.s32.totalorder %s533, 0
      %s536 = sadd.s32 %s535, 1
      %s537 = scalar_select %p534, %s535, %s536
      %p540 = pneg %p534
      %p541 = scmp.eq.s32.totalorder %s32, 1
      %p542 = por %p540, %p541
      %p543 = scmp.ne.s32.totalorder %s535, %s538
      %p544 = scmp.eq.s32.totalorder %s32, 0
      %p545 = por %p543, %p544
      %p546 = scmp.ne.s32.totalorder %s535, %s538
      %p547 = scmp.eq.s32.totalorder %s37, 1
      %p548 = por %p546, %p547
      %p549 = scmp.ne.s32.totalorder %s538, %s539
      %p550 = scmp.eq.s32.totalorder %s37, 0
      %p551 = por %p549, %p550
      %p552 = scmp.ne.s32.totalorder %s538, %s539
      %p553 = scmp.eq.s32.totalorder %s38, 1
      %p554 = por %p552, %p553
      %p556 = scmp.ne.s32.totalorder %s539, %s555
      %p557 = scmp.eq.s32.totalorder %s38, 0
      %p558 = por %p556, %p557
      %p559 = scmp.le.s32.totalorder 1, %s32
      %p560 = scmp.lt.s32.totalorder %s32, 3
      %p561 = pnand %p559, %p560
      %p562 = pneg %p561
      // Predicated region
      $region9: #{tpu_custom_call.1} parent=5 // pred_check
        _
      $region10: #{tpu_custom_call.1} parent=5 // pred_check_branch
        %564 = sbr.rel (%p561) target = $region12
      $region11: #{tpu_custom_call.1} parent=5 // pred_region
        %s565 = ssub.s32 %s32, 1
        // Predicated region
        $region13: #{tpu_custom_call.1} parent=11 // pred_check
          %p566 = pneg %p105
        $region14: #{tpu_custom_call.1} parent=11 // pred_check_branch
          %568 = sbr.rel (%p566) target = $region16
        $region15: #{tpu_custom_call.1} parent=11 // pred_region
          _
        $region16: #{tpu_custom_call.1} parent=11 // pred_fallthru
          _
        // Predicated region
        $region17: #{tpu_custom_call.1} parent=11 // pred_check
          %p569 = pneg %p126
        $region18: #{tpu_custom_call.1} parent=11 // pred_check_branch
          %571 = sbr.rel (%p569) target = $region20
        $region19: #{tpu_custom_call.1} parent=11 // pred_region
          _
        $region20: #{tpu_custom_call.1} parent=11 // pred_fallthru
          _
        // Predicated region
        $region21: #{tpu_custom_call.1} parent=11 // pred_check
          %p572 = pneg %p147
        $region22: #{tpu_custom_call.1} parent=11 // pred_check_branch
          %574 = sbr.rel (%p572) target = $region24
        $region23: #{tpu_custom_call.1} parent=11 // pred_region
          _
        $region24: #{tpu_custom_call.1} parent=11 // pred_fallthru
          _
        // Predicated region
        $region25: #{tpu_custom_call.1} parent=11 // pred_check
          %p575 = pneg %p168
        $region26: #{tpu_custom_call.1} parent=11 // pred_check_branch
          %577 = sbr.rel (%p575) target = $region28
        $region27: #{tpu_custom_call.1} parent=11 // pred_region
          _
        $region28: #{tpu_custom_call.1} parent=11 // pred_fallthru
          _
        // Predicated region
        $region29: #{tpu_custom_call.1} parent=11 // pred_check
          %p578 = pneg %p189
        $region30: #{tpu_custom_call.1} parent=11 // pred_check_branch
          %580 = sbr.rel (%p578) target = $region32
        $region31: #{tpu_custom_call.1} parent=11 // pred_region
          _
        $region32: #{tpu_custom_call.1} parent=11 // pred_fallthru
          _
        // Predicated region
        $region33: #{tpu_custom_call.1} parent=11 // pred_check
          %p581 = pneg %p210
        $region34: #{tpu_custom_call.1} parent=11 // pred_check_branch
          %583 = sbr.rel (%p581) target = $region36
        $region35: #{tpu_custom_call.1} parent=11 // pred_region
          _
        $region36: #{tpu_custom_call.1} parent=11 // pred_fallthru
          _
        // Predicated region
        $region37: #{tpu_custom_call.1} parent=11 // pred_check
          %p584 = pneg %p231
        $region38: #{tpu_custom_call.1} parent=11 // pred_check_branch
          %586 = sbr.rel (%p584) target = $region40
        $region39: #{tpu_custom_call.1} parent=11 // pred_region
          _
        $region40: #{tpu_custom_call.1} parent=11 // pred_fallthru
          _
        // Predicated region
        $region41: #{tpu_custom_call.1} parent=11 // pred_check
          %p587 = pneg %p252
        $region42: #{tpu_custom_call.1} parent=11 // pred_check_branch
          %589 = sbr.rel (%p587) target = $region44
        $region43: #{tpu_custom_call.1} parent=11 // pred_region
          _
        $region44: #{tpu_custom_call.1} parent=11 // pred_fallthru
          _
        // Predicated region
        $region45: #{tpu_custom_call.1} parent=11 // pred_check
          %p590 = pneg %p273
        $region46: #{tpu_custom_call.1} parent=11 // pred_check_branch
          %592 = sbr.rel (%p590) target = $region48
        $region47: #{tpu_custom_call.1} parent=11 // pred_region
          _
        $region48: #{tpu_custom_call.1} parent=11 // pred_fallthru
          _
        // Predicated region
        $region49: #{tpu_custom_call.1} parent=11 // pred_check
          %p593 = pneg %p294
        $region50: #{tpu_custom_call.1} parent=11 // pred_check_branch
          %595 = sbr.rel (%p593) target = $region52
        $region51: #{tpu_custom_call.1} parent=11 // pred_region
          _
        $region52: #{tpu_custom_call.1} parent=11 // pred_fallthru
          _
        // Predicated region
        $region53: #{tpu_custom_call.1} parent=11 // pred_check
          %p596 = pneg %p315
        $region54: #{tpu_custom_call.1} parent=11 // pred_check_branch
          %598 = sbr.rel (%p596) target = $region56
        $region55: #{tpu_custom_call.1} parent=11 // pred_region
          _
        $region56: #{tpu_custom_call.1} parent=11 // pred_fallthru
          _
        // Predicated region
        $region57: #{tpu_custom_call.1} parent=11 // pred_check
          %p599 = pneg %p336
        $region58: #{tpu_custom_call.1} parent=11 // pred_check_branch
          %601 = sbr.rel (%p599) target = $region60
        $region59: #{tpu_custom_call.1} parent=11 // pred_region
          _
        $region60: #{tpu_custom_call.1} parent=11 // pred_fallthru
          _
        // Predicated region
        $region61: #{tpu_custom_call.1} parent=11 // pred_check
          %p602 = pneg %p357
        $region62: #{tpu_custom_call.1} parent=11 // pred_check_branch
          %604 = sbr.rel (%p602) target = $region64
        $region63: #{tpu_custom_call.1} parent=11 // pred_region
          _
        $region64: #{tpu_custom_call.1} parent=11 // pred_fallthru
          _
        // Predicated region
        $region65: #{tpu_custom_call.1} parent=11 // pred_check
          %p605 = pneg %p378
        $region66: #{tpu_custom_call.1} parent=11 // pred_check_branch
          %607 = sbr.rel (%p605) target = $region68
        $region67: #{tpu_custom_call.1} parent=11 // pred_region
          _
        $region68: #{tpu_custom_call.1} parent=11 // pred_fallthru
          _
        // Predicated region
        $region69: #{tpu_custom_call.1} parent=11 // pred_check
          %p608 = pneg %p399
        $region70: #{tpu_custom_call.1} parent=11 // pred_check_branch
          %610 = sbr.rel (%p608) target = $region72
        $region71: #{tpu_custom_call.1} parent=11 // pred_region
          _
        $region72: #{tpu_custom_call.1} parent=11 // pred_fallthru
          _
        // Predicated region
        $region73: #{tpu_custom_call.1} parent=11 // pred_check
          %p611 = pneg %p420
        $region74: #{tpu_custom_call.1} parent=11 // pred_check_branch
          %613 = sbr.rel (%p611) target = $region76
        $region75: #{tpu_custom_call.1} parent=11 // pred_region
          _
        $region76: #{tpu_custom_call.1} parent=11 // pred_fallthru
          _
        // Predicated region
        $region77: #{tpu_custom_call.1} parent=11 // pred_check
          %p614 = pneg %p441
        $region78: #{tpu_custom_call.1} parent=11 // pred_check_branch
          %616 = sbr.rel (%p614) target = $region80
        $region79: #{tpu_custom_call.1} parent=11 // pred_region
          _
        $region80: #{tpu_custom_call.1} parent=11 // pred_fallthru
          _
        // Predicated region
        $region81: #{tpu_custom_call.1} parent=11 // pred_check
          %p617 = pneg %p462
        $region82: #{tpu_custom_call.1} parent=11 // pred_check_branch
          %619 = sbr.rel (%p617) target = $region84
        $region83: #{tpu_custom_call.1} parent=11 // pred_region
          _
        $region84: #{tpu_custom_call.1} parent=11 // pred_fallthru
          _
        // Predicated region
        $region85: #{tpu_custom_call.1} parent=11 // pred_check
          %p620 = pneg %p483
        $region86: #{tpu_custom_call.1} parent=11 // pred_check_branch
          %622 = sbr.rel (%p620) target = $region88
        $region87: #{tpu_custom_call.1} parent=11 // pred_region
          _
        $region88: #{tpu_custom_call.1} parent=11 // pred_fallthru
          _
        // Predicated region
        $region89: #{tpu_custom_call.1} parent=11 // pred_check
          %p623 = pneg %p504
        $region90: #{tpu_custom_call.1} parent=11 // pred_check_branch
          %625 = sbr.rel (%p623) target = $region92
        $region91: #{tpu_custom_call.1} parent=11 // pred_region
          _
        $region92: #{tpu_custom_call.1} parent=11 // pred_fallthru
          _
        // Predicated region
        $region93: #{tpu_custom_call.1} parent=11 // pred_check
          %p626 = pneg %p525
        $region94: #{tpu_custom_call.1} parent=11 // pred_check_branch
          %628 = sbr.rel (%p626) target = $region96
        $region95: #{tpu_custom_call.1} parent=11 // pred_region
          _
        $region96: #{tpu_custom_call.1} parent=11 // pred_fallthru
          _
      $region12: #{tpu_custom_call.1} parent=5 // pred_fallthru
        _
      %p629 = scmp.lt.s32.totalorder %s32, 2
      // Predicated region
      $region97: #{tpu_custom_call.1} parent=5 // pred_check
        %p630 = pneg %p629
      $region98: #{tpu_custom_call.1} parent=5 // pred_check_branch
        %632 = sbr.rel (%p630) target = $region100
      $region99: #{tpu_custom_call.1} parent=5 // pred_region
        // Predicated region
        $region101: #{tpu_custom_call.1} parent=99 // pred_check
          %p633 = pneg %p52
        $region102: #{tpu_custom_call.1} parent=99 // pred_check_branch
          %635 = sbr.rel (%p633) target = $region104
        $region103: #{tpu_custom_call.1} parent=99 // pred_region
          %p636 = scmp.lt.s32.totalorder %s32, 1
          %s637 = scalar_select %p636, %s32, 1
          %s638 = smul.addr %s637, 8
          %s639 = scalar_lea.vmem %s0, %s638
        $region104: #{tpu_custom_call.1} parent=99 // pred_fallthru
          _
        // Predicated region
        $region105: #{tpu_custom_call.1} parent=99 // pred_check
          %p640 = pneg %p78
        $region106: #{tpu_custom_call.1} parent=99 // pred_check_branch
          %642 = sbr.rel (%p640) target = $region108
        $region107: #{tpu_custom_call.1} parent=99 // pred_region
          %p643 = scmp.lt.s32.totalorder %s32, 1
          %s644 = scalar_select %p643, %s32, 1
          %s645 = smul.addr %s644, 8
          %s646 = scalar_lea.vmem %s1, %s645
        $region108: #{tpu_custom_call.1} parent=99 // pred_fallthru
          _
      $region100: #{tpu_custom_call.1} parent=5 // pred_fallthru
        _
      %p647 = scmp.le.s32.totalorder 1, %s32
      %p648 = scmp.lt.s32.totalorder %s32, 3
      %p649 = pnand %p647, %p648
      %p650 = pneg %p649
      // Predicated region
      $region109: #{tpu_custom_call.1} parent=5 // pred_check
        _
      $region110: #{tpu_custom_call.1} parent=5 // pred_check_branch
        %652 = sbr.rel (%p649) target = $region112
      $region111: #{tpu_custom_call.1} parent=5 // pred_region
        %s653 = ssub.s32 %s32, 1
        %p654 = scmp.lt.s32.totalorder %s37, 1
        %s655 = scalar_select %p654, %s37, 1
        %s656 = smul.addr %s655, 8
        %s657 = scalar_lea.vmem %s0, %s656
        %p658 = pneg %p58
        %p659 = pneg %p55
        %p660 = scmp.lt.s32.totalorder %s37, 1
        %s661 = scalar_select %p660, %s37, 1
        %s662 = smul.addr %s661, 8
        %s663 = scalar_lea.vmem %s1, %s662
        %p664 = pneg %p84
        %p665 = pneg %p81
        %p666 = pneg %p105
        %p667 = pneg %p102
        %p668 = pneg %p126
        %p669 = pneg %p123
        %p670 = pneg %p147
        %p671 = pneg %p144
        %p672 = pneg %p168
        %p673 = pneg %p165
        %p674 = pneg %p189
        %p675 = pneg %p186
        %p676 = pneg %p210
        %p677 = pneg %p207
        %p678 = pneg %p231
        %p679 = pneg %p228
        %p680 = pneg %p252
        %p681 = pneg %p249
        %p682 = pneg %p273
        %p683 = pneg %p270
        %p684 = pneg %p294
        %p685 = pneg %p291
        %p686 = pneg %p315
        %p687 = pneg %p312
        %p688 = pneg %p336
        %p689 = pneg %p333
        %p690 = pneg %p357
        %p691 = pneg %p354
        %p692 = pneg %p378
        %p693 = pneg %p375
        %p694 = pneg %p399
        %p695 = pneg %p396
        %p696 = pneg %p420
        %p697 = pneg %p417
        %p698 = pneg %p441
        %p699 = pneg %p438
        %p700 = pneg %p462
        %p701 = pneg %p459
        %p702 = pneg %p483
        %p703 = pneg %p480
        %p704 = pneg %p504
        %p705 = pneg %p501
        %p706 = pneg %p525
        %p707 = pneg %p522
        %p708 = pneg %p551
        %p709 = pneg %p548
        %s710 = sand.u32 %s538, 1
        %s711 = scalar_lea.sflag [#allocation3], %s710
        %s712 = sand.u32 %s538, 1
        %s713 = smul.addr %s712, 8
        %s714 = scalar_lea.vmem [#allocation2], %s713
        %p715 = scmp.lt.s32.totalorder %s37, 1
        %s716 = scalar_select %p715, %s37, 1
        %s717 = smul.addr %s716, 8
        %s718 = scalar_lea.vmem %s0, %s717
        %p719 = scmp.lt.s32.totalorder %s37, 1
        %s720 = scalar_select %p719, %s37, 1
        %s721 = smul.addr %s720, 8
        %s722 = scalar_lea.vmem %s1, %s721
        %v724 = vld [vmem:[%s718] sm:$0xff]
        %v725 = vld [vmem:[%s722] sm:$0xff]
        %v726 = vpack.c.bf16 %v724, %v724
        %v727 = vld [vmem:[%s11] sm:$0xf]
        %v728 = vld [vmem:[%s11 + $0x4] sm:$0xf]
        %v729 = vld [vmem:[%s11 + $0x8] sm:$0xf]
        %v730 = vld [vmem:[%s11 + $0xc] sm:$0xf]
        %v735 = vunpack.c.l.b16 %v727
        %v736 = vunpack.c.l.b16 %v728
        %v737 = vunpack.c.l.b16 %v729
        %v738 = vunpack.c.l.b16 %v730
        %v739 = vpack.c.b16 %v736, %v735
        %v740 = vpack.c.b16 %v738, %v737
        %vm743 = vcmask 261120
        %v745 = vsel %vm743, %v726, 0
        %747 = vmatprep.subr.bf16.mxu0 0
        %748 = vmatpush1.bf16.msra.mxu0 0
        %749 = vmatprep.subr.bf16.mxu0 0
        %750 = vmatpush1.bf16.msra.mxu0 0
        %751 = vmatprep.subr.bf16.mxu0 0
        %752 = vmatpush1.bf16.msra.mxu0 0
        %753 = vmatprep.subr.bf16.mxu0 0
        %754 = vmatpush1.bf16.msra.mxu0 0
        %755 = vmatprep.subr.bf16.mxu0 0
        %756 = vmatpush1.bf16.msra.mxu0 0
        %757 = vmatprep.subr.bf16.mxu0 0
        %758 = vmatpush1.bf16.msra.mxu0 0
        %759 = vmatprep.subr.bf16.mxu0 0
        %760 = vmatpush1.bf16.msra.mxu0 %v740
        %761 = vmatprep.subr.bf16.mxu0 0
        %762 = vmatpush1.bf16.msra.mxu0 %v739
        %763 = vmatprep.subr.bf16.mxu0 0
        %764 = vmatpush2.bf16.msra.mxu0 0
        %765 = vmatprep.subr.bf16.mxu0 0
        %766 = vmatpush2.bf16.msra.mxu0 0
        %767 = vmatprep.subr.bf16.mxu0 0
        %768 = vmatpush2.bf16.msra.mxu0 0
        %769 = vmatprep.subr.bf16.mxu0 0
        %770 = vmatpush2.bf16.msra.mxu0 0
        %771 = vmatprep.subr.bf16.mxu0 0
        %772 = vmatpush2.bf16.msra.mxu0 0
        %773 = vmatprep.subr.bf16.mxu0 0
        %774 = vmatpush2.bf16.msra.mxu0 0
        %775 = vmatprep.subr.bf16.mxu0 0
        %776 = vmatpush2.bf16.msra.mxu0 0
        %777 = vmatprep.subr.bf16.mxu0 0
        %778 = vmatpush2.bf16.msra.mxu0 0
        %779 = vmatprep.mubr.bf16.mxu0 0
        %780 = vmatmul.mubr.bf16.gmra.mxu0 %v745
        %v781 = vpop.f32.mrf.mxu0
        %v782 = vadd.f32 0.0, %v781
        %v783 = vpop.f32.mrf.mxu0
        %v784 = vpop.f32.mrf.mxu0
        %v785 = vpop.f32.mrf.mxu0
        %786 = vdwg.mxu0
        %v787 = vpack.c.bf16 %v782, %v782
        %v788 = vld [vmem:[%s4] sm:$0xff]
        %v789 = vld [vmem:[%s4 + $0x8] sm:$0xff]
        %v790 = vld [vmem:[%s4 + $0x10] sm:$0xff]
        %v791 = vld [vmem:[%s4 + $0x18] sm:$0xff]
        %v792 = vld [vmem:[%s4 + $0x20] sm:$0xff]
        %v793 = vld [vmem:[%s4 + $0x28] sm:$0xff]
        %v794 = vld [vmem:[%s4 + $0x30] sm:$0xff]
        %vm795 = vcmask 64512
        %v797 = vsel %vm795, %v788, 0
        %v800 = vsel %vm795, %v789, 0
        %v803 = vsel %vm795, %v790, 0
        %v806 = vsel %vm795, %v791, 0
        %v809 = vsel %vm795, %v792, 0
        %v812 = vsel %vm795, %v793, 0
        %v815 = vsel %vm795, %v794, 0
        %817 = vmatprep.subr.mxu0 0.0
        %818 = vmatpush1.msra.mxu0 0.0
        %819 = vmatprep.subr.mxu0 0.0
        %820 = vmatpush1.msra.mxu0 0.0
        %821 = vmatprep.subr.mxu0 0.0
        %822 = vmatpush1.msra.mxu0 0.0
        %823 = vmatprep.subr.mxu0 0.0
        %824 = vmatpush1.msra.mxu0 0.0
        %825 = vmatprep.subr.mxu0 0.0
        %826 = vmatpush1.msra.mxu0 0.0
        %827 = vmatprep.subr.mxu0 0.0
        %828 = vmatpush1.msra.mxu0 0.0
        %829 = vmatprep.subr.mxu0 0.0
        %830 = vmatpush1.msra.mxu0 0.0
        %831 = vmatprep.subr.mxu0 0.0
        %832 = vmatpush1.msra.mxu0 0.0
        %833 = vmatprep.subr.mxu0 0.0
        %834 = vmatpush1.msra.mxu0 0.0
        %835 = vmatprep.subr.mxu0 0.0
        %836 = vmatpush1.msra.mxu0 0.0
        %837 = vmatprep.subr.mxu0 0.0
        %838 = vmatpush1.msra.mxu0 0.0
        %839 = vmatprep.subr.mxu0 0.0
        %840 = vmatpush1.msra.mxu0 0.0
        %841 = vmatprep.subr.mxu0 0.0
        %842 = vmatpush1.msra.mxu0 0.0
        %843 = vmatprep.subr.mxu0 0.0
        %844 = vmatpush1.msra.mxu0 0.0
        %845 = vmatprep.subr.mxu0 0.0
        %846 = vmatpush1.msra.mxu0 0.0
        %847 = vmatprep.subr.mxu0 0.0
        %848 = vmatpush1.msra.mxu0 %v725
        %849 = vmatprep.subr.mxu0 0.0
        %850 = vmatpush2.msra.mxu0 0.0
        %851 = vmatprep.subr.mxu0 0.0
        %852 = vmatpush2.msra.mxu0 0.0
        %853 = vmatprep.subr.mxu0 0.0
        %854 = vmatpush2.msra.mxu0 0.0
        %855 = vmatprep.subr.mxu0 0.0
        %856 = vmatpush2.msra.mxu0 0.0
        %857 = vmatprep.subr.mxu0 0.0
        %858 = vmatpush2.msra.mxu0 0.0
        %859 = vmatprep.subr.mxu0 0.0
        %860 = vmatpush2.msra.mxu0 0.0
        %861 = vmatprep.subr.mxu0 0.0
        %862 = vmatpush2.msra.mxu0 0.0
        %863 = vmatprep.subr.mxu0 0.0
        %864 = vmatpush2.msra.mxu0 0.0
        %865 = vmatprep.subr.mxu0 0.0
        %866 = vmatpush2.msra.mxu0 0.0
        %867 = vmatprep.subr.mxu0 0.0
        %868 = vmatpush2.msra.mxu0 0.0
        %869 = vmatprep.subr.mxu0 0.0
        %870 = vmatpush2.msra.mxu0 0.0
        %871 = vmatprep.subr.mxu0 0.0
        %872 = vmatpush2.msra.mxu0 0.0
        %873 = vmatprep.subr.mxu0 0.0
        %874 = vmatpush2.msra.mxu0 0.0
        %875 = vmatprep.subr.mxu0 0.0
        %876 = vmatpush2.msra.mxu0 0.0
        %877 = vmatprep.subr.mxu0 0.0
        %878 = vmatpush2.msra.mxu0 0.0
        %879 = vmatprep.subr.mxu0 0.0
        %880 = vmatpush2.msra.mxu0 0.0
        %881 = vmatprep.mubr.f32.mxu0 0.0
        %882 = vmatmul.mubr.f32.gmra.mxu0 %v797
        %v883 = vpop.f32.mrf.mxu0
        %v884 = vadd.f32 0.0, %v883
        %v885 = vpop.f32.mrf.mxu0
        %886 = vmatprep.mubr.f32.mxu0 0.0
        %887 = vmatmul.mubr.f32.gmra.mxu0 %v800
        %v888 = vpop.f32.mrf.mxu0
        %v889 = vadd.f32 0.0, %v888
        %v890 = vpop.f32.mrf.mxu0
        %891 = vmatprep.mubr.f32.mxu0 0.0
        %892 = vmatmul.mubr.f32.gmra.mxu0 %v803
        %v893 = vpop.f32.mrf.mxu0
        %v894 = vadd.f32 0.0, %v893
        %v895 = vpop.f32.mrf.mxu0
        %896 = vmatprep.mubr.f32.mxu0 0.0
        %897 = vmatmul.mubr.f32.gmra.mxu0 %v806
        %v898 = vpop.f32.mrf.mxu0
        %v899 = vadd.f32 0.0, %v898
        %v900 = vpop.f32.mrf.mxu0
        %901 = vmatprep.mubr.f32.mxu0 0.0
        %902 = vmatmul.mubr.f32.gmra.mxu0 %v809
        %v903 = vpop.f32.mrf.mxu0
        %v904 = vadd.f32 0.0, %v903
        %v905 = vpop.f32.mrf.mxu0
        %906 = vmatprep.mubr.f32.mxu0 0.0
        %907 = vmatmul.mubr.f32.gmra.mxu0 %v812
        %v908 = vpop.f32.mrf.mxu0
        %v909 = vadd.f32 0.0, %v908
        %v910 = vpop.f32.mrf.mxu0
        %911 = vmatprep.mubr.f32.mxu0 0.0
        %912 = vmatmul.mubr.f32.gmra.mxu0 %v815
        %v913 = vpop.f32.mrf.mxu0
        %v914 = vadd.f32 0.0, %v913
        %v915 = vpop.f32.mrf.mxu0
        %916 = vdwg.mxu0
        %v917 = vpack.c.bf16 %v889, %v884
        %v918 = vpack.c.bf16 %v899, %v894
        %v919 = vpack.c.bf16 %v909, %v904
        %v920 = vpack.c.bf16 %v914, %v914
        %v921 = vld [vmem:[%s8] sm:$0xf]
        %v922 = vld [vmem:[%s8 + $0x4] sm:$0x3]
        %v925 = vunpack.c.l.b16 %v921
        %v926 = vunpack.c.l.b16 %v922
        %v927 = vpack.c.b16 %v926, %v925
        %vm928 = vcmask 97280
        %v930 = vsel %vm928, %v917, 0
        %v933 = vsel %vm928, %v918, 0
        %v936 = vsel %vm928, %v919, 0
        %v939 = vsel %vm928, %v920, 0
        %vm941 = vcmask 1045504
        %v943 = vsel %vm941, %v927, 0
        %945 = vmatprep.subr.bf16.mxu0 0
        %946 = vmatpush1.bf16.msra.mxu0 0
        %947 = vmatprep.subr.bf16.mxu0 0
        %948 = vmatpush1.bf16.msra.mxu0 0
        %949 = vmatprep.subr.bf16.mxu0 0
        %950 = vmatpush1.bf16.msra.mxu0 0
        %951 = vmatprep.subr.bf16.mxu0 0
        %952 = vmatpush1.bf16.msra.mxu0 0
        %953 = vmatprep.subr.bf16.mxu0 0
        %954 = vmatpush1.bf16.msra.mxu0 0
        %955 = vmatprep.subr.bf16.mxu0 0
        %956 = vmatpush1.bf16.msra.mxu0 0
        %957 = vmatprep.subr.bf16.mxu0 0
        %958 = vmatpush1.bf16.msra.mxu0 0
        %959 = vmatprep.subr.bf16.mxu0 0
        %960 = vmatpush1.bf16.msra.mxu0 %v943
        %961 = vmatprep.subr.bf16.mxu0 0
        %962 = vmatpush2.bf16.msra.mxu0 0
        %963 = vmatprep.subr.bf16.mxu0 0
        %964 = vmatpush2.bf16.msra.mxu0 0
        %965 = vmatprep.subr.bf16.mxu0 0
        %966 = vmatpush2.bf16.msra.mxu0 0
        %967 = vmatprep.subr.bf16.mxu0 0
        %968 = vmatpush2.bf16.msra.mxu0 0
        %969 = vmatprep.subr.bf16.mxu0 0
        %970 = vmatpush2.bf16.msra.mxu0 0
        %971 = vmatprep.subr.bf16.mxu0 0
        %972 = vmatpush2.bf16.msra.mxu0 0
        %973 = vmatprep.subr.bf16.mxu0 0
        %974 = vmatpush2.bf16.msra.mxu0 0
        %975 = vmatprep.subr.bf16.mxu0 0
        %976 = vmatpush2.bf16.msra.mxu0 0
        %977 = vmatprep.mubr.bf16.mxu0 0
        %978 = vmatmul.mubr.bf16.gmra.mxu0 %v930
        %v979 = vpop.f32.mrf.mxu0
        %v980 = vadd.f32 0.0, %v979
        %v981 = vpop.f32.mrf.mxu0
        %v982 = vpop.f32.mrf.mxu0
        %v983 = vadd.f32 0.0, %v982
        %v984 = vpop.f32.mrf.mxu0
        %985 = vmatprep.mubr.bf16.mxu0 0
        %986 = vmatmul.mubr.bf16.gmra.mxu0 %v933
        %v987 = vpop.f32.mrf.mxu0
        %v988 = vadd.f32 0.0, %v987
        %v989 = vpop.f32.mrf.mxu0
        %v990 = vpop.f32.mrf.mxu0
        %v991 = vadd.f32 0.0, %v990
        %v992 = vpop.f32.mrf.mxu0
        %993 = vmatprep.mubr.bf16.mxu0 0
        %994 = vmatmul.mubr.bf16.gmra.mxu0 %v936
        %v995 = vpop.f32.mrf.mxu0
        %v996 = vadd.f32 0.0, %v995
        %v997 = vpop.f32.mrf.mxu0
        %v998 = vpop.f32.mrf.mxu0
        %v999 = vadd.f32 0.0, %v998
        %v1000 = vpop.f32.mrf.mxu0
        %1001 = vmatprep.mubr.bf16.mxu0 0
        %1002 = vmatmul.mubr.bf16.gmra.mxu0 %v939
        %v1003 = vpop.f32.mrf.mxu0
        %v1004 = vadd.f32 0.0, %v1003
        %v1005 = vpop.f32.mrf.mxu0
        %v1006 = vpop.f32.mrf.mxu0
        %v1007 = vpop.f32.mrf.mxu0
        %1008 = vdwg.mxu0
        %v1009 = vld [vmem:[%s9] sm:$0xf]
        %v1010 = vld [vmem:[%s9 + $0x4] sm:$0x3]
        %v1013 = vunpack.c.l.b16 %v1009
        %v1014 = vunpack.c.l.b16 %v1010
        %v1015 = vpack.c.b16 %v1014, %v1013
        %v1017 = vsel %vm941, %v1015, 0
        %1019 = vmatprep.subr.bf16.mxu0 0
        %1020 = vmatpush1.bf16.msra.mxu0 0
        %1021 = vmatprep.subr.bf16.mxu0 0
        %1022 = vmatpush1.bf16.msra.mxu0 0
        %1023 = vmatprep.subr.bf16.mxu0 0
        %1024 = vmatpush1.bf16.msra.mxu0 0
        %1025 = vmatprep.subr.bf16.mxu0 0
        %1026 = vmatpush1.bf16.msra.mxu0 0
        %1027 = vmatprep.subr.bf16.mxu0 0
        %1028 = vmatpush1.bf16.msra.mxu0 0
        %1029 = vmatprep.subr.bf16.mxu0 0
        %1030 = vmatpush1.bf16.msra.mxu0 0
        %1031 = vmatprep.subr.bf16.mxu0 0
        %1032 = vmatpush1.bf16.msra.mxu0 0
        %1033 = vmatprep.subr.bf16.mxu0 0
        %1034 = vmatpush1.bf16.msra.mxu0 %v1017
        %1035 = vmatprep.subr.bf16.mxu0 0
        %1036 = vmatpush2.bf16.msra.mxu0 0
        %1037 = vmatprep.subr.bf16.mxu0 0
        %1038 = vmatpush2.bf16.msra.mxu0 0
        %1039 = vmatprep.subr.bf16.mxu0 0
        %1040 = vmatpush2.bf16.msra.mxu0 0
        %1041 = vmatprep.subr.bf16.mxu0 0
        %1042 = vmatpush2.bf16.msra.mxu0 0
        %1043 = vmatprep.subr.bf16.mxu0 0
        %1044 = vmatpush2.bf16.msra.mxu0 0
        %1045 = vmatprep.subr.bf16.mxu0 0
        %1046 = vmatpush2.bf16.msra.mxu0 0
        %1047 = vmatprep.subr.bf16.mxu0 0
        %1048 = vmatpush2.bf16.msra.mxu0 0
        %1049 = vmatprep.subr.bf16.mxu0 0
        %1050 = vmatpush2.bf16.msra.mxu0 0
        %1051 = vmatprep.mubr.bf16.mxu0 0
        %1052 = vmatmul.mubr.bf16.gmra.mxu0 %v930
        %v1053 = vpop.f32.mrf.mxu0
        %v1054 = vadd.f32 0.0, %v1053
        %v1055 = vpop.f32.mrf.mxu0
        %v1056 = vpop.f32.mrf.mxu0
        %v1057 = vadd.f32 0.0, %v1056
        %v1058 = vpop.f32.mrf.mxu0
        %1059 = vmatprep.mubr.bf16.mxu0 0
        %1060 = vmatmul.mubr.bf16.gmra.mxu0 %v933
        %v1061 = vpop.f32.mrf.mxu0
        %v1062 = vadd.f32 0.0, %v1061
        %v1063 = vpop.f32.mrf.mxu0
        %v1064 = vpop.f32.mrf.mxu0
        %v1065 = vadd.f32 0.0, %v1064
        %v1066 = vpop.f32.mrf.mxu0
        %1067 = vmatprep.mubr.bf16.mxu0 0
        %1068 = vmatmul.mubr.bf16.gmra.mxu0 %v936
        %v1069 = vpop.f32.mrf.mxu0
        %v1070 = vadd.f32 0.0, %v1069
        %v1071 = vpop.f32.mrf.mxu0
        %v1072 = vpop.f32.mrf.mxu0
        %v1073 = vadd.f32 0.0, %v1072
        %v1074 = vpop.f32.mrf.mxu0
        %1075 = vmatprep.mubr.bf16.mxu0 0
        %1076 = vmatmul.mubr.bf16.gmra.mxu0 %v939
        %v1077 = vpop.f32.mrf.mxu0
        %v1078 = vadd.f32 0.0, %v1077
        %v1079 = vpop.f32.mrf.mxu0
        %v1080 = vpop.f32.mrf.mxu0
        %v1081 = vpop.f32.mrf.mxu0
        %1082 = vdwg.mxu0
        %v1083 = vmul.f32 %v980, %v1054
        %v1084 = vmul.f32 %v983, %v1057
        %v1085 = vmul.f32 %v988, %v1062
        %v1086 = vmul.f32 %v991, %v1065
        %v1087 = vmul.f32 %v996, %v1070
        %v1088 = vmul.f32 %v999, %v1073
        %v1089 = vmul.f32 %v1004, %v1078
        %v1090 = vpack.c.bf16 %v1084, %v1083
        %v1091 = vpack.c.bf16 %v1086, %v1085
        %v1092 = vpack.c.bf16 %v1088, %v1087
        %v1093 = vpack.c.bf16 %v1089, %v1089
        %v1094 = vld [vmem:[%s10] sm:$0xf]
        %v1095 = vld [vmem:[%s10 + $0x4] sm:$0xf]
        %v1096 = vld [vmem:[%s10 + $0x8] sm:$0xf]
        %v1097 = vld [vmem:[%s10 + $0xc] sm:$0xf]
        %v1098 = vld [vmem:[%s10 + $0x10] sm:$0xf]
        %v1099 = vld [vmem:[%s10 + $0x14] sm:$0xf]
        %v1106 = vunpack.c.l.b16 %v1094
        %v1107 = vunpack.c.l.b16 %v1095
        %v1108 = vunpack.c.l.b16 %v1096
        %v1109 = vunpack.c.l.b16 %v1097
        %v1110 = vunpack.c.l.b16 %v1098
        %v1111 = vunpack.c.l.b16 %v1099
        %v1112 = vpack.c.b16 %v1107, %v1106
        %v1113 = vpack.c.b16 %v1109, %v1108
        %v1114 = vpack.c.b16 %v1111, %v1110
        %vm1118 = vcmask 392192
        %v1120 = vsel %vm1118, %v1090, 0
        %v1123 = vsel %vm1118, %v1091, 0
        %v1126 = vsel %vm1118, %v1092, 0
        %v1129 = vsel %vm1118, %v1093, 0
        %1131 = vmatprep.subr.bf16.mxu0 0
        %1132 = vmatpush1.bf16.msra.mxu0 0
        %1133 = vmatprep.subr.bf16.mxu0 0
        %1134 = vmatpush1.bf16.msra.mxu0 0
        %1135 = vmatprep.subr.bf16.mxu0 0
        %1136 = vmatpush1.bf16.msra.mxu0 0
        %1137 = vmatprep.subr.bf16.mxu0 0
        %1138 = vmatpush1.bf16.msra.mxu0 0
        %1139 = vmatprep.subr.bf16.mxu0 0
        %1140 = vmatpush1.bf16.msra.mxu0 0
        %1141 = vmatprep.subr.bf16.mxu0 0
        %1142 = vmatpush1.bf16.msra.mxu0 %v1114
        %1143 = vmatprep.subr.bf16.mxu0 0
        %1144 = vmatpush1.bf16.msra.mxu0 %v1113
        %1145 = vmatprep.subr.bf16.mxu0 0
        %1146 = vmatpush1.bf16.msra.mxu0 %v1112
        %1147 = vmatprep.subr.bf16.mxu0 0
        %1148 = vmatpush2.bf16.msra.mxu0 0
        %1149 = vmatprep.subr.bf16.mxu0 0
        %1150 = vmatpush2.bf16.msra.mxu0 0
        %1151 = vmatprep.subr.bf16.mxu0 0
        %1152 = vmatpush2.bf16.msra.mxu0 0
        %1153 = vmatprep.subr.bf16.mxu0 0
        %1154 = vmatpush2.bf16.msra.mxu0 0
        %1155 = vmatprep.subr.bf16.mxu0 0
        %1156 = vmatpush2.bf16.msra.mxu0 0
        %1157 = vmatprep.subr.bf16.mxu0 0
        %1158 = vmatpush2.bf16.msra.mxu0 0
        %1159 = vmatprep.subr.bf16.mxu0 0
        %1160 = vmatpush2.bf16.msra.mxu0 0
        %1161 = vmatprep.subr.bf16.mxu0 0
        %1162 = vmatpush2.bf16.msra.mxu0 0
        %1163 = vmatprep.mubr.bf16.mxu0 0
        %1164 = vmatmul.mubr.bf16.gmra.mxu0 %v1120
        %v1165 = vpop.f32.mrf.mxu0
        %v1166 = vadd.f32 0.0, %v1165
        %v1167 = vpop.f32.mrf.mxu0
        %v1168 = vpop.f32.mrf.mxu0
        %v1169 = vadd.f32 0.0, %v1168
        %v1170 = vpop.f32.mrf.mxu0
        %1171 = vmatprep.mubr.bf16.mxu0 0
        %1172 = vmatmul.mubr.bf16.gmra.mxu0 %v1123
        %v1173 = vpop.f32.mrf.mxu0
        %v1174 = vadd.f32 0.0, %v1173
        %v1175 = vpop.f32.mrf.mxu0
        %v1176 = vpop.f32.mrf.mxu0
        %v1177 = vadd.f32 0.0, %v1176
        %v1178 = vpop.f32.mrf.mxu0
        %1179 = vmatprep.mubr.bf16.mxu0 0
        %1180 = vmatmul.mubr.bf16.gmra.mxu0 %v1126
        %v1181 = vpop.f32.mrf.mxu0
        %v1182 = vadd.f32 0.0, %v1181
        %v1183 = vpop.f32.mrf.mxu0
        %v1184 = vpop.f32.mrf.mxu0
        %v1185 = vadd.f32 0.0, %v1184
        %v1186 = vpop.f32.mrf.mxu0
        %1187 = vmatprep.mubr.bf16.mxu0 0
        %1188 = vmatmul.mubr.bf16.gmra.mxu0 %v1129
        %v1189 = vpop.f32.mrf.mxu0
        %v1190 = vadd.f32 0.0, %v1189
        %v1191 = vpop.f32.mrf.mxu0
        %v1192 = vpop.f32.mrf.mxu0
        %v1193 = vpop.f32.mrf.mxu0
        %1194 = vdwg.mxu0
        %v1195 = vmul.f32 %v1166, %v1166
        %v1196 = vmul.f32 %v1169, %v1169
        %v1197 = vmul.f32 %v1174, %v1174
        %v1198 = vmul.f32 %v1177, %v1177
        %v1199 = vmul.f32 %v1182, %v1182
        %v1200 = vmul.f32 %v1185, %v1185
        %v1201 = vmul.f32 %v1190, %v1190
        %vm1202 = vcmask 130048
        %v1203 = vsel %vm1202, %v1195, 0.0
        %1204 = vadd.xlane.f32.xlu0 %v1203
        %v1205 = vpop.xlane.xlu0 %1204
        %v1206 = vsel %vm1202, %v1196, 0.0
        %1207 = vadd.xlane.f32.xlu0 %v1206
        %v1208 = vpop.xlane.xlu0 %1207
        %v1209 = vsel %vm1202, %v1197, 0.0
        %1210 = vadd.xlane.f32.xlu0 %v1209
        %v1211 = vpop.xlane.xlu0 %1210
        %v1212 = vsel %vm1202, %v1198, 0.0
        %1213 = vadd.xlane.f32.xlu0 %v1212
        %v1214 = vpop.xlane.xlu0 %1213
        %v1215 = vsel %vm1202, %v1199, 0.0
        %1216 = vadd.xlane.f32.xlu0 %v1215
        %v1217 = vpop.xlane.xlu0 %1216
        %v1218 = vsel %vm1202, %v1200, 0.0
        %1219 = vadd.xlane.f32.xlu0 %v1218
        %v1220 = vpop.xlane.xlu0 %1219
        %v1221 = vsel %vm1202, %v1201, 0.0
        %1222 = vadd.xlane.f32.xlu0 %v1221
        %v1223 = vpop.xlane.xlu0 %1222
        %v1224 = vmax.f32 %v1205, 1e-24
        %v1225 = vmax.f32 %v1208, 1e-24
        %v1226 = vmax.f32 %v1211, 1e-24
        %v1227 = vmax.f32 %v1214, 1e-24
        %v1228 = vmax.f32 %v1217, 1e-24
        %v1229 = vmax.f32 %v1220, 1e-24
        %v1230 = vmax.f32 %v1223, 1e-24
        %v1231 = vrsqrt.pop %v1224
        %v1232 = vrsqrt.pop %v1225
        %v1233 = vrsqrt.pop %v1226
        %v1234 = vrsqrt.pop %v1227
        %v1235 = vrsqrt.pop %v1228
        %v1236 = vrsqrt.pop %v1229
        %v1237 = vrsqrt.pop %v1230
        %v1238 = vmul.f32 %v1166, %v1231
        %v1239 = vmul.f32 %v1169, %v1232
        %v1240 = vmul.f32 %v1174, %v1233
        %v1241 = vmul.f32 %v1177, %v1234
        %v1242 = vmul.f32 %v1182, %v1235
        %v1243 = vmul.f32 %v1185, %v1236
        %v1244 = vmul.f32 %v1190, %v1237
        %v1245 = vpack.c.bf16 %v1239, %v1238
        %v1246 = vpack.c.bf16 %v1241, %v1240
        %v1247 = vpack.c.bf16 %v1243, %v1242
        %v1248 = vpack.c.bf16 %v1244, %v1244
        %v1249 = vld [vmem:[%s7] sm:$0xf]
        %v1250 = vld [vmem:[%s7 + $0x4] sm:$0xf]
        %v1251 = vld [vmem:[%s7 + $0x8] sm:$0xf]
        %v1252 = vld [vmem:[%s7 + $0xc] sm:$0xf]
        %v1253 = vld [vmem:[%s7 + $0x10] sm:$0xf]
        %v1254 = vld [vmem:[%s7 + $0x14] sm:$0xf]
        %v1255 = vld [vmem:[%s7 + $0x18] sm:$0xf]
        %v1263 = vunpack.c.l.b16 %v1249
        %v1264 = vunpack.c.l.b16 %v1250
        %v1265 = vunpack.c.l.b16 %v1251
        %v1266 = vunpack.c.l.b16 %v1252
        %v1267 = vunpack.c.l.b16 %v1253
        %v1268 = vunpack.c.l.b16 %v1254
        %v1269 = vunpack.c.l.b16 %v1255
        %v1270 = vpack.c.b16 %v1264, %v1263
        %v1271 = vpack.c.b16 %v1266, %v1265
        %v1272 = vpack.c.b16 %v1268, %v1267
        %v1273 = vpack.c.b16 %v1269, %v1269
        %1274 = vrot.lane.b32.xlu0 %v1270, 16
        %v1275 = vpop.permute.xlu0 %1274
        %1276 = vrot.lane.b32.xlu0 %v1271, 16
        %v1277 = vpop.permute.xlu0 %1276
        %1278 = vrot.lane.b32.xlu0 %v1272, 16
        %v1279 = vpop.permute.xlu0 %1278
        %1280 = vrot.lane.b32.xlu0 %v1273, 16
        %v1281 = vpop.permute.xlu0 %1280
        %v1284 = vsel %vm1202, %v1245, %v1275
        %v1287 = vsel %vm1202, %v1246, %v1277
        %v1290 = vsel %vm1202, %v1247, %v1279
        %v1293 = vsel %vm1202, %v1248, %v1281
        %v1294 = vld [vmem:[%s2] sm:$0xf]
        %v1295 = vld [vmem:[%s2 + $0x4] sm:$0xf]
        %v1296 = vld [vmem:[%s2 + $0x8] sm:$0xf]
        %v1297 = vld [vmem:[%s2 + $0xc] sm:$0xf]
        %v1298 = vld [vmem:[%s2 + $0x10] sm:$0xf]
        %v1299 = vld [vmem:[%s2 + $0x14] sm:$0xf]
        %v1300 = vld [vmem:[%s2 + $0x18] sm:$0xf]
        %v1301 = vld [vmem:[%s3] sm:$0xf]
        %v1302 = vld [vmem:[%s3 + $0x4] sm:$0xf]
        %v1303 = vld [vmem:[%s3 + $0x8] sm:$0xf]
        %v1304 = vld [vmem:[%s3 + $0xc] sm:$0xf]
        %v1305 = vld [vmem:[%s3 + $0x10] sm:$0xf]
        %v1306 = vld [vmem:[%s3 + $0x14] sm:$0xf]
        %v1307 = vld [vmem:[%s3 + $0x18] sm:$0xf]
        %v1315 = vunpack.c.l.b16 %v1301
        %v1316 = vunpack.c.l.b16 %v1302
        %v1317 = vunpack.c.l.b16 %v1303
        %v1318 = vunpack.c.l.b16 %v1304
        %v1319 = vunpack.c.l.b16 %v1305
        %v1320 = vunpack.c.l.b16 %v1306
        %v1321 = vunpack.c.l.b16 %v1307
        %v1322 = vpack.c.b16 %v1316, %v1315
        %v1323 = vpack.c.b16 %v1318, %v1317
        %v1324 = vpack.c.b16 %v1320, %v1319
        %v1325 = vpack.c.b16 %v1321, %v1321
        %1327 = vrot.lane.b32.xlu0 %v787, 96
        %v1328 = vpop.permute.xlu0 %1327
        %v1330 = vsel %vm795, %v1322, 0
        %v1333 = vsel %vm795, %v1323, 0
        %v1336 = vsel %vm795, %v1324, 0
        %v1339 = vsel %vm795, %v1325, 0
        %vm1341 = vcmask 1043456
        %v1343 = vsel %vm1341, %v1328, 0
        %1345 = vmatprep.subr.bf16.mxu0 0
        %1346 = vmatpush1.bf16.msra.mxu0 0
        %1347 = vmatprep.subr.bf16.mxu0 0
        %1348 = vmatpush1.bf16.msra.mxu0 0
        %1349 = vmatprep.subr.bf16.mxu0 0
        %1350 = vmatpush1.bf16.msra.mxu0 0
        %1351 = vmatprep.subr.bf16.mxu0 0
        %1352 = vmatpush1.bf16.msra.mxu0 0
        %1353 = vmatprep.subr.bf16.mxu0 0
        %1354 = vmatpush1.bf16.msra.mxu0 0
        %1355 = vmatprep.subr.bf16.mxu0 0
        %1356 = vmatpush1.bf16.msra.mxu0 0
        %1357 = vmatprep.subr.bf16.mxu0 0
        %1358 = vmatpush1.bf16.msra.mxu0 0
        %1359 = vmatprep.subr.bf16.mxu0 0
        %1360 = vmatpush1.bf16.msra.mxu0 %v1343
        %1361 = vmatprep.subr.bf16.mxu0 0
        %1362 = vmatpush2.bf16.msra.mxu0 0
        %1363 = vmatprep.subr.bf16.mxu0 0
        %1364 = vmatpush2.bf16.msra.mxu0 0
        %1365 = vmatprep.subr.bf16.mxu0 0
        %1366 = vmatpush2.bf16.msra.mxu0 0
        %1367 = vmatprep.subr.bf16.mxu0 0
        %1368 = vmatpush2.bf16.msra.mxu0 0
        %1369 = vmatprep.subr.bf16.mxu0 0
        %1370 = vmatpush2.bf16.msra.mxu0 0
        %1371 = vmatprep.subr.bf16.mxu0 0
        %1372 = vmatpush2.bf16.msra.mxu0 0
        %1373 = vmatprep.subr.bf16.mxu0 0
        %1374 = vmatpush2.bf16.msra.mxu0 0
        %1375 = vmatprep.subr.bf16.mxu0 0
        %1376 = vmatpush2.bf16.msra.mxu0 0
        %1377 = vmatprep.mubr.bf16.mxu0 0
        %1378 = vmatmul.mubr.bf16.gmra.mxu0 %v1330
        %v1379 = vpop.f32.mrf.mxu0
        %v1380 = vadd.f32 0.0, %v1379
        %v1381 = vpop.f32.mrf.mxu0
        %v1382 = vpop.f32.mrf.mxu0
        %v1383 = vadd.f32 0.0, %v1382
        %v1384 = vpop.f32.mrf.mxu0
        %1385 = vmatprep.mubr.bf16.mxu0 0
        %1386 = vmatmul.mubr.bf16.gmra.mxu0 %v1333
        %v1387 = vpop.f32.mrf.mxu0
        %v1388 = vadd.f32 0.0, %v1387
        %v1389 = vpop.f32.mrf.mxu0
        %v1390 = vpop.f32.mrf.mxu0
        %v1391 = vadd.f32 0.0, %v1390
        %v1392 = vpop.f32.mrf.mxu0
        %1393 = vmatprep.mubr.bf16.mxu0 0
        %1394 = vmatmul.mubr.bf16.gmra.mxu0 %v1336
        %v1395 = vpop.f32.mrf.mxu0
        %v1396 = vadd.f32 0.0, %v1395
        %v1397 = vpop.f32.mrf.mxu0
        %v1398 = vpop.f32.mrf.mxu0
        %v1399 = vadd.f32 0.0, %v1398
        %v1400 = vpop.f32.mrf.mxu0
        %1401 = vmatprep.mubr.bf16.mxu0 0
        %1402 = vmatmul.mubr.bf16.gmra.mxu0 %v1339
        %v1403 = vpop.f32.mrf.mxu0
        %v1404 = vadd.f32 0.0, %v1403
        %v1405 = vpop.f32.mrf.mxu0
        %v1406 = vpop.f32.mrf.mxu0
        %v1407 = vpop.f32.mrf.mxu0
        %1408 = vdwg.mxu0
        %v1416 = vunpack.c.l.b16 %v1294
        %v1417 = vunpack.c.l.b16 %v1295
        %v1418 = vunpack.c.l.b16 %v1296
        %v1419 = vunpack.c.l.b16 %v1297
        %v1420 = vunpack.c.l.b16 %v1298
        %v1421 = vunpack.c.l.b16 %v1299
        %v1422 = vunpack.c.l.b16 %v1300
        %v1423 = vpack.c.b16 %v1417, %v1416
        %v1424 = vpack.c.b16 %v1419, %v1418
        %v1425 = vpack.c.b16 %v1421, %v1420
        %v1426 = vpack.c.b16 %v1422, %v1422
        %v1428 = vsel %vm795, %v1423, 0
        %v1431 = vsel %vm795, %v1424, 0
        %v1434 = vsel %vm795, %v1425, 0
        %v1437 = vsel %vm795, %v1426, 0
        %v1440 = vsel %vm1341, %v787, 0
        %1442 = vmatprep.subr.bf16.mxu0 0
        %1443 = vmatpush1.bf16.msra.mxu0 0
        %1444 = vmatprep.subr.bf16.mxu0 0
        %1445 = vmatpush1.bf16.msra.mxu0 0
        %1446 = vmatprep.subr.bf16.mxu0 0
        %1447 = vmatpush1.bf16.msra.mxu0 0
        %1448 = vmatprep.subr.bf16.mxu0 0
        %1449 = vmatpush1.bf16.msra.mxu0 0
        %1450 = vmatprep.subr.bf16.mxu0 0
        %1451 = vmatpush1.bf16.msra.mxu0 0
        %1452 = vmatprep.subr.bf16.mxu0 0
        %1453 = vmatpush1.bf16.msra.mxu0 0
        %1454 = vmatprep.subr.bf16.mxu0 0
        %1455 = vmatpush1.bf16.msra.mxu0 0
        %1456 = vmatprep.subr.bf16.mxu0 0
        %1457 = vmatpush1.bf16.msra.mxu0 %v1440
        %1458 = vmatprep.subr.bf16.mxu0 0
        %1459 = vmatpush2.bf16.msra.mxu0 0
        %1460 = vmatprep.subr.bf16.mxu0 0
        %1461 = vmatpush2.bf16.msra.mxu0 0
        %1462 = vmatprep.subr.bf16.mxu0 0
        %1463 = vmatpush2.bf16.msra.mxu0 0
        %1464 = vmatprep.subr.bf16.mxu0 0
        %1465 = vmatpush2.bf16.msra.mxu0 0
        %1466 = vmatprep.subr.bf16.mxu0 0
        %1467 = vmatpush2.bf16.msra.mxu0 0
        %1468 = vmatprep.subr.bf16.mxu0 0
        %1469 = vmatpush2.bf16.msra.mxu0 0
        %1470 = vmatprep.subr.bf16.mxu0 0
        %1471 = vmatpush2.bf16.msra.mxu0 0
        %1472 = vmatprep.subr.bf16.mxu0 0
        %1473 = vmatpush2.bf16.msra.mxu0 0
        %1474 = vmatprep.mubr.bf16.mxu0 0
        %1475 = vmatmul.mubr.bf16.gmra.mxu0 %v1428
        %v1476 = vpop.f32.mrf.mxu0
        %v1477 = vadd.f32 %v1380, %v1476
        %v1478 = vpop.f32.mrf.mxu0
        %v1479 = vpop.f32.mrf.mxu0
        %v1480 = vadd.f32 %v1383, %v1479
        %v1481 = vpop.f32.mrf.mxu0
        %1482 = vmatprep.mubr.bf16.mxu0 0
        %1483 = vmatmul.mubr.bf16.gmra.mxu0 %v1431
        %v1484 = vpop.f32.mrf.mxu0
        %v1485 = vadd.f32 %v1388, %v1484
        %v1486 = vpop.f32.mrf.mxu0
        %v1487 = vpop.f32.mrf.mxu0
        %v1488 = vadd.f32 %v1391, %v1487
        %v1489 = vpop.f32.mrf.mxu0
        %1490 = vmatprep.mubr.bf16.mxu0 0
        %1491 = vmatmul.mubr.bf16.gmra.mxu0 %v1434
        %v1492 = vpop.f32.mrf.mxu0
        %v1493 = vadd.f32 %v1396, %v1492
        %v1494 = vpop.f32.mrf.mxu0
        %v1495 = vpop.f32.mrf.mxu0
        %v1496 = vadd.f32 %v1399, %v1495
        %v1497 = vpop.f32.mrf.mxu0
        %1498 = vmatprep.mubr.bf16.mxu0 0
        %1499 = vmatmul.mubr.bf16.gmra.mxu0 %v1437
        %v1500 = vpop.f32.mrf.mxu0
        %v1501 = vadd.f32 %v1404, %v1500
        %v1502 = vpop.f32.mrf.mxu0
        %v1503 = vpop.f32.mrf.mxu0
        %v1504 = vpop.f32.mrf.mxu0
        %1505 = vdwg.mxu0
        %v1506 = vld [vmem:[%s12] sm:$0xf]
        %v1507 = vld [vmem:[%s12 + $0x4] sm:$0xf]
        %v1508 = vld [vmem:[%s12 + $0x8] sm:$0xf]
        %v1512 = vunpack.c.l.b16 %v1506
        %v1513 = vunpack.c.l.b16 %v1507
        %v1514 = vunpack.c.l.b16 %v1508
        %v1515 = vpack.c.b16 %v1513, %v1512
        %v1516 = vpack.c.b16 %v1514, %v1514
        %vm1518 = vcmask 195584
        %v1519 = vsel %vm1518, %v1284, 0
        %v1521 = vsel %vm1518, %v1287, 0
        %v1523 = vsel %vm1518, %v1290, 0
        %v1525 = vsel %vm1518, %v1293, 0
        %v1528 = vsel %vm1341, %v1516, 0
        %1530 = vmatprep.subr.bf16.mxu0 0
        %1531 = vmatpush1.bf16.msra.mxu0 0
        %1532 = vmatprep.subr.bf16.mxu0 0
        %1533 = vmatpush1.bf16.msra.mxu0 0
        %1534 = vmatprep.subr.bf16.mxu0 0
        %1535 = vmatpush1.bf16.msra.mxu0 0
        %1536 = vmatprep.subr.bf16.mxu0 0
        %1537 = vmatpush1.bf16.msra.mxu0 0
        %1538 = vmatprep.subr.bf16.mxu0 0
        %1539 = vmatpush1.bf16.msra.mxu0 0
        %1540 = vmatprep.subr.bf16.mxu0 0
        %1541 = vmatpush1.bf16.msra.mxu0 0
        %1542 = vmatprep.subr.bf16.mxu0 0
        %1543 = vmatpush1.bf16.msra.mxu0 %v1528
        %1544 = vmatprep.subr.bf16.mxu0 0
        %1545 = vmatpush1.bf16.msra.mxu0 %v1515
        %1546 = vmatprep.subr.bf16.mxu0 0
        %1547 = vmatpush2.bf16.msra.mxu0 0
        %1548 = vmatprep.subr.bf16.mxu0 0
        %1549 = vmatpush2.bf16.msra.mxu0 0
        %1550 = vmatprep.subr.bf16.mxu0 0
        %1551 = vmatpush2.bf16.msra.mxu0 0
        %1552 = vmatprep.subr.bf16.mxu0 0
        %1553 = vmatpush2.bf16.msra.mxu0 0
        %1554 = vmatprep.subr.bf16.mxu0 0
        %1555 = vmatpush2.bf16.msra.mxu0 0
        %1556 = vmatprep.subr.bf16.mxu0 0
        %1557 = vmatpush2.bf16.msra.mxu0 0
        %1558 = vmatprep.subr.bf16.mxu0 0
        %1559 = vmatpush2.bf16.msra.mxu0 0
        %1560 = vmatprep.subr.bf16.mxu0 0
        %1561 = vmatpush2.bf16.msra.mxu0 0
        %1562 = vmatprep.mubr.bf16.mxu0 0
        %1563 = vmatmul.mubr.bf16.gmra.mxu0 %v1519
        %v1564 = vpop.f32.mrf.mxu0
        %v1565 = vadd.f32 0.0, %v1564
        %v1566 = vpop.f32.mrf.mxu0
        %v1567 = vpop.f32.mrf.mxu0
        %v1568 = vadd.f32 0.0, %v1567
        %v1569 = vpop.f32.mrf.mxu0
        %1570 = vmatprep.mubr.bf16.mxu0 0
        %1571 = vmatmul.mubr.bf16.gmra.mxu0 %v1521
        %v1572 = vpop.f32.mrf.mxu0
        %v1573 = vadd.f32 0.0, %v1572
        %v1574 = vpop.f32.mrf.mxu0
        %v1575 = vpop.f32.mrf.mxu0
        %v1576 = vadd.f32 0.0, %v1575
        %v1577 = vpop.f32.mrf.mxu0
        %1578 = vmatprep.mubr.bf16.mxu0 0
        %1579 = vmatmul.mubr.bf16.gmra.mxu0 %v1523
        %v1580 = vpop.f32.mrf.mxu0
        %v1581 = vadd.f32 0.0, %v1580
        %v1582 = vpop.f32.mrf.mxu0
        %v1583 = vpop.f32.mrf.mxu0
        %v1584 = vadd.f32 0.0, %v1583
        %v1585 = vpop.f32.mrf.mxu0
        %1586 = vmatprep.mubr.bf16.mxu0 0
        %1587 = vmatmul.mubr.bf16.gmra.mxu0 %v1525
        %v1588 = vpop.f32.mrf.mxu0
        %v1589 = vadd.f32 0.0, %v1588
        %v1590 = vpop.f32.mrf.mxu0
        %v1591 = vpop.f32.mrf.mxu0
        %v1592 = vpop.f32.mrf.mxu0
        %1593 = vdwg.mxu0
        %v1594 = vadd.f32 %v1477, %v1565
        %v1595 = vadd.f32 %v1480, %v1568
        %v1596 = vadd.f32 %v1485, %v1573
        %v1597 = vadd.f32 %v1488, %v1576
        %v1598 = vadd.f32 %v1493, %v1581
        %v1599 = vadd.f32 %v1496, %v1584
        %v1600 = vadd.f32 %v1501, %v1589
        %v1601 = vld [vmem:[%s13] sm:$0x1]
        %v1603 = vlaneseq
        %v1604 = vshrl.u32 %v1603, 7
        %v1605 = vsub.s32 0, %v1604
        %v1606 = vrot.slane %v1601, %v1605
        %v1608 = vadd.f32 %v1594, %v1606
        %v1609 = vadd.f32 %v1595, %v1606
        %v1610 = vadd.f32 %v1596, %v1606
        %v1611 = vadd.f32 %v1597, %v1606
        %v1612 = vadd.f32 %v1598, %v1606
        %v1613 = vadd.f32 %v1599, %v1606
        %v1614 = vadd.f32 %v1600, %v1606
        %v1615 = vmax.f32 %v1608, 0.0
        %v1616 = vmax.f32 %v1609, 0.0
        %v1617 = vmax.f32 %v1610, 0.0
        %v1618 = vmax.f32 %v1611, 0.0
        %v1619 = vmax.f32 %v1612, 0.0
        %v1620 = vmax.f32 %v1613, 0.0
        %v1621 = vmax.f32 %v1614, 0.0
        %v1622 = vpack.c.bf16 %v1616, %v1615
        %v1623 = vpack.c.bf16 %v1618, %v1617
        %v1624 = vpack.c.bf16 %v1620, %v1619
        %v1625 = vpack.c.bf16 %v1621, %v1621
        %v1626 = vld [vmem:[%s14] sm:$0xf]
        %v1627 = vld [vmem:[%s14 + $0x4] sm:$0xf]
        %v1628 = vld [vmem:[%s14 + $0x8] sm:$0xf]
        %v1629 = vld [vmem:[%s14 + $0xc] sm:$0xf]
        %v1630 = vld [vmem:[%s15] sm:$0x1]
        %v1632 = vlaneseq
        %v1633 = vshrl.u32 %v1632, 7
        %v1634 = vsub.s32 0, %v1633
        %v1635 = vrot.slane %v1630, %v1634
        %v1641 = vunpack.c.l.b16 %v1626
        %v1642 = vunpack.c.l.b16 %v1627
        %v1643 = vunpack.c.l.b16 %v1628
        %v1644 = vunpack.c.l.b16 %v1629
        %v1645 = vpack.c.b16 %v1642, %v1641
        %v1646 = vpack.c.b16 %v1644, %v1643
        %v1650 = vsel %vm743, %v1622, 0
        %v1653 = vsel %vm743, %v1623, 0
        %v1656 = vsel %vm743, %v1624, 0
        %v1659 = vsel %vm743, %v1625, 0
        %1661 = vmatprep.subr.bf16.mxu0 0
        %1662 = vmatpush1.bf16.msra.mxu0 0
        %1663 = vmatprep.subr.bf16.mxu0 0
        %1664 = vmatpush1.bf16.msra.mxu0 0
        %1665 = vmatprep.subr.bf16.mxu0 0
        %1666 = vmatpush1.bf16.msra.mxu0 0
        %1667 = vmatprep.subr.bf16.mxu0 0
        %1668 = vmatpush1.bf16.msra.mxu0 0
        %1669 = vmatprep.subr.bf16.mxu0 0
        %1670 = vmatpush1.bf16.msra.mxu0 0
        %1671 = vmatprep.subr.bf16.mxu0 0
        %1672 = vmatpush1.bf16.msra.mxu0 0
        %1673 = vmatprep.subr.bf16.mxu0 0
        %1674 = vmatpush1.bf16.msra.mxu0 %v1646
        %1675 = vmatprep.subr.bf16.mxu0 0
        %1676 = vmatpush1.bf16.msra.mxu0 %v1645
        %1677 = vmatprep.subr.bf16.mxu0 0
        %1678 = vmatpush2.bf16.msra.mxu0 0
        %1679 = vmatprep.subr.bf16.mxu0 0
        %1680 = vmatpush2.bf16.msra.mxu0 0
        %1681 = vmatprep.subr.bf16.mxu0 0
        %1682 = vmatpush2.bf16.msra.mxu0 0
        %1683 = vmatprep.subr.bf16.mxu0 0
        %1684 = vmatpush2.bf16.msra.mxu0 0
        %1685 = vmatprep.subr.bf16.mxu0 0
        %1686 = vmatpush2.bf16.msra.mxu0 0
        %1687 = vmatprep.subr.bf16.mxu0 0
        %1688 = vmatpush2.bf16.msra.mxu0 0
        %1689 = vmatprep.subr.bf16.mxu0 0
        %1690 = vmatpush2.bf16.msra.mxu0 0
        %1691 = vmatprep.subr.bf16.mxu0 0
        %1692 = vmatpush2.bf16.msra.mxu0 0
        %1693 = vmatprep.mubr.bf16.mxu0 0
        %1694 = vmatmul.mubr.bf16.gmra.mxu0 %v1650
        %v1695 = vpop.f32.mrf.mxu0
        %v1696 = vadd.f32 %v1635, %v1695
        %v1697 = vpop.f32.mrf.mxu0
        %v1698 = vpop.f32.mrf.mxu0
        %v1699 = vadd.f32 %v1635, %v1698
        %v1700 = vpop.f32.mrf.mxu0
        %1701 = vmatprep.mubr.bf16.mxu0 0
        %1702 = vmatmul.mubr.bf16.gmra.mxu0 %v1653
        %v1703 = vpop.f32.mrf.mxu0
        %v1704 = vadd.f32 %v1635, %v1703
        %v1705 = vpop.f32.mrf.mxu0
        %v1706 = vpop.f32.mrf.mxu0
        %v1707 = vadd.f32 %v1635, %v1706
        %v1708 = vpop.f32.mrf.mxu0
        %1709 = vmatprep.mubr.bf16.mxu0 0
        %1710 = vmatmul.mubr.bf16.gmra.mxu0 %v1656
        %v1711 = vpop.f32.mrf.mxu0
        %v1712 = vadd.f32 %v1635, %v1711
        %v1713 = vpop.f32.mrf.mxu0
        %v1714 = vpop.f32.mrf.mxu0
        %v1715 = vadd.f32 %v1635, %v1714
        %v1716 = vpop.f32.mrf.mxu0
        %1717 = vmatprep.mubr.bf16.mxu0 0
        %1718 = vmatmul.mubr.bf16.gmra.mxu0 %v1659
        %v1719 = vpop.f32.mrf.mxu0
        %v1720 = vadd.f32 %v1635, %v1719
        %v1721 = vpop.f32.mrf.mxu0
        %v1722 = vpop.f32.mrf.mxu0
        %v1723 = vpop.f32.mrf.mxu0
        %1724 = vdwg.mxu0
        %v1725 = vmax.f32 %v1696, 0.0
        %v1726 = vmax.f32 %v1699, 0.0
        %v1727 = vmax.f32 %v1704, 0.0
        %v1728 = vmax.f32 %v1707, 0.0
        %v1729 = vmax.f32 %v1712, 0.0
        %v1730 = vmax.f32 %v1715, 0.0
        %v1731 = vmax.f32 %v1720, 0.0
        %v1732 = vpack.c.bf16 %v1726, %v1725
        %v1733 = vpack.c.bf16 %v1728, %v1727
        %v1734 = vpack.c.bf16 %v1730, %v1729
        %v1735 = vpack.c.bf16 %v1731, %v1731
        %v1736 = vld [vmem:[%s16] sm:$0xf]
        %v1737 = vld [vmem:[%s16 + $0x4] sm:$0xf]
        %v1738 = vld [vmem:[%s16 + $0x8] sm:$0xf]
        %v1739 = vld [vmem:[%s16 + $0xc] sm:$0xf]
        %v1740 = vld [vmem:[%s17] sm:$0x1]
        %v1742 = vlaneseq
        %v1743 = vshrl.u32 %v1742, 7
        %v1744 = vsub.s32 0, %v1743
        %v1745 = vrot.slane %v1740, %v1744
        %v1751 = vunpack.c.l.b16 %v1736
        %v1752 = vunpack.c.l.b16 %v1737
        %v1753 = vunpack.c.l.b16 %v1738
        %v1754 = vunpack.c.l.b16 %v1739
        %v1755 = vpack.c.b16 %v1752, %v1751
        %v1756 = vpack.c.b16 %v1754, %v1753
        %v1760 = vsel %vm743, %v1732, 0
        %v1763 = vsel %vm743, %v1733, 0
        %v1766 = vsel %vm743, %v1734, 0
        %v1769 = vsel %vm743, %v1735, 0
        %1771 = vmatprep.subr.bf16.mxu0 0
        %1772 = vmatpush1.bf16.msra.mxu0 0
        %1773 = vmatprep.subr.bf16.mxu0 0
        %1774 = vmatpush1.bf16.msra.mxu0 0
        %1775 = vmatprep.subr.bf16.mxu0 0
        %1776 = vmatpush1.bf16.msra.mxu0 0
        %1777 = vmatprep.subr.bf16.mxu0 0
        %1778 = vmatpush1.bf16.msra.mxu0 0
        %1779 = vmatprep.subr.bf16.mxu0 0
        %1780 = vmatpush1.bf16.msra.mxu0 0
        %1781 = vmatprep.subr.bf16.mxu0 0
        %1782 = vmatpush1.bf16.msra.mxu0 0
        %1783 = vmatprep.subr.bf16.mxu0 0
        %1784 = vmatpush1.bf16.msra.mxu0 %v1756
        %1785 = vmatprep.subr.bf16.mxu0 0
        %1786 = vmatpush1.bf16.msra.mxu0 %v1755
        %1787 = vmatprep.subr.bf16.mxu0 0
        %1788 = vmatpush2.bf16.msra.mxu0 0
        %1789 = vmatprep.subr.bf16.mxu0 0
        %1790 = vmatpush2.bf16.msra.mxu0 0
        %1791 = vmatprep.subr.bf16.mxu0 0
        %1792 = vmatpush2.bf16.msra.mxu0 0
        %1793 = vmatprep.subr.bf16.mxu0 0
        %1794 = vmatpush2.bf16.msra.mxu0 0
        %1795 = vmatprep.subr.bf16.mxu0 0
        %1796 = vmatpush2.bf16.msra.mxu0 0
        %1797 = vmatprep.subr.bf16.mxu0 0
        %1798 = vmatpush2.bf16.msra.mxu0 0
        %1799 = vmatprep.subr.bf16.mxu0 0
        %1800 = vmatpush2.bf16.msra.mxu0 0
        %1801 = vmatprep.subr.bf16.mxu0 0
        %1802 = vmatpush2.bf16.msra.mxu0 0
        %1803 = vmatprep.mubr.bf16.mxu0 0
        %1804 = vmatmul.mubr.bf16.gmra.mxu0 %v1760
        %v1805 = vpop.f32.mrf.mxu0
        %v1806 = vadd.f32 %v1745, %v1805
        %v1807 = vpop.f32.mrf.mxu0
        %v1808 = vpop.f32.mrf.mxu0
        %v1809 = vadd.f32 %v1745, %v1808
        %v1810 = vpop.f32.mrf.mxu0
        %1811 = vmatprep.mubr.bf16.mxu0 0
        %1812 = vmatmul.mubr.bf16.gmra.mxu0 %v1763
        %v1813 = vpop.f32.mrf.mxu0
        %v1814 = vadd.f32 %v1745, %v1813
        %v1815 = vpop.f32.mrf.mxu0
        %v1816 = vpop.f32.mrf.mxu0
        %v1817 = vadd.f32 %v1745, %v1816
        %v1818 = vpop.f32.mrf.mxu0
        %1819 = vmatprep.mubr.bf16.mxu0 0
        %1820 = vmatmul.mubr.bf16.gmra.mxu0 %v1766
        %v1821 = vpop.f32.mrf.mxu0
        %v1822 = vadd.f32 %v1745, %v1821
        %v1823 = vpop.f32.mrf.mxu0
        %v1824 = vpop.f32.mrf.mxu0
        %v1825 = vadd.f32 %v1745, %v1824
        %v1826 = vpop.f32.mrf.mxu0
        %1827 = vmatprep.mubr.bf16.mxu0 0
        %1828 = vmatmul.mubr.bf16.gmra.mxu0 %v1769
        %v1829 = vpop.f32.mrf.mxu0
        %v1830 = vadd.f32 %v1745, %v1829
        %v1831 = vpop.f32.mrf.mxu0
        %v1832 = vpop.f32.mrf.mxu0
        %v1833 = vpop.f32.mrf.mxu0
        %1834 = vdwg.mxu0
        %v1835 = vmax.f32 %v1806, 0.0
        %v1836 = vmax.f32 %v1809, 0.0
        %v1837 = vmax.f32 %v1814, 0.0
        %v1838 = vmax.f32 %v1817, 0.0
        %v1839 = vmax.f32 %v1822, 0.0
        %v1840 = vmax.f32 %v1825, 0.0
        %v1841 = vmax.f32 %v1830, 0.0
        %v1842 = vpack.c.bf16 %v1836, %v1835
        %v1843 = vpack.c.bf16 %v1838, %v1837
        %v1844 = vpack.c.bf16 %v1840, %v1839
        %v1845 = vpack.c.bf16 %v1841, %v1841
        %v1846 = vld [vmem:[%s18] sm:$0xf]
        %v1847 = vld [vmem:[%s18 + $0x4] sm:$0xf]
        %v1848 = vld [vmem:[%s18 + $0x8] sm:$0xf]
        %v1849 = vld [vmem:[%s18 + $0xc] sm:$0xf]
        %v1854 = vunpack.c.l.b16 %v1846
        %v1855 = vunpack.c.l.b16 %v1847
        %v1856 = vunpack.c.l.b16 %v1848
        %v1857 = vunpack.c.l.b16 %v1849
        %v1858 = vpack.c.b16 %v1855, %v1854
        %v1859 = vpack.c.b16 %v1857, %v1856
        %v1863 = vsel %vm743, %v1842, 0
        %v1866 = vsel %vm743, %v1843, 0
        %v1869 = vsel %vm743, %v1844, 0
        %v1872 = vsel %vm743, %v1845, 0
        %1874 = vmatprep.subr.bf16.mxu0 0
        %1875 = vmatpush1.bf16.msra.mxu0 0
        %1876 = vmatprep.subr.bf16.mxu0 0
        %1877 = vmatpush1.bf16.msra.mxu0 0
        %1878 = vmatprep.subr.bf16.mxu0 0
        %1879 = vmatpush1.bf16.msra.mxu0 0
        %1880 = vmatprep.subr.bf16.mxu0 0
        %1881 = vmatpush1.bf16.msra.mxu0 0
        %1882 = vmatprep.subr.bf16.mxu0 0
        %1883 = vmatpush1.bf16.msra.mxu0 0
        %1884 = vmatprep.subr.bf16.mxu0 0
        %1885 = vmatpush1.bf16.msra.mxu0 0
        %1886 = vmatprep.subr.bf16.mxu0 0
        %1887 = vmatpush1.bf16.msra.mxu0 %v1859
        %1888 = vmatprep.subr.bf16.mxu0 0
        %1889 = vmatpush1.bf16.msra.mxu0 %v1858
        %1890 = vmatprep.subr.bf16.mxu0 0
        %1891 = vmatpush2.bf16.msra.mxu0 0
        %1892 = vmatprep.subr.bf16.mxu0 0
        %1893 = vmatpush2.bf16.msra.mxu0 0
        %1894 = vmatprep.subr.bf16.mxu0 0
        %1895 = vmatpush2.bf16.msra.mxu0 0
        %1896 = vmatprep.subr.bf16.mxu0 0
        %1897 = vmatpush2.bf16.msra.mxu0 0
        %1898 = vmatprep.subr.bf16.mxu0 0
        %1899 = vmatpush2.bf16.msra.mxu0 0
        %1900 = vmatprep.subr.bf16.mxu0 0
        %1901 = vmatpush2.bf16.msra.mxu0 0
        %1902 = vmatprep.subr.bf16.mxu0 0
        %1903 = vmatpush2.bf16.msra.mxu0 0
        %1904 = vmatprep.subr.bf16.mxu0 0
        %1905 = vmatpush2.bf16.msra.mxu0 0
        %1906 = vmatprep.mubr.bf16.mxu0 0
        %1907 = vmatmul.mubr.bf16.gmra.mxu0 %v1863
        %v1908 = vpop.f32.mrf.mxu0
        %v1909 = vadd.f32 0.0, %v1908
        %v1910 = vpop.f32.mrf.mxu0
        %v1911 = vpop.f32.mrf.mxu0
        %v1912 = vadd.f32 0.0, %v1911
        %v1913 = vpop.f32.mrf.mxu0
        %1914 = vmatprep.mubr.bf16.mxu0 0
        %1915 = vmatmul.mubr.bf16.gmra.mxu0 %v1866
        %v1916 = vpop.f32.mrf.mxu0
        %v1917 = vadd.f32 0.0, %v1916
        %v1918 = vpop.f32.mrf.mxu0
        %v1919 = vpop.f32.mrf.mxu0
        %v1920 = vadd.f32 0.0, %v1919
        %v1921 = vpop.f32.mrf.mxu0
        %1922 = vmatprep.mubr.bf16.mxu0 0
        %1923 = vmatmul.mubr.bf16.gmra.mxu0 %v1869
        %v1924 = vpop.f32.mrf.mxu0
        %v1925 = vadd.f32 0.0, %v1924
        %v1926 = vpop.f32.mrf.mxu0
        %v1927 = vpop.f32.mrf.mxu0
        %v1928 = vadd.f32 0.0, %v1927
        %v1929 = vpop.f32.mrf.mxu0
        %1930 = vmatprep.mubr.bf16.mxu0 0
        %1931 = vmatmul.mubr.bf16.gmra.mxu0 %v1872
        %v1932 = vpop.f32.mrf.mxu0
        %v1933 = vadd.f32 0.0, %v1932
        %v1934 = vpop.f32.mrf.mxu0
        %v1935 = vpop.f32.mrf.mxu0
        %v1936 = vpop.f32.mrf.mxu0
        %1937 = vdwg.mxu0
        %v1938 = vmul.f32 %v884, %v1909
        %v1939 = vmul.f32 %v889, %v1912
        %v1940 = vmul.f32 %v894, %v1917
        %v1941 = vmul.f32 %v899, %v1920
        %v1942 = vmul.f32 %v904, %v1925
        %v1943 = vmul.f32 %v909, %v1928
        %v1944 = vmul.f32 %v914, %v1933
        %v1945 = vmax.f32 %v1938, -100.0
        %v1946 = vmax.f32 %v1939, -100.0
        %v1947 = vmax.f32 %v1940, -100.0
        %v1948 = vmax.f32 %v1941, -100.0
        %v1949 = vmax.f32 %v1942, -100.0
        %v1950 = vmax.f32 %v1943, -100.0
        %v1951 = vmax.f32 %v1944, -100.0
        %v1952 = vmin.f32 %v1945, 100.0
        %v1953 = vmin.f32 %v1946, 100.0
        %v1954 = vmin.f32 %v1947, 100.0
        %v1955 = vmin.f32 %v1948, 100.0
        %v1956 = vmin.f32 %v1949, 100.0
        %v1957 = vmin.f32 %v1950, 100.0
        %v1958 = vmin.f32 %v1951, 100.0
        %v1959 = vpack.c.bf16 %v1953, %v1952
        %v1960 = vpack.c.bf16 %v1955, %v1954
        %v1961 = vpack.c.bf16 %v1957, %v1956
        %v1962 = vpack.c.bf16 %v1958, %v1958
        %1967 = vrot.lane.b32.xlu0 %v1732, 12
        %v1968 = vpop.permute.xlu0 %1967
        %1969 = vrot.lane.b32.xlu0 %v1733, 12
        %v1970 = vpop.permute.xlu0 %1969
        %1971 = vrot.lane.b32.xlu0 %v1734, 12
        %v1972 = vpop.permute.xlu0 %1971
        %1973 = vrot.lane.b32.xlu0 %v1735, 12
        %v1974 = vpop.permute.xlu0 %1973
        %v1977 = vsel %vm928, %v1959, %v1968
        %v1981 = vsel %vm928, %v1960, %v1970
        %v1985 = vsel %vm928, %v1961, %v1972
        %v1989 = vsel %vm928, %v1962, %v1974
        %v1990 = vld [vmem:[%s5] sm:$0xf]
        %vm1991 = vcmask 457728
        %v1993 = vsel %vm1991, %v1990, 0
        %v1995 = vsel %vm1341, %v1989, 0
        %1997 = vmatprep.subr.bf16.mxu0 0
        %1998 = vmatpush1.bf16.msra.mxu0 0
        %1999 = vmatprep.subr.bf16.mxu0 0
        %2000 = vmatpush1.bf16.msra.mxu0 0
        %2001 = vmatprep.subr.bf16.mxu0 0
        %2002 = vmatpush1.bf16.msra.mxu0 0
        %2003 = vmatprep.subr.bf16.mxu0 0
        %2004 = vmatpush1.bf16.msra.mxu0 0
        %2005 = vmatprep.subr.bf16.mxu0 0
        %2006 = vmatpush1.bf16.msra.mxu0 %v1995
        %2007 = vmatprep.subr.bf16.mxu0 0
        %2008 = vmatpush1.bf16.msra.mxu0 %v1985
        %2009 = vmatprep.subr.bf16.mxu0 0
        %2010 = vmatpush1.bf16.msra.mxu0 %v1981
        %2011 = vmatprep.subr.bf16.mxu0 0
        %2012 = vmatpush1.bf16.msra.mxu0 %v1977
        %2013 = vmatprep.subr.bf16.mxu0 0
        %2014 = vmatpush2.bf16.msra.mxu0 0
        %2015 = vmatprep.subr.bf16.mxu0 0
        %2016 = vmatpush2.bf16.msra.mxu0 0
        %2017 = vmatprep.subr.bf16.mxu0 0
        %2018 = vmatpush2.bf16.msra.mxu0 0
        %2019 = vmatprep.subr.bf16.mxu0 0
        %2020 = vmatpush2.bf16.msra.mxu0 0
        %2021 = vmatprep.subr.bf16.mxu0 0
        %2022 = vmatpush2.bf16.msra.mxu0 0
        %2023 = vmatprep.subr.bf16.mxu0 0
        %2024 = vmatpush2.bf16.msra.mxu0 0
        %2025 = vmatprep.subr.bf16.mxu0 0
        %2026 = vmatpush2.bf16.msra.mxu0 0
        %2027 = vmatprep.subr.bf16.mxu0 0
        %2028 = vmatpush2.bf16.msra.mxu0 0
        %2029 = vmatprep.mubr.bf16.mxu0 0
        %2030 = vmatmul.mubr.bf16.gmra.mxu0 %v1993
        %v2031 = vpop.f32.mrf.mxu0
        %v2032 = vadd.f32 0.0, %v2031
        %v2033 = vpop.f32.mrf.mxu0
        %v2034 = vpop.f32.mrf.mxu0
        %v2035 = vpop.f32.mrf.mxu0
        %2036 = vdwg.mxu0
        %v2037 = vld [vmem:[%s6] sm:$0xff]
        %2039 = vset.pattern.permute.xlu0 0
        %2040 = vperm.xlu0 %2039, %v2037
        %v2041 = vpop.permute.xlu0 %2040
        %v2043 = vmul.f32 %v2032, %v2041
        %v2044 = vadd.f32 %v725, %v2043
        %2046 = vrot.lane.b32.xlu0 %v2032, 20
        %v2047 = vpop.permute.xlu0 %2046
        %v2049 = vsel %vm743, %v724, %v2047
        %v2050 = vpack.c.bf16 %v2049, %v2049
        %v2051 = vld [vmem:[%s19] sm:$0xf]
        %v2052 = vld [vmem:[%s19 + $0x4] sm:$0xf]
        %v2053 = vld [vmem:[%s19 + $0x8] sm:$0xf]
        %v2054 = vld [vmem:[%s19 + $0xc] sm:$0xf]
        %v2055 = vld [vmem:[%s19 + $0x10] sm:$0xf]
        %v2056 = vld [vmem:[%s19 + $0x14] sm:$0xf]
        %v2057 = vld [vmem:[%s19 + $0x18] sm:$0xf]
        %v2058 = vld [vmem:[%s19 + $0x1c] sm:$0xf]
        %v2059 = vld [vmem:[%s20] sm:$0x1]
        %v2061 = vlaneseq
        %v2062 = vshrl.u32 %v2061, 7
        %v2063 = vsub.s32 0, %v2062
        %v2064 = vrot.slane %v2059, %v2063
        %v2074 = vunpack.c.l.b16 %v2051
        %v2075 = vunpack.c.l.b16 %v2052
        %v2076 = vunpack.c.l.b16 %v2053
        %v2077 = vunpack.c.l.b16 %v2054
        %v2078 = vunpack.c.l.b16 %v2055
        %v2079 = vunpack.c.l.b16 %v2056
        %v2080 = vunpack.c.l.b16 %v2057
        %v2081 = vunpack.c.l.b16 %v2058
        %v2082 = vpack.c.b16 %v2075, %v2074
        %v2083 = vpack.c.b16 %v2077, %v2076
        %v2084 = vpack.c.b16 %v2079, %v2078
        %v2085 = vpack.c.b16 %v2081, %v2080
        %vm2090 = vcmask 523264
        %v2092 = vsel %vm2090, %v2050, 0
        %2094 = vmatprep.subr.bf16.mxu0 0
        %2095 = vmatpush1.bf16.msra.mxu0 0
        %2096 = vmatprep.subr.bf16.mxu0 0
        %2097 = vmatpush1.bf16.msra.mxu0 0
        %2098 = vmatprep.subr.bf16.mxu0 0
        %2099 = vmatpush1.bf16.msra.mxu0 0
        %2100 = vmatprep.subr.bf16.mxu0 0
        %2101 = vmatpush1.bf16.msra.mxu0 0
        %2102 = vmatprep.subr.bf16.mxu0 0
        %2103 = vmatpush1.bf16.msra.mxu0 %v2085
        %2104 = vmatprep.subr.bf16.mxu0 0
        %2105 = vmatpush1.bf16.msra.mxu0 %v2084
        %2106 = vmatprep.subr.bf16.mxu0 0
        %2107 = vmatpush1.bf16.msra.mxu0 %v2083
        %2108 = vmatprep.subr.bf16.mxu0 0
        %2109 = vmatpush1.bf16.msra.mxu0 %v2082
        %2110 = vmatprep.subr.bf16.mxu0 0
        %2111 = vmatpush2.bf16.msra.mxu0 0
        %2112 = vmatprep.subr.bf16.mxu0 0
        %2113 = vmatpush2.bf16.msra.mxu0 0
        %2114 = vmatprep.subr.bf16.mxu0 0
        %2115 = vmatpush2.bf16.msra.mxu0 0
        %2116 = vmatprep.subr.bf16.mxu0 0
        %2117 = vmatpush2.bf16.msra.mxu0 0
        %2118 = vmatprep.subr.bf16.mxu0 0
        %2119 = vmatpush2.bf16.msra.mxu0 0
        %2120 = vmatprep.subr.bf16.mxu0 0
        %2121 = vmatpush2.bf16.msra.mxu0 0
        %2122 = vmatprep.subr.bf16.mxu0 0
        %2123 = vmatpush2.bf16.msra.mxu0 0
        %2124 = vmatprep.subr.bf16.mxu0 0
        %2125 = vmatpush2.bf16.msra.mxu0 0
        %2126 = vmatprep.mubr.bf16.mxu0 0
        %2127 = vmatmul.mubr.bf16.gmra.mxu0 %v2092
        %v2128 = vpop.f32.mrf.mxu0
        %v2129 = vadd.f32 %v2064, %v2128
        %v2130 = vpop.f32.mrf.mxu0
        %v2131 = vpop.f32.mrf.mxu0
        %v2132 = vpop.f32.mrf.mxu0
        %2133 = vdwg.mxu0
        %v2134 = vmax.f32 %v2129, 0.0
        %v2135 = vpack.c.bf16 %v2134, %v2134
        %v2136 = vld [vmem:[%s21] sm:$0xf]
        %v2137 = vld [vmem:[%s21 + $0x4] sm:$0xf]
        %v2138 = vld [vmem:[%s21 + $0x8] sm:$0xf]
        %v2139 = vld [vmem:[%s21 + $0xc] sm:$0xf]
        %v2140 = vld [vmem:[%s22] sm:$0x1]
        %v2142 = vlaneseq
        %v2143 = vshrl.u32 %v2142, 7
        %v2144 = vsub.s32 0, %v2143
        %v2145 = vrot.slane %v2140, %v2144
        %v2151 = vunpack.c.l.b16 %v2136
        %v2152 = vunpack.c.l.b16 %v2137
        %v2153 = vunpack.c.l.b16 %v2138
        %v2154 = vunpack.c.l.b16 %v2139
        %v2155 = vpack.c.b16 %v2152, %v2151
        %v2156 = vpack.c.b16 %v2154, %v2153
        %v2160 = vsel %vm743, %v2135, 0
        %2162 = vmatprep.subr.bf16.mxu0 0
        %2163 = vmatpush1.bf16.msra.mxu0 0
        %2164 = vmatprep.subr.bf16.mxu0 0
        %2165 = vmatpush1.bf16.msra.mxu0 0
        %2166 = vmatprep.subr.bf16.mxu0 0
        %2167 = vmatpush1.bf16.msra.mxu0 0
        %2168 = vmatprep.subr.bf16.mxu0 0
        %2169 = vmatpush1.bf16.msra.mxu0 0
        %2170 = vmatprep.subr.bf16.mxu0 0
        %2171 = vmatpush1.bf16.msra.mxu0 0
        %2172 = vmatprep.subr.bf16.mxu0 0
        %2173 = vmatpush1.bf16.msra.mxu0 0
        %2174 = vmatprep.subr.bf16.mxu0 0
        %2175 = vmatpush1.bf16.msra.mxu0 %v2156
        %2176 = vmatprep.subr.bf16.mxu0 0
        %2177 = vmatpush1.bf16.msra.mxu0 %v2155
        %2178 = vmatprep.subr.bf16.mxu0 0
        %2179 = vmatpush2.bf16.msra.mxu0 0
        %2180 = vmatprep.subr.bf16.mxu0 0
        %2181 = vmatpush2.bf16.msra.mxu0 0
        %2182 = vmatprep.subr.bf16.mxu0 0
        %2183 = vmatpush2.bf16.msra.mxu0 0
        %2184 = vmatprep.subr.bf16.mxu0 0
        %2185 = vmatpush2.bf16.msra.mxu0 0
        %2186 = vmatprep.subr.bf16.mxu0 0
        %2187 = vmatpush2.bf16.msra.mxu0 0
        %2188 = vmatprep.subr.bf16.mxu0 0
        %2189 = vmatpush2.bf16.msra.mxu0 0
        %2190 = vmatprep.subr.bf16.mxu0 0
        %2191 = vmatpush2.bf16.msra.mxu0 0
        %2192 = vmatprep.subr.bf16.mxu0 0
        %2193 = vmatpush2.bf16.msra.mxu0 0
        %2194 = vmatprep.mubr.bf16.mxu0 0
        %2195 = vmatmul.mubr.bf16.gmra.mxu0 %v2160
        %v2196 = vpop.f32.mrf.mxu0
        %v2197 = vadd.f32 %v2145, %v2196
        %v2198 = vpop.f32.mrf.mxu0
        %v2199 = vpop.f32.mrf.mxu0
        %v2200 = vpop.f32.mrf.mxu0
        %2201 = vdwg.mxu0
        %v2202 = vadd.f32 %v724, %v2197
        %2204 = vrot.lane.b32.xlu0 %v2044, 32
        %v2205 = vpop.permute.xlu0 %2204
        %v2207 = vsel %vm743, %v2202, %v2205
        %vm2208 = vcmask 359424
        %v2209 = vsel %vm2208, %v2207, 0.0
        %2210 = vst [vmem:[%s714] sm:$0xff] %v2209
        %s2211 = sand.u32 %s538, 1
        %s2212 = scalar_lea.sflag [#allocation3], %s2211
        %s2213 = sand.u32 %s538, 1
        %s2214 = smul.addr %s2213, 8
        %s2215 = scalar_lea.vmem [#allocation2], %s2214
        // Predicated region
        $region113: #{tpu_custom_call.1} parent=111 // pred_check
          %p2216 = pneg %p548
        $region114: #{tpu_custom_call.1} parent=111 // pred_check_branch
          %2218 = sbr.rel (%p2216) target = $region116
        $region115: #{tpu_custom_call.1} parent=111 // pred_region
          %s2220 = ssub.s32 128, 128
          %2221 = vsyncadd %s2212, %s2220
          %s2222 = smul.addr %s37, 128
          %s2223 = scalar_lea.hbm %s23, %s2222
          %s2225 = sshll.u32 %s2215, 4
          %s2226 = int_to_ptr.vmem [resolvable:$true] %s2225
          %2228 = dma.vmem_to_hbm [thread:$0]  %s2226, 128, %s2223, %s2212
        $region116: #{tpu_custom_call.1} parent=111 // pred_fallthru
          _
      $region112: #{tpu_custom_call.1} parent=5 // pred_fallthru
        _
      %p2229 = scmp.le.s32.totalorder 2, %s32
      // Predicated region
      $region117: #{tpu_custom_call.1} parent=5 // pred_check
        %p2230 = pneg %p2229
      $region118: #{tpu_custom_call.1} parent=5 // pred_check_branch
        %2232 = sbr.rel (%p2230) target = $region120
      $region119: #{tpu_custom_call.1} parent=5 // pred_region
        %s2233 = ssub.s32 %s32, 2
        // Predicated region
        $region121: #{tpu_custom_call.1} parent=119 // pred_check
          %p2234 = pneg %p554
        $region122: #{tpu_custom_call.1} parent=119 // pred_check_branch
          %2236 = sbr.rel (%p2234) target = $region124
        $region123: #{tpu_custom_call.1} parent=119 // pred_region
          %s2237 = sand.u32 %s539, 1
          %s2238 = scalar_lea.sflag [#allocation3], %s2237
          %s2239 = sand.u32 %s539, 1
          %s2240 = smul.addr %s2239, 8
          %s2241 = scalar_lea.vmem [#allocation2], %s2240
          %2242 = dma.done %s2238, 128
        $region124: #{tpu_custom_call.1} parent=119 // pred_fallthru
          _
      $region120: #{tpu_custom_call.1} parent=5 // pred_fallthru
        _
    $region6: #{tpu_custom_call.1} parent=1 // loop_footer
      %s36 = sadd.s32 1, %s32
    $region7: #{tpu_custom_call.1} parent=1 // loop_footer_branch
      %31 = sbr.rel target = $region3
    $region8: #{tpu_custom_call.1} parent=1 // loop_exit
      _
    %2243 = vsyncpa [#allocation3], 1
    %s2244 = scalar_lea.sflag [#allocation3], 1
    %2245 = vsyncpa %s2244, 1

</llo_original>
